<compile_context>
chip_gen: v6e
topology: v6e:2x2x1
jax: 0.10.0
libtpu: 0.0.40
codegen_flags: <defaults>
</compile_context>

<pallas_src>
import functools
import math
from typing import NamedTuple

import numpy as np

import jax
import jax.numpy as jnp
from jax.experimental import pallas as pl
from jax.experimental.pallas import tpu as pltpu


# ----------------------------- trace-time helpers ----------------------------


def _interp_matrix_np(out_size, in_size):
    """Dense 1-D align_corners=True bilinear interp matrix (out_size, in_size),
    matching torch.nn.functional.interpolate (incl. out_size==1 / in_size==1)."""
    if in_size == 1:
        return np.ones((out_size, 1), np.float32)
    if out_size == 1:
        m = np.zeros((1, in_size), np.float32)
        m[0, 0] = 1.0
        return m
    src = np.arange(out_size, dtype=np.float64) * ((in_size - 1) / (out_size - 1))
    lo = np.clip(np.floor(src).astype(np.int64), 0, in_size - 2)
    frac = (src - lo).astype(np.float32)
    m = np.zeros((out_size, in_size), np.float32)
    rows = np.arange(out_size)
    m[rows, lo] += 1.0 - frac
    m[rows, lo + 1] += frac
    return m


def _axis_resize_matrix(dense_size, stride, target):
    """(target, dense_size) matrix folding (a) stride sub-sampling of the dense
    stride-1 conv output and (b) align_corners bilinear resize to `target`.
    Rows sum to 1, so a conv bias commutes through it exactly."""
    sub = (dense_size - 1) // stride + 1
    interp = (np.eye(target, dtype=np.float32) if sub == target
              else _interp_matrix_np(target, sub))
    m = np.zeros((target, dense_size), np.float32)
    m[:, ::stride] = interp
    return m


class _BranchPlan(NamedTuple):
    bases: tuple   # flat lane offset of each of the k*k taps into (Cin, Hp*Wp)
    slab: int      # lane length of every tap window: (hd-1)*Wp + wd
    group: int     # index of the shared resize matrix for this branch


# ------------------------------- Pallas kernel --------------------------------


def _aspp_fused_kernel(*refs, plan, n):
    """Gridless call: every ref is the full array, resident in VMEM.
       refs = (x_flat, wt_1..wt_4, m_g..., bias, out)
       x_flat : (N, Cin, Hp*Wp)  zero-padded NCHW input, spatial flattened on lanes
       wt_i   : (Cout, k*k*Cin)  branch conv weight pre-fused with its 1x1-conv slice
       m_g    : (th*tw, slab)    folded stride + bilinear resize + valid-column select
       bias   : (Cout, 1)        fused bias  b5 + sum_i W5_i^T b_i
       out    : (N, Cout, th*tw) lane-dense channel-major output (free NCHW reshape)
    """
    nb = len(plan)
    x_ref, out_ref = refs[0], refs[-1]
    bias = refs[-2][...]                                         # (Cout, 1)
    wt_refs = refs[1:1 + nb]
    m_refs = refs[1 + nb:-2]

    for b in range(n):                    # tiny static batch loop, fully unrolled
        x = x_ref[b]                                             # (Cin, Hp*Wp)
        group_y = [None] * len(m_refs)
        for i, bp in enumerate(plan):
            # im2col: each tap is a contiguous lane window of the flat padded row;
            # taps are stacked along SUBLANES (no lane concat, no (H,W) relayout).
            col = jnp.concatenate(
                [x[:, s:s + bp.slab] for s in bp.bases], axis=0)  # (k*k*Cin, slab)
            y = jnp.dot(wt_refs[i][...], col,
                        preferred_element_type=jnp.float32)       # (Cout, slab)
            g = bp.group
            group_y[g] = y if group_y[g] is None else group_y[g] + y
        acc = bias                                                # broadcast on lanes
        for g, m_ref in enumerate(m_refs):
            # (Cout, slab) @ (slab, th*tw): folds stride sub-sampling, align_corners
            # bilinear resize and the drop of the padded "wide" columns into one
            # matmul whose output stays lane-dense (256 lanes).
            acc = acc + jax.lax.dot_general(
                group_y[g], m_ref[...],
                dimension_numbers=(((1,), (1,)), ((), ())),
                preferred_element_type=jnp.float32)
        out_ref[b] = acc.astype(out_ref.dtype)


# -------------------------------- JAX wrapper ---------------------------------


def aspp_forward(x_nchw, params, strides, dilations):
    """Mirrors ASPPModule.forward. Input/output are NCHW like PyTorch."""
    n, cin, h, w = x_nchw.shape
    cout = params["b5"].shape[0]
    pmax = max(dilations)
    hp, wp = h + 2 * pmax, w + 2 * pmax
    hi = jax.lax.Precision.HIGHEST

    # Single fused zero-pad; NO NCHW->NHWC transpose (kernel is channel-major too).
    xp = jnp.pad(x_nchw, ((0, 0), (0, 0), (pmax, pmax), (pmax, pmax)))
    x_flat = xp.reshape(n, cin, hp * wp)          # row-major => free reshape in HBM

    # Static per-branch geometry.
    geos = []
    for i in range(4):
        k = params[f"w{i + 1}"].shape[0]
        d, s = dilations[i], strides[i]
        hd = h + 2 * d - d * (k - 1)              # dense (stride-1) conv output size
        wd = w + 2 * d - d * (k - 1)
        geos.append((k, d, s, hd, wd, (hd - 1) // s + 1, (wd - 1) // s + 1))
    th, tw = geos[0][5], geos[0][6]               # target size = branch-1 output
    tpix = th * tw

    plan, branch_wts = [], []
    group_idx, group_mats = {}, []
    fused_bias = params["b5"].astype(jnp.float32)
    conv_flops = group_flops = 0
    for i in range(4):
        k, d, s, hd, wd, ho, wo = geos[i]
        # Pre-fuse the branch conv with its slice of the 1x1 conv (removes the
        # channel concat and the final matmul). HIGHEST precision for the fold so
        # the 1e-4 tolerance against the f32 reference holds.
        w_mat = params[f"w{i + 1}"].reshape(k * k * cin, -1)        # (k*k*Cin, Cb)
        w5_i = params["w5"][i * cout:(i + 1) * cout, :]             # (Cb, Cout)
        branch_wts.append(jnp.dot(w_mat, w5_i, precision=hi).T)     # (Cout, k*k*Cin)
        fused_bias = fused_bias + jnp.dot(params[f"b{i + 1}"], w5_i, precision=hi)

        slab = (hd - 1) * wp + wd
        key = (hd, wd, s)
        if key not in group_idx:      # branches 2-4 share one resize matrix here
            ah = _axis_resize_matrix(hd, s, th)                     # (th, hd)
            aw = _axis_resize_matrix(wd, s, tw)                     # (tw, wd)
            kr = np.einsum("uh,vw->uvhw", ah, aw).astype(np.float32)
            m_wide = np.zeros((th, tw, slab), np.float32)
            for r in range(hd):
                m_wide[:, :, r * wp:r * wp + wd] = kr[:, :, r, :]
            group_idx[key] = len(group_mats)
            group_mats.append(jnp.asarray(m_wide.reshape(tpix, slab)))
            group_flops += 2 * cout * slab * tpix
        off = pmax - d
        bases = tuple((off + a * d) * wp + (off + b * d)
                      for a in range(k) for b in range(k))
        plan.append(_BranchPlan(bases=bases, slab=slab, group=group_idx[key]))
        conv_flops += 2 * cout * (k * k * cin) * slab

    inputs = [x_flat] + branch_wts + group_mats + [fused_bias.reshape(cout, 1)]
    flops = n * (conv_flops + group_flops)
    bytes_accessed = (sum(int(np.prod(a.shape)) * a.dtype.itemsize for a in inputs)
                      + n * cout * tpix * x_nchw.dtype.itemsize)

    kern = functools.partial(_aspp_fused_kernel, plan=tuple(plan), n=n)
    out_flat = pl.pallas_call(
        kern,
        out_shape=jax.ShapeDtypeStruct((n, cout, tpix), x_nchw.dtype),
        in_specs=[pl.BlockSpec(memory_space=pltpu.MemorySpace.VMEM)
                  for _ in inputs],
        out_specs=pl.BlockSpec(memory_space=pltpu.MemorySpace.VMEM),
        cost_estimate=pl.CostEstimate(flops=int(flops), transcendentals=0,
                                      bytes_accessed=int(bytes_accessed)),
    )(*inputs)

    # Free reshape: the kernel output is already channel-major NCHW-flat.
    out = out_flat.reshape(n, cout, th, tw)
    # torch: `if cat.shape == out.shape: return cat + out`.  cat has 4*out_channels
    # channels vs out_channels, so the residual is unreachable; return `out`.
    return out


# --------------------------- params & pure-JAX reference ----------------------


def init_params(key, in_channels, out_channels, kernel_sizes):
    """Deterministic init mimicking PyTorch Conv2d default U(-1/sqrt(fan_in), ...)."""
    params = {}
    keys = jax.random.split(key, 10)
    for i, k in enumerate(kernel_sizes):
        bound = 1.0 / math.sqrt(in_channels * k * k)
        params[f"w{i + 1}"] = jax.random.uniform(
            keys[2 * i], (k, k, in_channels, out_channels), jnp.float32, -bound, bound)
        params[f"b{i + 1}"] = jax.random.uniform(
            keys[2 * i + 1], (out_channels,), jnp.float32, -bound, bound)
    bound5 = 1.0 / math.sqrt(4 * out_channels)
    params["w5"] = jax.random.uniform(
        keys[8], (4 * out_channels, out_channels), jnp.float32, -bound5, bound5)
    params["b5"] = jax.random.uniform(
        keys[9], (out_channels,), jnp.float32, -bound5, bound5)
    return params


def aspp_reference(x_nchw, params, strides, dilations):
    """Pure-JAX (XLA) reference with identical semantics, full f32 precision."""
    hi = jax.lax.Precision.HIGHEST
    x = jnp.transpose(x_nchw, (0, 2, 3, 1))
    br = []
    for i in range(4):
        w, b = params[f"w{i + 1}"], params[f"b{i + 1}"]
        d, s = dilations[i], strides[i]
        y = jax.lax.conv_general_dilated(
            x, w, window_strides=(s, s), padding=((d, d), (d, d)),
            rhs_dilation=(d, d), dimension_numbers=("NHWC", "HWIO", "NHWC"),
            precision=hi) + b
        br.append(y)
    th, tw = br[0].shape[1], br[0].shape[2]
    for i in range(1, 4):
        if br[i].shape[1:3] != (th, tw):
            ah = jnp.asarray(_interp_matrix_np(th, br[i].shape[1]))
            aw = jnp.asarray(_interp_matrix_np(tw, br[i].shape[2]))
            br[i] = jnp.einsum("uh,nhwc,vw->nuvc", ah, br[i], aw, precision=hi)
    cat = jnp.concatenate(br, axis=-1)
    out = jnp.einsum("nhwc,cd->nhwd", cat, params["w5"], precision=hi) + params["b5"]
    if cat.shape == out.shape:   # unreachable (4*Cout != Cout), mirrors PyTorch
        out = cat + out
    return jnp.transpose(out, (0, 3, 1, 2))


# ------------------------------------ main -------------------------------------


if __name__ == "__main__":
    in_channels, out_channels = 4, 8
    kernel_sizes = (3, 3, 3, 3)
    strides = (1, 2, 2, 2)      # branch 1 keeps 16x16; branches 2-4 -> 8x8, upsampled
    dilations = (1, 2, 3, 4)    # padding = dilation, as in the module

    key = jax.random.PRNGKey(0)
    kx, kp = jax.random.split(key)
    x = jax.random.normal(kx, (2, in_channels, 16, 16), jnp.float32)  # NCHW
    params = init_params(kp, in_channels, out_channels, kernel_sizes)

    fwd = jax.jit(functools.partial(aspp_forward, strides=strides,
                                    dilations=dilations))
    out = jax.block_until_ready(fwd(x, params))

    assert out.shape == (2, out_channels, 16, 16), out.shape
    assert bool(jnp.isfinite(out).all())

    ref = aspp_reference(x, params, strides, dilations)
    max_err = float(jnp.max(jnp.abs(out - ref)))
    assert max_err < 1e-4, f"max abs error {max_err}"

    print("KERNEL_OK")
</pallas_src>

<mosaic_0001>
module attributes {stable_mosaic.version = 11 : i64} {
  func.func @_aspp_fused_kernel(%arg0: memref<2x4x576xf32, #tpu.memory_space<vmem>>, %arg1: memref<8x36xf32, #tpu.memory_space<vmem>>, %arg2: memref<8x36xf32, #tpu.memory_space<vmem>>, %arg3: memref<8x36xf32, #tpu.memory_space<vmem>>, %arg4: memref<8x36xf32, #tpu.memory_space<vmem>>, %arg5: memref<256x376xf32, #tpu.memory_space<vmem>>, %arg6: memref<256x376xf32, #tpu.memory_space<vmem>>, %arg7: memref<8x1xf32, #tpu.memory_space<vmem>>, %arg8: memref<2x8x256xf32, #tpu.memory_space<vmem>>) attributes {dimension_semantics = [], scalar_prefetch = 0 : i64, scratch_operands = 0 : i64, tpu.core_type = #tpu.core_type<tc>} {
    %c0 = arith.constant 0 : index
    %c0_0 = arith.constant 0 : index
    %0 = vector.load %arg7[%c0, %c0_0] : memref<8x1xf32, #tpu.memory_space<vmem>>, vector<8x1xf32>
    %c0_1 = arith.constant 0 : index
    %c0_2 = arith.constant 0 : index
    %c0_3 = arith.constant 0 : index
    %1 = vector.load %arg0[%c0_1, %c0_2, %c0_3] : memref<2x4x576xf32, #tpu.memory_space<vmem>>, vector<1x4x576xf32>
    %2 = vector.shape_cast %1 : vector<1x4x576xf32> to vector<4x576xf32>
    %3 = vector.extract_strided_slice %2 {offsets = [0, 75], sizes = [4, 376], strides = [1, 1]} : vector<4x576xf32> to vector<4x376xf32>
    %4 = vector.extract_strided_slice %2 {offsets = [0, 76], sizes = [4, 376], strides = [1, 1]} : vector<4x576xf32> to vector<4x376xf32>
    %5 = vector.extract_strided_slice %2 {offsets = [0, 77], sizes = [4, 376], strides = [1, 1]} : vector<4x576xf32> to vector<4x376xf32>
    %6 = vector.extract_strided_slice %2 {offsets = [0, 99], sizes = [4, 376], strides = [1, 1]} : vector<4x576xf32> to vector<4x376xf32>
    %7 = vector.extract_strided_slice %2 {offsets = [0, 100], sizes = [4, 376], strides = [1, 1]} : vector<4x576xf32> to vector<4x376xf32>
    %8 = vector.extract_strided_slice %2 {offsets = [0, 101], sizes = [4, 376], strides = [1, 1]} : vector<4x576xf32> to vector<4x376xf32>
    %9 = vector.extract_strided_slice %2 {offsets = [0, 123], sizes = [4, 376], strides = [1, 1]} : vector<4x576xf32> to vector<4x376xf32>
    %10 = vector.extract_strided_slice %2 {offsets = [0, 124], sizes = [4, 376], strides = [1, 1]} : vector<4x576xf32> to vector<4x376xf32>
    %11 = vector.extract_strided_slice %2 {offsets = [0, 125], sizes = [4, 376], strides = [1, 1]} : vector<4x576xf32> to vector<4x376xf32>
    %12 = tpu.concatenate %3, %4, %5, %6, %7, %8, %9, %10, %11 in 0 : vector<4x376xf32>, vector<4x376xf32>, vector<4x376xf32>, vector<4x376xf32>, vector<4x376xf32>, vector<4x376xf32>, vector<4x376xf32>, vector<4x376xf32>, vector<4x376xf32> -> vector<36x376xf32>
    %c0_4 = arith.constant 0 : index
    %c0_5 = arith.constant 0 : index
    %13 = vector.load %arg1[%c0_4, %c0_5] : memref<8x36xf32, #tpu.memory_space<vmem>>, vector<8x36xf32>
    %cst = arith.constant dense<0.000000e+00> : vector<8x376xf32>
    %14 = tpu.matmul %13, %12, %cst {dimension_numbers = #tpu.dot_dimension_numbers<[1], [0], [0], [1], [0, 0, 1, 1], [], []>} : vector<8x36xf32>, vector<36x376xf32>, vector<8x376xf32> -> vector<8x376xf32>
    %15 = vector.extract_strided_slice %2 {offsets = [0, 50], sizes = [4, 376], strides = [1, 1]} : vector<4x576xf32> to vector<4x376xf32>
    %16 = vector.extract_strided_slice %2 {offsets = [0, 52], sizes = [4, 376], strides = [1, 1]} : vector<4x576xf32> to vector<4x376xf32>
    %17 = vector.extract_strided_slice %2 {offsets = [0, 54], sizes = [4, 376], strides = [1, 1]} : vector<4x576xf32> to vector<4x376xf32>
    %18 = vector.extract_strided_slice %2 {offsets = [0, 98], sizes = [4, 376], strides = [1, 1]} : vector<4x576xf32> to vector<4x376xf32>
    %19 = vector.extract_strided_slice %2 {offsets = [0, 100], sizes = [4, 376], strides = [1, 1]} : vector<4x576xf32> to vector<4x376xf32>
    %20 = vector.extract_strided_slice %2 {offsets = [0, 102], sizes = [4, 376], strides = [1, 1]} : vector<4x576xf32> to vector<4x376xf32>
    %21 = vector.extract_strided_slice %2 {offsets = [0, 146], sizes = [4, 376], strides = [1, 1]} : vector<4x576xf32> to vector<4x376xf32>
    %22 = vector.extract_strided_slice %2 {offsets = [0, 148], sizes = [4, 376], strides = [1, 1]} : vector<4x576xf32> to vector<4x376xf32>
    %23 = vector.extract_strided_slice %2 {offsets = [0, 150], sizes = [4, 376], strides = [1, 1]} : vector<4x576xf32> to vector<4x376xf32>
    %24 = tpu.concatenate %15, %16, %17, %18, %19, %20, %21, %22, %23 in 0 : vector<4x376xf32>, vector<4x376xf32>, vector<4x376xf32>, vector<4x376xf32>, vector<4x376xf32>, vector<4x376xf32>, vector<4x376xf32>, vector<4x376xf32>, vector<4x376xf32> -> vector<36x376xf32>
    %c0_6 = arith.constant 0 : index
    %c0_7 = arith.constant 0 : index
    %25 = vector.load %arg2[%c0_6, %c0_7] : memref<8x36xf32, #tpu.memory_space<vmem>>, vector<8x36xf32>
    %cst_8 = arith.constant dense<0.000000e+00> : vector<8x376xf32>
    %26 = tpu.matmul %25, %24, %cst_8 {dimension_numbers = #tpu.dot_dimension_numbers<[1], [0], [0], [1], [0, 0, 1, 1], [], []>} : vector<8x36xf32>, vector<36x376xf32>, vector<8x376xf32> -> vector<8x376xf32>
    %27 = vector.extract_strided_slice %2 {offsets = [0, 25], sizes = [4, 376], strides = [1, 1]} : vector<4x576xf32> to vector<4x376xf32>
    %28 = vector.extract_strided_slice %2 {offsets = [0, 28], sizes = [4, 376], strides = [1, 1]} : vector<4x576xf32> to vector<4x376xf32>
    %29 = vector.extract_strided_slice %2 {offsets = [0, 31], sizes = [4, 376], strides = [1, 1]} : vector<4x576xf32> to vector<4x376xf32>
    %30 = vector.extract_strided_slice %2 {offsets = [0, 97], sizes = [4, 376], strides = [1, 1]} : vector<4x576xf32> to vector<4x376xf32>
    %31 = vector.extract_strided_slice %2 {offsets = [0, 100], sizes = [4, 376], strides = [1, 1]} : vector<4x576xf32> to vector<4x376xf32>
    %32 = vector.extract_strided_slice %2 {offsets = [0, 103], sizes = [4, 376], strides = [1, 1]} : vector<4x576xf32> to vector<4x376xf32>
    %33 = vector.extract_strided_slice %2 {offsets = [0, 169], sizes = [4, 376], strides = [1, 1]} : vector<4x576xf32> to vector<4x376xf32>
    %34 = vector.extract_strided_slice %2 {offsets = [0, 172], sizes = [4, 376], strides = [1, 1]} : vector<4x576xf32> to vector<4x376xf32>
    %35 = vector.extract_strided_slice %2 {offsets = [0, 175], sizes = [4, 376], strides = [1, 1]} : vector<4x576xf32> to vector<4x376xf32>
    %36 = tpu.concatenate %27, %28, %29, %30, %31, %32, %33, %34, %35 in 0 : vector<4x376xf32>, vector<4x376xf32>, vector<4x376xf32>, vector<4x376xf32>, vector<4x376xf32>, vector<4x376xf32>, vector<4x376xf32>, vector<4x376xf32>, vector<4x376xf32> -> vector<36x376xf32>
    %c0_9 = arith.constant 0 : index
    %c0_10 = arith.constant 0 : index
    %37 = vector.load %arg3[%c0_9, %c0_10] : memref<8x36xf32, #tpu.memory_space<vmem>>, vector<8x36xf32>
    %cst_11 = arith.constant dense<0.000000e+00> : vector<8x376xf32>
    %38 = tpu.matmul %37, %36, %cst_11 {dimension_numbers = #tpu.dot_dimension_numbers<[1], [0], [0], [1], [0, 0, 1, 1], [], []>} : vector<8x36xf32>, vector<36x376xf32>, vector<8x376xf32> -> vector<8x376xf32>
    %39 = arith.addf %26, %38 : vector<8x376xf32>
    %40 = vector.extract_strided_slice %2 {offsets = [0, 0], sizes = [4, 376], strides = [1, 1]} : vector<4x576xf32> to vector<4x376xf32>
    %41 = vector.extract_strided_slice %2 {offsets = [0, 4], sizes = [4, 376], strides = [1, 1]} : vector<4x576xf32> to vector<4x376xf32>
    %42 = vector.extract_strided_slice %2 {offsets = [0, 8], sizes = [4, 376], strides = [1, 1]} : vector<4x576xf32> to vector<4x376xf32>
    %43 = vector.extract_strided_slice %2 {offsets = [0, 96], sizes = [4, 376], strides = [1, 1]} : vector<4x576xf32> to vector<4x376xf32>
    %44 = vector.extract_strided_slice %2 {offsets = [0, 100], sizes = [4, 376], strides = [1, 1]} : vector<4x576xf32> to vector<4x376xf32>
    %45 = vector.extract_strided_slice %2 {offsets = [0, 104], sizes = [4, 376], strides = [1, 1]} : vector<4x576xf32> to vector<4x376xf32>
    %46 = vector.extract_strided_slice %2 {offsets = [0, 192], sizes = [4, 376], strides = [1, 1]} : vector<4x576xf32> to vector<4x376xf32>
    %47 = vector.extract_strided_slice %2 {offsets = [0, 196], sizes = [4, 376], strides = [1, 1]} : vector<4x576xf32> to vector<4x376xf32>
    %48 = vector.extract_strided_slice %2 {offsets = [0, 200], sizes = [4, 376], strides = [1, 1]} : vector<4x576xf32> to vector<4x376xf32>
    %49 = tpu.concatenate %40, %41, %42, %43, %44, %45, %46, %47, %48 in 0 : vector<4x376xf32>, vector<4x376xf32>, vector<4x376xf32>, vector<4x376xf32>, vector<4x376xf32>, vector<4x376xf32>, vector<4x376xf32>, vector<4x376xf32>, vector<4x376xf32> -> vector<36x376xf32>
    %c0_12 = arith.constant 0 : index
    %c0_13 = arith.constant 0 : index
    %50 = vector.load %arg4[%c0_12, %c0_13] : memref<8x36xf32, #tpu.memory_space<vmem>>, vector<8x36xf32>
    %cst_14 = arith.constant dense<0.000000e+00> : vector<8x376xf32>
    %51 = tpu.matmul %50, %49, %cst_14 {dimension_numbers = #tpu.dot_dimension_numbers<[1], [0], [0], [1], [0, 0, 1, 1], [], []>} : vector<8x36xf32>, vector<36x376xf32>, vector<8x376xf32> -> vector<8x376xf32>
    %52 = arith.addf %39, %51 : vector<8x376xf32>
    %c0_15 = arith.constant 0 : index
    %c0_16 = arith.constant 0 : index
    %53 = vector.load %arg5[%c0_15, %c0_16] : memref<256x376xf32, #tpu.memory_space<vmem>>, vector<256x376xf32>
    %cst_17 = arith.constant dense<0.000000e+00> : vector<8x256xf32>
    %54 = tpu.matmul %14, %53, %cst_17 {dimension_numbers = #tpu.dot_dimension_numbers<[1], [1], [0], [0], [0, 0, 1, 0], [], []>} : vector<8x376xf32>, vector<256x376xf32>, vector<8x256xf32> -> vector<8x256xf32>
    %55 = vector.broadcast %0 : vector<8x1xf32> to vector<8x256xf32>
    %56 = arith.addf %55, %54 : vector<8x256xf32>
    %c0_18 = arith.constant 0 : index
    %c0_19 = arith.constant 0 : index
    %57 = vector.load %arg6[%c0_18, %c0_19] : memref<256x376xf32, #tpu.memory_space<vmem>>, vector<256x376xf32>
    %cst_20 = arith.constant dense<0.000000e+00> : vector<8x256xf32>
    %58 = tpu.matmul %52, %57, %cst_20 {dimension_numbers = #tpu.dot_dimension_numbers<[1], [1], [0], [0], [0, 0, 1, 0], [], []>} : vector<8x376xf32>, vector<256x376xf32>, vector<8x256xf32> -> vector<8x256xf32>
    %59 = arith.addf %56, %58 : vector<8x256xf32>
    %c0_21 = arith.constant 0 : index
    %c0_22 = arith.constant 0 : index
    %c0_23 = arith.constant 0 : index
    %60 = vector.load %arg8[%c0_21, %c0_22, %c0_23] : memref<2x8x256xf32, #tpu.memory_space<vmem>>, vector<1x8x256xf32>
    %61 = vector.shape_cast %60 : vector<1x8x256xf32> to vector<8x256xf32>
    %62 = vector.shape_cast %59 : vector<8x256xf32> to vector<1x8x256xf32>
    tpu.vector_store %arg8[%c0_21, %c0_22, %c0_23], %62 {strides = array<i32>} : memref<2x8x256xf32, #tpu.memory_space<vmem>>, vector<1x8x256xf32>,
    %c1 = arith.constant 1 : index
    %c0_24 = arith.constant 0 : index
    %c0_25 = arith.constant 0 : index
    %63 = vector.load %arg0[%c1, %c0_24, %c0_25] : memref<2x4x576xf32, #tpu.memory_space<vmem>>, vector<1x4x576xf32>
    %64 = vector.shape_cast %63 : vector<1x4x576xf32> to vector<4x576xf32>
    %65 = vector.extract_strided_slice %64 {offsets = [0, 75], sizes = [4, 376], strides = [1, 1]} : vector<4x576xf32> to vector<4x376xf32>
    %66 = vector.extract_strided_slice %64 {offsets = [0, 76], sizes = [4, 376], strides = [1, 1]} : vector<4x576xf32> to vector<4x376xf32>
    %67 = vector.extract_strided_slice %64 {offsets = [0, 77], sizes = [4, 376], strides = [1, 1]} : vector<4x576xf32> to vector<4x376xf32>
    %68 = vector.extract_strided_slice %64 {offsets = [0, 99], sizes = [4, 376], strides = [1, 1]} : vector<4x576xf32> to vector<4x376xf32>
    %69 = vector.extract_strided_slice %64 {offsets = [0, 100], sizes = [4, 376], strides = [1, 1]} : vector<4x576xf32> to vector<4x376xf32>
    %70 = vector.extract_strided_slice %64 {offsets = [0, 101], sizes = [4, 376], strides = [1, 1]} : vector<4x576xf32> to vector<4x376xf32>
    %71 = vector.extract_strided_slice %64 {offsets = [0, 123], sizes = [4, 376], strides = [1, 1]} : vector<4x576xf32> to vector<4x376xf32>
    %72 = vector.extract_strided_slice %64 {offsets = [0, 124], sizes = [4, 376], strides = [1, 1]} : vector<4x576xf32> to vector<4x376xf32>
    %73 = vector.extract_strided_slice %64 {offsets = [0, 125], sizes = [4, 376], strides = [1, 1]} : vector<4x576xf32> to vector<4x376xf32>
    %74 = tpu.concatenate %65, %66, %67, %68, %69, %70, %71, %72, %73 in 0 : vector<4x376xf32>, vector<4x376xf32>, vector<4x376xf32>, vector<4x376xf32>, vector<4x376xf32>, vector<4x376xf32>, vector<4x376xf32>, vector<4x376xf32>, vector<4x376xf32> -> vector<36x376xf32>
    %c0_26 = arith.constant 0 : index
    %c0_27 = arith.constant 0 : index
    %75 = vector.load %arg1[%c0_26, %c0_27] : memref<8x36xf32, #tpu.memory_space<vmem>>, vector<8x36xf32>
    %cst_28 = arith.constant dense<0.000000e+00> : vector<8x376xf32>
    %76 = tpu.matmul %75, %74, %cst_28 {dimension_numbers = #tpu.dot_dimension_numbers<[1], [0], [0], [1], [0, 0, 1, 1], [], []>} : vector<8x36xf32>, vector<36x376xf32>, vector<8x376xf32> -> vector<8x376xf32>
    %77 = vector.extract_strided_slice %64 {offsets = [0, 50], sizes = [4, 376], strides = [1, 1]} : vector<4x576xf32> to vector<4x376xf32>
    %78 = vector.extract_strided_slice %64 {offsets = [0, 52], sizes = [4, 376], strides = [1, 1]} : vector<4x576xf32> to vector<4x376xf32>
    %79 = vector.extract_strided_slice %64 {offsets = [0, 54], sizes = [4, 376], strides = [1, 1]} : vector<4x576xf32> to vector<4x376xf32>
    %80 = vector.extract_strided_slice %64 {offsets = [0, 98], sizes = [4, 376], strides = [1, 1]} : vector<4x576xf32> to vector<4x376xf32>
    %81 = vector.extract_strided_slice %64 {offsets = [0, 100], sizes = [4, 376], strides = [1, 1]} : vector<4x576xf32> to vector<4x376xf32>
    %82 = vector.extract_strided_slice %64 {offsets = [0, 102], sizes = [4, 376], strides = [1, 1]} : vector<4x576xf32> to vector<4x376xf32>
    %83 = vector.extract_strided_slice %64 {offsets = [0, 146], sizes = [4, 376], strides = [1, 1]} : vector<4x576xf32> to vector<4x376xf32>
    %84 = vector.extract_strided_slice %64 {offsets = [0, 148], sizes = [4, 376], strides = [1, 1]} : vector<4x576xf32> to vector<4x376xf32>
    %85 = vector.extract_strided_slice %64 {offsets = [0, 150], sizes = [4, 376], strides = [1, 1]} : vector<4x576xf32> to vector<4x376xf32>
    %86 = tpu.concatenate %77, %78, %79, %80, %81, %82, %83, %84, %85 in 0 : vector<4x376xf32>, vector<4x376xf32>, vector<4x376xf32>, vector<4x376xf32>, vector<4x376xf32>, vector<4x376xf32>, vector<4x376xf32>, vector<4x376xf32>, vector<4x376xf32> -> vector<36x376xf32>
    %c0_29 = arith.constant 0 : index
    %c0_30 = arith.constant 0 : index
    %87 = vector.load %arg2[%c0_29, %c0_30] : memref<8x36xf32, #tpu.memory_space<vmem>>, vector<8x36xf32>
    %cst_31 = arith.constant dense<0.000000e+00> : vector<8x376xf32>
    %88 = tpu.matmul %87, %86, %cst_31 {dimension_numbers = #tpu.dot_dimension_numbers<[1], [0], [0], [1], [0, 0, 1, 1], [], []>} : vector<8x36xf32>, vector<36x376xf32>, vector<8x376xf32> -> vector<8x376xf32>
    %89 = vector.extract_strided_slice %64 {offsets = [0, 25], sizes = [4, 376], strides = [1, 1]} : vector<4x576xf32> to vector<4x376xf32>
    %90 = vector.extract_strided_slice %64 {offsets = [0, 28], sizes = [4, 376], strides = [1, 1]} : vector<4x576xf32> to vector<4x376xf32>
    %91 = vector.extract_strided_slice %64 {offsets = [0, 31], sizes = [4, 376], strides = [1, 1]} : vector<4x576xf32> to vector<4x376xf32>
    %92 = vector.extract_strided_slice %64 {offsets = [0, 97], sizes = [4, 376], strides = [1, 1]} : vector<4x576xf32> to vector<4x376xf32>
    %93 = vector.extract_strided_slice %64 {offsets = [0, 100], sizes = [4, 376], strides = [1, 1]} : vector<4x576xf32> to vector<4x376xf32>
    %94 = vector.extract_strided_slice %64 {offsets = [0, 103], sizes = [4, 376], strides = [1, 1]} : vector<4x576xf32> to vector<4x376xf32>
    %95 = vector.extract_strided_slice %64 {offsets = [0, 169], sizes = [4, 376], strides = [1, 1]} : vector<4x576xf32> to vector<4x376xf32>
    %96 = vector.extract_strided_slice %64 {offsets = [0, 172], sizes = [4, 376], strides = [1, 1]} : vector<4x576xf32> to vector<4x376xf32>
    %97 = vector.extract_strided_slice %64 {offsets = [0, 175], sizes = [4, 376], strides = [1, 1]} : vector<4x576xf32> to vector<4x376xf32>
    %98 = tpu.concatenate %89, %90, %91, %92, %93, %94, %95, %96, %97 in 0 : vector<4x376xf32>, vector<4x376xf32>, vector<4x376xf32>, vector<4x376xf32>, vector<4x376xf32>, vector<4x376xf32>, vector<4x376xf32>, vector<4x376xf32>, vector<4x376xf32> -> vector<36x376xf32>
    %c0_32 = arith.constant 0 : index
    %c0_33 = arith.constant 0 : index
    %99 = vector.load %arg3[%c0_32, %c0_33] : memref<8x36xf32, #tpu.memory_space<vmem>>, vector<8x36xf32>
    %cst_34 = arith.constant dense<0.000000e+00> : vector<8x376xf32>
    %100 = tpu.matmul %99, %98, %cst_34 {dimension_numbers = #tpu.dot_dimension_numbers<[1], [0], [0], [1], [0, 0, 1, 1], [], []>} : vector<8x36xf32>, vector<36x376xf32>, vector<8x376xf32> -> vector<8x376xf32>
    %101 = arith.addf %88, %100 : vector<8x376xf32>
    %102 = vector.extract_strided_slice %64 {offsets = [0, 0], sizes = [4, 376], strides = [1, 1]} : vector<4x576xf32> to vector<4x376xf32>
    %103 = vector.extract_strided_slice %64 {offsets = [0, 4], sizes = [4, 376], strides = [1, 1]} : vector<4x576xf32> to vector<4x376xf32>
    %104 = vector.extract_strided_slice %64 {offsets = [0, 8], sizes = [4, 376], strides = [1, 1]} : vector<4x576xf32> to vector<4x376xf32>
    %105 = vector.extract_strided_slice %64 {offsets = [0, 96], sizes = [4, 376], strides = [1, 1]} : vector<4x576xf32> to vector<4x376xf32>
    %106 = vector.extract_strided_slice %64 {offsets = [0, 100], sizes = [4, 376], strides = [1, 1]} : vector<4x576xf32> to vector<4x376xf32>
    %107 = vector.extract_strided_slice %64 {offsets = [0, 104], sizes = [4, 376], strides = [1, 1]} : vector<4x576xf32> to vector<4x376xf32>
    %108 = vector.extract_strided_slice %64 {offsets = [0, 192], sizes = [4, 376], strides = [1, 1]} : vector<4x576xf32> to vector<4x376xf32>
    %109 = vector.extract_strided_slice %64 {offsets = [0, 196], sizes = [4, 376], strides = [1, 1]} : vector<4x576xf32> to vector<4x376xf32>
    %110 = vector.extract_strided_slice %64 {offsets = [0, 200], sizes = [4, 376], strides = [1, 1]} : vector<4x576xf32> to vector<4x376xf32>
    %111 = tpu.concatenate %102, %103, %104, %105, %106, %107, %108, %109, %110 in 0 : vector<4x376xf32>, vector<4x376xf32>, vector<4x376xf32>, vector<4x376xf32>, vector<4x376xf32>, vector<4x376xf32>, vector<4x376xf32>, vector<4x376xf32>, vector<4x376xf32> -> vector<36x376xf32>
    %c0_35 = arith.constant 0 : index
    %c0_36 = arith.constant 0 : index
    %112 = vector.load %arg4[%c0_35, %c0_36] : memref<8x36xf32, #tpu.memory_space<vmem>>, vector<8x36xf32>
    %cst_37 = arith.constant dense<0.000000e+00> : vector<8x376xf32>
    %113 = tpu.matmul %112, %111, %cst_37 {dimension_numbers = #tpu.dot_dimension_numbers<[1], [0], [0], [1], [0, 0, 1, 1], [], []>} : vector<8x36xf32>, vector<36x376xf32>, vector<8x376xf32> -> vector<8x376xf32>
    %114 = arith.addf %101, %113 : vector<8x376xf32>
    %c0_38 = arith.constant 0 : index
    %c0_39 = arith.constant 0 : index
    %115 = vector.load %arg5[%c0_38, %c0_39] : memref<256x376xf32, #tpu.memory_space<vmem>>, vector<256x376xf32>
    %cst_40 = arith.constant dense<0.000000e+00> : vector<8x256xf32>
    %116 = tpu.matmul %76, %115, %cst_40 {dimension_numbers = #tpu.dot_dimension_numbers<[1], [1], [0], [0], [0, 0, 1, 0], [], []>} : vector<8x376xf32>, vector<256x376xf32>, vector<8x256xf32> -> vector<8x256xf32>
    %117 = vector.broadcast %0 : vector<8x1xf32> to vector<8x256xf32>
    %118 = arith.addf %117, %116 : vector<8x256xf32>
    %c0_41 = arith.constant 0 : index
    %c0_42 = arith.constant 0 : index
    %119 = vector.load %arg6[%c0_41, %c0_42] : memref<256x376xf32, #tpu.memory_space<vmem>>, vector<256x376xf32>
    %cst_43 = arith.constant dense<0.000000e+00> : vector<8x256xf32>
    %120 = tpu.matmul %114, %119, %cst_43 {dimension_numbers = #tpu.dot_dimension_numbers<[1], [1], [0], [0], [0, 0, 1, 0], [], []>} : vector<8x376xf32>, vector<256x376xf32>, vector<8x256xf32> -> vector<8x256xf32>
    %121 = arith.addf %118, %120 : vector<8x256xf32>
    %c1_44 = arith.constant 1 : index
    %c0_45 = arith.constant 0 : index
    %c0_46 = arith.constant 0 : index
    %122 = vector.load %arg8[%c1_44, %c0_45, %c0_46] : memref<2x8x256xf32, #tpu.memory_space<vmem>>, vector<1x8x256xf32>
    %123 = vector.shape_cast %122 : vector<1x8x256xf32> to vector<8x256xf32>
    %124 = vector.shape_cast %121 : vector<8x256xf32> to vector<1x8x256xf32>
    tpu.vector_store %arg8[%c1_44, %c0_45, %c0_46], %124 {strides = array<i32>} : memref<2x8x256xf32, #tpu.memory_space<vmem>>, vector<1x8x256xf32>,
    return
  }
}

</mosaic_0001>

<llo_original>
// kernel: aspp_forward.1
$region0: #{aspp_forward.1}
  #allocation0 [shape = 'u32[]', space=smem, size = 0x4, offset = 0x4, fixed_abs, tag = 'smem constant byte address 0x4 - core index']
  #allocation1 [shape = 'u32[144,128]{1,0:T(1,128)}', space=vmem, size = 0x12000, scoped, tag = 'internal scratch']
  %s0 = inlined_call_operand.vmem [shape: f32[2,4,576], index: 0, kind: input, shape index: {}]
  %s1 = inlined_call_operand.vmem [shape: f32[8,36], index: 1, kind: input, shape index: {}]
  %s2 = inlined_call_operand.vmem [shape: f32[8,36], index: 2, kind: input, shape index: {}]
  %s3 = inlined_call_operand.vmem [shape: f32[8,36], index: 3, kind: input, shape index: {}]
  %s4 = inlined_call_operand.vmem [shape: f32[8,36], index: 4, kind: input, shape index: {}]
  %s5 = inlined_call_operand.hbm [shape: f32[256,376], index: 5, kind: input, shape index: {}]
  %s6 = inlined_call_operand.vmem [shape: f32[256,376], index: 6, kind: input, shape index: {}]
  %s7 = inlined_call_operand.vmem [shape: f32[8,1], index: 7, kind: input, shape index: {}]
  %s8 = inlined_call_operand.vmem [shape: f32[2,8,256], index: 8, kind: output, shape index: {}]
  %s9 = sld [smem:[#allocation0]]
  $region46: #{aspp_forward.1} parent=0
    _
  %s11 = ssub.s32 1, %s9
  %s12 = scalar_select 0, %s11, %s9
  $region1: #{aspp_forward.1} parent=0
    #allocation2 [shape = 'u8[393216]{0}', space=vmem, size = 0x60000, scoped, tag = 'input window, operand 5, single buffered']
    #allocation3 [shape = 's32[1]{0}', space=sflag, size = 0x4, scoped, tag = 'scoped memory for aspp_forward.1']
    %13 = vsyncpa [#allocation3], 0
    // Predicated region
    $region2: #{aspp_forward.1} parent=1 // pred_check
      _
    $region3: #{aspp_forward.1} parent=1 // pred_check_branch
      %15 = sbr.rel (0) target = $region5
    $region4: #{aspp_forward.1} parent=1 // pred_region
      _
    $region5: #{aspp_forward.1} parent=1 // pred_fallthru
      _
    // Predicated region
    $region6: #{aspp_forward.1} parent=1 // pred_check
      _
    $region7: #{aspp_forward.1} parent=1 // pred_check_branch
      %17 = sbr.rel (0) target = $region9
    $region8: #{aspp_forward.1} parent=1 // pred_region
      _
    $region9: #{aspp_forward.1} parent=1 // pred_fallthru
      _
    // Predicated region
    $region10: #{aspp_forward.1} parent=1 // pred_check
      _
    $region11: #{aspp_forward.1} parent=1 // pred_check_branch
      %19 = sbr.rel (0) target = $region13
    $region12: #{aspp_forward.1} parent=1 // pred_region
      _
    $region13: #{aspp_forward.1} parent=1 // pred_fallthru
      _
    // Predicated region
    $region14: #{aspp_forward.1} parent=1 // pred_check
      _
    $region15: #{aspp_forward.1} parent=1 // pred_check_branch
      %21 = sbr.rel (0) target = $region17
    $region16: #{aspp_forward.1} parent=1 // pred_region
      _
    $region17: #{aspp_forward.1} parent=1 // pred_fallthru
      _
    // Predicated region
    $region18: #{aspp_forward.1} parent=1 // pred_check
      _
    $region19: #{aspp_forward.1} parent=1 // pred_check_branch
      %23 = sbr.rel (0) target = $region21
    $region20: #{aspp_forward.1} parent=1 // pred_region
      _
    $region21: #{aspp_forward.1} parent=1 // pred_fallthru
      _
    // Predicated region
    $region22: #{aspp_forward.1} parent=1 // pred_check
      _
    $region23: #{aspp_forward.1} parent=1 // pred_check_branch
      %25 = sbr.rel (0) target = $region25
    $region24: #{aspp_forward.1} parent=1 // pred_region
      %s27 = ssub.s32 12288, 12288
      %28 = vsyncadd [#allocation3], %s27
      %s29 = sshll.u32 [#allocation2], 4
      %s30 = int_to_ptr.vmem [resolvable:$true] %s29
      %35 = dma.hbm_to_vmem [thread:$0]  %s5, 12288, %s30, [#allocation3], 384, 384, 24
    $region25: #{aspp_forward.1} parent=1 // pred_fallthru
      _
    // Predicated region
    $region26: #{aspp_forward.1} parent=1 // pred_check
      _
    $region27: #{aspp_forward.1} parent=1 // pred_check_branch
      %37 = sbr.rel (0) target = $region29
    $region28: #{aspp_forward.1} parent=1 // pred_region
      _
    $region29: #{aspp_forward.1} parent=1 // pred_fallthru
      _
    // Predicated region
    $region30: #{aspp_forward.1} parent=1 // pred_check
      _
    $region31: #{aspp_forward.1} parent=1 // pred_check_branch
      %39 = sbr.rel (0) target = $region33
    $region32: #{aspp_forward.1} parent=1 // pred_region
      _
    $region33: #{aspp_forward.1} parent=1 // pred_fallthru
      _
    // Predicated region
    $region34: #{aspp_forward.1} parent=1 // pred_check
      _
    $region35: #{aspp_forward.1} parent=1 // pred_check_branch
      %41 = sbr.rel (0) target = $region37
    $region36: #{aspp_forward.1} parent=1 // pred_region
      %42 = dma.done [#allocation3], 12288
    $region37: #{aspp_forward.1} parent=1 // pred_fallthru
      _
    %v43 = vld [vmem:[%s7] sm:$0xff]
    %v44 = vld [vmem:[%s0] sm:$0xff]
    %v45 = vld [vmem:[%s0 + $0x8] sm:$0xff]
    %v46 = vld [vmem:[%s0 + $0x10] sm:$0xf]
    %v49 = vcombine.high %v44, %v44
    %v50 = vcombine.high %v45, %v45
    %v53 = vcombine.low %v44, %v44
    %v54 = vcombine.low %v45, %v45
    %55 = vrot.lane.b32.xlu0 %v53, 127
    %v56 = vpop.permute.xlu0 %55
    %57 = vrot.lane.b32.xlu0 %v44, 127
    %v58 = vpop.permute.xlu0 %57
    %59 = vrot.lane.b32.xlu0 %v54, 127
    %v60 = vpop.permute.xlu0 %59
    %61 = vrot.lane.b32.xlu0 %v45, 127
    %v62 = vpop.permute.xlu0 %61
    %vm63 = vcmask 1039360
    %v64 = vsel %vm63, %v56, %v58
    %v65 = vsel %vm63, %v58, %v60
    %v66 = vsel %vm63, %v60, %v62
    %71 = vrot.lane.b32.xlu0 %v44, 126
    %v72 = vpop.permute.xlu0 %71
    %73 = vrot.lane.b32.xlu0 %v49, 126
    %v74 = vpop.permute.xlu0 %73
    %75 = vrot.lane.b32.xlu0 %v45, 126
    %v76 = vpop.permute.xlu0 %75
    %77 = vrot.lane.b32.xlu0 %v50, 126
    %v78 = vpop.permute.xlu0 %77
    %vm79 = vcmask 1031168
    %v80 = vsel %vm79, %v72, %v74
    %v81 = vsel %vm79, %v74, %v76
    %v82 = vsel %vm79, %v76, %v78
    %87 = vrot.lane.b32.xlu0 %v53, 104
    %v88 = vpop.permute.xlu0 %87
    %89 = vrot.lane.b32.xlu0 %v44, 104
    %v90 = vpop.permute.xlu0 %89
    %91 = vrot.lane.b32.xlu0 %v54, 104
    %v92 = vpop.permute.xlu0 %91
    %93 = vrot.lane.b32.xlu0 %v45, 104
    %v94 = vpop.permute.xlu0 %93
    %vm95 = vcmask 850944
    %v96 = vsel %vm95, %v88, %v90
    %v97 = vsel %vm95, %v90, %v92
    %v98 = vsel %vm95, %v92, %v94
    %103 = vrot.lane.b32.xlu0 %v44, 103
    %v104 = vpop.permute.xlu0 %103
    %105 = vrot.lane.b32.xlu0 %v49, 103
    %v106 = vpop.permute.xlu0 %105
    %107 = vrot.lane.b32.xlu0 %v45, 103
    %v108 = vpop.permute.xlu0 %107
    %109 = vrot.lane.b32.xlu0 %v50, 103
    %v110 = vpop.permute.xlu0 %109
    %vm111 = vcmask 842752
    %v112 = vsel %vm111, %v104, %v106
    %v113 = vsel %vm111, %v106, %v108
    %v114 = vsel %vm111, %v108, %v110
    %119 = vrot.lane.b32.xlu0 %v53, 102
    %v120 = vpop.permute.xlu0 %119
    %121 = vrot.lane.b32.xlu0 %v44, 102
    %v122 = vpop.permute.xlu0 %121
    %123 = vrot.lane.b32.xlu0 %v54, 102
    %v124 = vpop.permute.xlu0 %123
    %125 = vrot.lane.b32.xlu0 %v45, 102
    %v126 = vpop.permute.xlu0 %125
    %vm127 = vcmask 834560
    %v128 = vsel %vm127, %v120, %v122
    %v129 = vsel %vm127, %v122, %v124
    %v130 = vsel %vm127, %v124, %v126
    %135 = vrot.lane.b32.xlu0 %v44, 80
    %v136 = vpop.permute.xlu0 %135
    %137 = vrot.lane.b32.xlu0 %v49, 80
    %v138 = vpop.permute.xlu0 %137
    %139 = vrot.lane.b32.xlu0 %v45, 80
    %v140 = vpop.permute.xlu0 %139
    %141 = vrot.lane.b32.xlu0 %v50, 80
    %v142 = vpop.permute.xlu0 %141
    %vm143 = vcmask 654336
    %v144 = vsel %vm143, %v136, %v138
    %v145 = vsel %vm143, %v138, %v140
    %v146 = vsel %vm143, %v140, %v142
    %151 = vrot.lane.b32.xlu0 %v53, 79
    %v152 = vpop.permute.xlu0 %151
    %153 = vrot.lane.b32.xlu0 %v44, 79
    %v154 = vpop.permute.xlu0 %153
    %155 = vrot.lane.b32.xlu0 %v54, 79
    %v156 = vpop.permute.xlu0 %155
    %157 = vrot.lane.b32.xlu0 %v45, 79
    %v158 = vpop.permute.xlu0 %157
    %vm159 = vcmask 646144
    %v160 = vsel %vm159, %v152, %v154
    %v161 = vsel %vm159, %v154, %v156
    %v162 = vsel %vm159, %v156, %v158
    %167 = vrot.lane.b32.xlu0 %v44, 78
    %v168 = vpop.permute.xlu0 %167
    %169 = vrot.lane.b32.xlu0 %v49, 78
    %v170 = vpop.permute.xlu0 %169
    %171 = vrot.lane.b32.xlu0 %v45, 78
    %v172 = vpop.permute.xlu0 %171
    %173 = vrot.lane.b32.xlu0 %v50, 78
    %v174 = vpop.permute.xlu0 %173
    %vm175 = vcmask 637952
    %v176 = vsel %vm175, %v168, %v170
    %v177 = vsel %vm175, %v170, %v172
    %v178 = vsel %vm175, %v172, %v174
    %vm179 = vcmask 1043456
    %v180 = vsel %vm179, %v44, %v64
    %v181 = vsel %vm179, %v49, %v65
    %v182 = vsel %vm179, %v45, %v66
    %v183 = vsel %vm179, %v50, %v62
    %v184 = vsel %vm179, %v80, %v96
    %v185 = vsel %vm179, %v81, %v97
    %v186 = vsel %vm179, %v82, %v98
    %v187 = vsel %vm179, %v78, %v94
    %v188 = vsel %vm179, %v112, %v128
    %v189 = vsel %vm179, %v113, %v129
    %v190 = vsel %vm179, %v114, %v130
    %v191 = vsel %vm179, %v110, %v126
    %v192 = vsel %vm179, %v144, %v160
    %v193 = vsel %vm179, %v145, %v161
    %v194 = vsel %vm179, %v146, %v162
    %v195 = vsel %vm179, %v142, %v158
    %v196 = vld [vmem:[%s1] sm:$0xff]
    %213 = vrot.lane.b32.xlu0 %v180, 53
    %v214 = vpop.permute.xlu0 %213
    %215 = vrot.lane.b32.xlu0 %v181, 53
    %v216 = vpop.permute.xlu0 %215
    %217 = vrot.lane.b32.xlu0 %v182, 53
    %v218 = vpop.permute.xlu0 %217
    %219 = vrot.lane.b32.xlu0 %v183, 53
    %v220 = vpop.permute.xlu0 %219
    %221 = vrot.lane.b32.xlu0 %v184, 53
    %v222 = vpop.permute.xlu0 %221
    %223 = vrot.lane.b32.xlu0 %v185, 53
    %v224 = vpop.permute.xlu0 %223
    %225 = vrot.lane.b32.xlu0 %v186, 53
    %v226 = vpop.permute.xlu0 %225
    %227 = vrot.lane.b32.xlu0 %v187, 53
    %v228 = vpop.permute.xlu0 %227
    %229 = vrot.lane.b32.xlu0 %v188, 53
    %v230 = vpop.permute.xlu0 %229
    %231 = vrot.lane.b32.xlu0 %v189, 53
    %v232 = vpop.permute.xlu0 %231
    %233 = vrot.lane.b32.xlu0 %v190, 53
    %v234 = vpop.permute.xlu0 %233
    %235 = vrot.lane.b32.xlu0 %v191, 53
    %v236 = vpop.permute.xlu0 %235
    %237 = vrot.lane.b32.xlu0 %v192, 53
    %v238 = vpop.permute.xlu0 %237
    %239 = vrot.lane.b32.xlu0 %v193, 53
    %v240 = vpop.permute.xlu0 %239
    %241 = vrot.lane.b32.xlu0 %v194, 53
    %v242 = vpop.permute.xlu0 %241
    %243 = vrot.lane.b32.xlu0 %v195, 53
    %v244 = vpop.permute.xlu0 %243
    %245 = vrot.lane.b32.xlu0 %v176, 53
    %v246 = vpop.permute.xlu0 %245
    %247 = vrot.lane.b32.xlu0 %v177, 53
    %v248 = vpop.permute.xlu0 %247
    %249 = vrot.lane.b32.xlu0 %v178, 53
    %v250 = vpop.permute.xlu0 %249
    %251 = vrot.lane.b32.xlu0 %v174, 53
    %v252 = vpop.permute.xlu0 %251
    %vm253 = vcmask 433152
    %v254 = vsel %vm253, %v214, %v216
    %v255 = vsel %vm253, %v216, %v218
    %v256 = vsel %vm253, %v218, %v220
    %v257 = vsel %vm253, %v222, %v224
    %v258 = vsel %vm253, %v224, %v226
    %v259 = vsel %vm253, %v226, %v228
    %v260 = vsel %vm253, %v230, %v232
    %v261 = vsel %vm253, %v232, %v234
    %v262 = vsel %vm253, %v234, %v236
    %v263 = vsel %vm253, %v238, %v240
    %v264 = vsel %vm253, %v240, %v242
    %v265 = vsel %vm253, %v242, %v244
    %v266 = vsel %vm253, %v246, %v248
    %v267 = vsel %vm253, %v248, %v250
    %v268 = vsel %vm253, %v250, %v252
    %vm281 = vcmask 293888
    %v283 = vsel %vm281, %v196, 0
    %v285 = vsel %vm179, %v266, 0
    %v287 = vsel %vm179, %v267, 0
    %v289 = vsel %vm179, %v268, 0
    %291 = vmatprep.subr.mxu0 0.0
    %292 = vmatpush1.msra.mxu0 0.0
    %293 = vmatprep.subr.mxu0 0.0
    %294 = vmatpush1.msra.mxu0 0.0
    %295 = vmatprep.subr.mxu0 0.0
    %296 = vmatpush1.msra.mxu0 0.0
    %297 = vmatprep.subr.mxu0 0.0
    %298 = vmatpush1.msra.mxu0 0.0
    %299 = vmatprep.subr.mxu0 0.0
    %300 = vmatpush1.msra.mxu0 0.0
    %301 = vmatprep.subr.mxu0 0.0
    %302 = vmatpush1.msra.mxu0 0.0
    %303 = vmatprep.subr.mxu0 0.0
    %304 = vmatpush1.msra.mxu0 0.0
    %305 = vmatprep.subr.mxu0 0.0
    %306 = vmatpush1.msra.mxu0 0.0
    %307 = vmatprep.subr.mxu0 0.0
    %308 = vmatpush1.msra.mxu0 0.0
    %309 = vmatprep.subr.mxu0 0.0
    %310 = vmatpush1.msra.mxu0 0.0
    %311 = vmatprep.subr.mxu0 0.0
    %312 = vmatpush1.msra.mxu0 0.0
    %313 = vmatprep.subr.mxu0 %v287
    %314 = vmatpush1.msra.mxu0 %v285
    %315 = vmatprep.subr.mxu0 %v264
    %316 = vmatpush1.msra.mxu0 %v263
    %317 = vmatprep.subr.mxu0 %v261
    %318 = vmatpush1.msra.mxu0 %v260
    %319 = vmatprep.subr.mxu0 %v258
    %320 = vmatpush1.msra.mxu0 %v257
    %321 = vmatprep.subr.mxu0 %v255
    %322 = vmatpush1.msra.mxu0 %v254
    %323 = vmatprep.subr.mxu0 0.0
    %324 = vmatpush2.msra.mxu0 0.0
    %325 = vmatprep.subr.mxu0 0.0
    %326 = vmatpush2.msra.mxu0 0.0
    %327 = vmatprep.subr.mxu0 0.0
    %328 = vmatpush2.msra.mxu0 0.0
    %329 = vmatprep.subr.mxu0 0.0
    %330 = vmatpush2.msra.mxu0 0.0
    %331 = vmatprep.subr.mxu0 0.0
    %332 = vmatpush2.msra.mxu0 0.0
    %333 = vmatprep.subr.mxu0 0.0
    %334 = vmatpush2.msra.mxu0 0.0
    %335 = vmatprep.subr.mxu0 0.0
    %336 = vmatpush2.msra.mxu0 0.0
    %337 = vmatprep.subr.mxu0 0.0
    %338 = vmatpush2.msra.mxu0 0.0
    %339 = vmatprep.subr.mxu0 0.0
    %340 = vmatpush2.msra.mxu0 0.0
    %341 = vmatprep.subr.mxu0 0.0
    %342 = vmatpush2.msra.mxu0 0.0
    %343 = vmatprep.subr.mxu0 0.0
    %344 = vmatpush2.msra.mxu0 0.0
    %345 = vmatprep.subr.mxu0 0.0
    %346 = vmatpush2.msra.mxu0 0.0
    %347 = vmatprep.subr.mxu0 0.0
    %348 = vmatpush2.msra.mxu0 0.0
    %349 = vmatprep.subr.mxu0 0.0
    %350 = vmatpush2.msra.mxu0 0.0
    %351 = vmatprep.subr.mxu0 0.0
    %352 = vmatpush2.msra.mxu0 0.0
    %353 = vmatprep.subr.mxu0 0.0
    %354 = vmatpush2.msra.mxu0 0.0
    %355 = vmatprep.mubr.f32.mxu0 0.0
    %356 = vmatmul.mubr.f32.gmra.mxu0 %v283
    %v357 = vpop.f32.mrf.mxu0
    %v358 = vadd.f32 0.0, %v357
    %v359 = vpop.f32.mrf.mxu0
    %v360 = vadd.f32 0.0, %v359
    %361 = vdwg.mxu0
    %362 = vmatprep.subr.mxu0 0.0
    %363 = vmatpush1.msra.mxu0 0.0
    %364 = vmatprep.subr.mxu0 0.0
    %365 = vmatpush1.msra.mxu0 0.0
    %366 = vmatprep.subr.mxu0 0.0
    %367 = vmatpush1.msra.mxu0 0.0
    %368 = vmatprep.subr.mxu0 0.0
    %369 = vmatpush1.msra.mxu0 0.0
    %370 = vmatprep.subr.mxu0 0.0
    %371 = vmatpush1.msra.mxu0 0.0
    %372 = vmatprep.subr.mxu0 0.0
    %373 = vmatpush1.msra.mxu0 0.0
    %374 = vmatprep.subr.mxu0 0.0
    %375 = vmatpush1.msra.mxu0 0.0
    %376 = vmatprep.subr.mxu0 0.0
    %377 = vmatpush1.msra.mxu0 0.0
    %378 = vmatprep.subr.mxu0 0.0
    %379 = vmatpush1.msra.mxu0 0.0
    %380 = vmatprep.subr.mxu0 0.0
    %381 = vmatpush1.msra.mxu0 0.0
    %382 = vmatprep.subr.mxu0 0.0
    %383 = vmatpush1.msra.mxu0 0.0
    %384 = vmatprep.subr.mxu0 0.0
    %385 = vmatpush1.msra.mxu0 %v289
    %386 = vmatprep.subr.mxu0 0.0
    %387 = vmatpush1.msra.mxu0 %v265
    %388 = vmatprep.subr.mxu0 0.0
    %389 = vmatpush1.msra.mxu0 %v262
    %390 = vmatprep.subr.mxu0 0.0
    %391 = vmatpush1.msra.mxu0 %v259
    %392 = vmatprep.subr.mxu0 0.0
    %393 = vmatpush1.msra.mxu0 %v256
    %394 = vmatprep.subr.mxu0 0.0
    %395 = vmatpush2.msra.mxu0 0.0
    %396 = vmatprep.subr.mxu0 0.0
    %397 = vmatpush2.msra.mxu0 0.0
    %398 = vmatprep.subr.mxu0 0.0
    %399 = vmatpush2.msra.mxu0 0.0
    %400 = vmatprep.subr.mxu0 0.0
    %401 = vmatpush2.msra.mxu0 0.0
    %402 = vmatprep.subr.mxu0 0.0
    %403 = vmatpush2.msra.mxu0 0.0
    %404 = vmatprep.subr.mxu0 0.0
    %405 = vmatpush2.msra.mxu0 0.0
    %406 = vmatprep.subr.mxu0 0.0
    %407 = vmatpush2.msra.mxu0 0.0
    %408 = vmatprep.subr.mxu0 0.0
    %409 = vmatpush2.msra.mxu0 0.0
    %410 = vmatprep.subr.mxu0 0.0
    %411 = vmatpush2.msra.mxu0 0.0
    %412 = vmatprep.subr.mxu0 0.0
    %413 = vmatpush2.msra.mxu0 0.0
    %414 = vmatprep.subr.mxu0 0.0
    %415 = vmatpush2.msra.mxu0 0.0
    %416 = vmatprep.subr.mxu0 0.0
    %417 = vmatpush2.msra.mxu0 0.0
    %418 = vmatprep.subr.mxu0 0.0
    %419 = vmatpush2.msra.mxu0 0.0
    %420 = vmatprep.subr.mxu0 0.0
    %421 = vmatpush2.msra.mxu0 0.0
    %422 = vmatprep.subr.mxu0 0.0
    %423 = vmatpush2.msra.mxu0 0.0
    %424 = vmatprep.subr.mxu0 0.0
    %425 = vmatpush2.msra.mxu0 0.0
    %426 = vmatprep.mubr.f32.mxu0 0.0
    %427 = vmatmul.mubr.f32.gmra.mxu0 %v283
    %v428 = vpop.f32.mrf.mxu0
    %v429 = vadd.f32 0.0, %v428
    %v430 = vpop.f32.mrf.mxu0
    %431 = vdwg.mxu0
    %432 = vrot.lane.b32.xlu0 %v53, 126
    %v433 = vpop.permute.xlu0 %432
    %434 = vrot.lane.b32.xlu0 %v54, 126
    %v435 = vpop.permute.xlu0 %434
    %v436 = vsel %vm79, %v433, %v72
    %v437 = vsel %vm79, %v72, %v435
    %v438 = vsel %vm79, %v435, %v76
    %443 = vrot.lane.b32.xlu0 %v44, 124
    %v444 = vpop.permute.xlu0 %443
    %445 = vrot.lane.b32.xlu0 %v49, 124
    %v446 = vpop.permute.xlu0 %445
    %447 = vrot.lane.b32.xlu0 %v45, 124
    %v448 = vpop.permute.xlu0 %447
    %449 = vrot.lane.b32.xlu0 %v50, 124
    %v450 = vpop.permute.xlu0 %449
    %vm451 = vcmask 1014784
    %v452 = vsel %vm451, %v444, %v446
    %v453 = vsel %vm451, %v446, %v448
    %v454 = vsel %vm451, %v448, %v450
    %459 = vrot.lane.b32.xlu0 %v53, 80
    %v460 = vpop.permute.xlu0 %459
    %461 = vrot.lane.b32.xlu0 %v54, 80
    %v462 = vpop.permute.xlu0 %461
    %v463 = vsel %vm143, %v460, %v136
    %v464 = vsel %vm143, %v136, %v462
    %v465 = vsel %vm143, %v462, %v140
    %474 = vrot.lane.b32.xlu0 %v53, 76
    %v475 = vpop.permute.xlu0 %474
    %476 = vrot.lane.b32.xlu0 %v44, 76
    %v477 = vpop.permute.xlu0 %476
    %478 = vrot.lane.b32.xlu0 %v54, 76
    %v479 = vpop.permute.xlu0 %478
    %480 = vrot.lane.b32.xlu0 %v45, 76
    %v481 = vpop.permute.xlu0 %480
    %vm482 = vcmask 621568
    %v483 = vsel %vm482, %v475, %v477
    %v484 = vsel %vm482, %v477, %v479
    %v485 = vsel %vm482, %v479, %v481
    %491 = vrot.lane.b32.xlu0 %v49, 32
    %v492 = vpop.permute.xlu0 %491
    %493 = vrot.lane.b32.xlu0 %v45, 32
    %v494 = vpop.permute.xlu0 %493
    %495 = vrot.lane.b32.xlu0 %v50, 32
    %v496 = vpop.permute.xlu0 %495
    %497 = vrot.lane.b32.xlu0 %v46, 32
    %v498 = vpop.permute.xlu0 %497
    %vm499 = vcmask 261120
    %v500 = vsel %vm499, %v492, %v494
    %v501 = vsel %vm499, %v494, %v496
    %v502 = vsel %vm499, %v496, %v498
    %v507 = vcombine.low %v46, %v46
    %508 = vrot.lane.b32.xlu0 %v44, 30
    %v509 = vpop.permute.xlu0 %508
    %510 = vrot.lane.b32.xlu0 %v54, 30
    %v511 = vpop.permute.xlu0 %510
    %512 = vrot.lane.b32.xlu0 %v45, 30
    %v513 = vpop.permute.xlu0 %512
    %514 = vrot.lane.b32.xlu0 %v507, 30
    %v515 = vpop.permute.xlu0 %514
    %vm516 = vcmask 244736
    %v517 = vsel %vm516, %v509, %v511
    %v518 = vsel %vm516, %v511, %v513
    %v519 = vsel %vm516, %v513, %v515
    %524 = vrot.lane.b32.xlu0 %v49, 28
    %v525 = vpop.permute.xlu0 %524
    %526 = vrot.lane.b32.xlu0 %v45, 28
    %v527 = vpop.permute.xlu0 %526
    %528 = vrot.lane.b32.xlu0 %v50, 28
    %v529 = vpop.permute.xlu0 %528
    %530 = vrot.lane.b32.xlu0 %v46, 28
    %v531 = vpop.permute.xlu0 %530
    %vm532 = vcmask 228352
    %v533 = vsel %vm532, %v525, %v527
    %v534 = vsel %vm532, %v527, %v529
    %v535 = vsel %vm532, %v529, %v531
    %v536 = vsel %vm179, %v44, %v436
    %v537 = vsel %vm179, %v49, %v437
    %v538 = vsel %vm179, %v45, %v438
    %v539 = vsel %vm179, %v50, %v76
    %v540 = vsel %vm179, %v452, %v463
    %v541 = vsel %vm179, %v453, %v464
    %v542 = vsel %vm179, %v454, %v465
    %v543 = vsel %vm179, %v450, %v140
    %v544 = vsel %vm179, %v176, %v483
    %v545 = vsel %vm179, %v177, %v484
    %v546 = vsel %vm179, %v178, %v485
    %v547 = vsel %vm179, %v174, %v481
    %v548 = vsel %vm179, %v492, %v509
    %v549 = vsel %vm179, %v500, %v517
    %v550 = vsel %vm179, %v501, %v518
    %v551 = vsel %vm179, %v502, %v519
    %v552 = vld [vmem:[%s2] sm:$0xff]
    %553 = vrot.lane.b32.xlu0 %v53, 125
    %v554 = vpop.permute.xlu0 %553
    %555 = vrot.lane.b32.xlu0 %v44, 125
    %v556 = vpop.permute.xlu0 %555
    %557 = vrot.lane.b32.xlu0 %v54, 125
    %v558 = vpop.permute.xlu0 %557
    %559 = vrot.lane.b32.xlu0 %v45, 125
    %v560 = vpop.permute.xlu0 %559
    %vm561 = vcmask 1022976
    %v562 = vsel %vm561, %v554, %v556
    %v563 = vsel %vm561, %v556, %v558
    %v564 = vsel %vm561, %v558, %v560
    %569 = vrot.lane.b32.xlu0 %v44, 122
    %v570 = vpop.permute.xlu0 %569
    %571 = vrot.lane.b32.xlu0 %v49, 122
    %v572 = vpop.permute.xlu0 %571
    %573 = vrot.lane.b32.xlu0 %v45, 122
    %v574 = vpop.permute.xlu0 %573
    %575 = vrot.lane.b32.xlu0 %v50, 122
    %v576 = vpop.permute.xlu0 %575
    %vm577 = vcmask 998400
    %v578 = vsel %vm577, %v570, %v572
    %v579 = vsel %vm577, %v572, %v574
    %v580 = vsel %vm577, %v574, %v576
    %585 = vrot.lane.b32.xlu0 %v53, 56
    %v586 = vpop.permute.xlu0 %585
    %587 = vrot.lane.b32.xlu0 %v44, 56
    %v588 = vpop.permute.xlu0 %587
    %589 = vrot.lane.b32.xlu0 %v54, 56
    %v590 = vpop.permute.xlu0 %589
    %591 = vrot.lane.b32.xlu0 %v45, 56
    %v592 = vpop.permute.xlu0 %591
    %vm593 = vcmask 457728
    %v594 = vsel %vm593, %v586, %v588
    %v595 = vsel %vm593, %v588, %v590
    %v596 = vsel %vm593, %v590, %v592
    %601 = vrot.lane.b32.xlu0 %v44, 53
    %v602 = vpop.permute.xlu0 %601
    %603 = vrot.lane.b32.xlu0 %v49, 53
    %v604 = vpop.permute.xlu0 %603
    %605 = vrot.lane.b32.xlu0 %v45, 53
    %v606 = vpop.permute.xlu0 %605
    %607 = vrot.lane.b32.xlu0 %v50, 53
    %v608 = vpop.permute.xlu0 %607
    %v609 = vsel %vm253, %v602, %v604
    %v610 = vsel %vm253, %v604, %v606
    %v611 = vsel %vm253, %v606, %v608
    %616 = vrot.lane.b32.xlu0 %v53, 50
    %v617 = vpop.permute.xlu0 %616
    %618 = vrot.lane.b32.xlu0 %v44, 50
    %v619 = vpop.permute.xlu0 %618
    %620 = vrot.lane.b32.xlu0 %v54, 50
    %v621 = vpop.permute.xlu0 %620
    %622 = vrot.lane.b32.xlu0 %v45, 50
    %v623 = vpop.permute.xlu0 %622
    %vm624 = vcmask 408576
    %v625 = vsel %vm624, %v617, %v619
    %v626 = vsel %vm624, %v619, %v621
    %v627 = vsel %vm624, %v621, %v623
    %632 = vrot.lane.b32.xlu0 %v49, 112
    %v633 = vpop.permute.xlu0 %632
    %634 = vrot.lane.b32.xlu0 %v45, 112
    %v635 = vpop.permute.xlu0 %634
    %636 = vrot.lane.b32.xlu0 %v50, 112
    %v637 = vpop.permute.xlu0 %636
    %638 = vrot.lane.b32.xlu0 %v46, 112
    %v639 = vpop.permute.xlu0 %638
    %vm640 = vcmask 916480
    %v641 = vsel %vm640, %v633, %v635
    %v642 = vsel %vm640, %v635, %v637
    %v643 = vsel %vm640, %v637, %v639
    %648 = vrot.lane.b32.xlu0 %v44, 109
    %v649 = vpop.permute.xlu0 %648
    %650 = vrot.lane.b32.xlu0 %v54, 109
    %v651 = vpop.permute.xlu0 %650
    %652 = vrot.lane.b32.xlu0 %v45, 109
    %v653 = vpop.permute.xlu0 %652
    %654 = vrot.lane.b32.xlu0 %v507, 109
    %v655 = vpop.permute.xlu0 %654
    %vm656 = vcmask 891904
    %v657 = vsel %vm656, %v649, %v651
    %v658 = vsel %vm656, %v651, %v653
    %v659 = vsel %vm656, %v653, %v655
    %664 = vrot.lane.b32.xlu0 %v49, 106
    %v665 = vpop.permute.xlu0 %664
    %666 = vrot.lane.b32.xlu0 %v45, 106
    %v667 = vpop.permute.xlu0 %666
    %668 = vrot.lane.b32.xlu0 %v50, 106
    %v669 = vpop.permute.xlu0 %668
    %670 = vrot.lane.b32.xlu0 %v46, 106
    %v671 = vpop.permute.xlu0 %670
    %vm672 = vcmask 867328
    %v673 = vsel %vm672, %v665, %v667
    %v674 = vsel %vm672, %v667, %v669
    %v675 = vsel %vm672, %v669, %v671
    %v676 = vsel %vm179, %v44, %v562
    %v677 = vsel %vm179, %v49, %v563
    %v678 = vsel %vm179, %v45, %v564
    %v679 = vsel %vm179, %v50, %v560
    %v680 = vsel %vm179, %v578, %v594
    %v681 = vsel %vm179, %v579, %v595
    %v682 = vsel %vm179, %v580, %v596
    %v683 = vsel %vm179, %v576, %v592
    %v684 = vsel %vm179, %v609, %v625
    %v685 = vsel %vm179, %v610, %v626
    %v686 = vsel %vm179, %v611, %v627
    %v687 = vsel %vm179, %v608, %v623
    %v688 = vsel %vm179, %v641, %v657
    %v689 = vsel %vm179, %v642, %v658
    %v690 = vsel %vm179, %v643, %v659
    %v691 = vsel %vm179, %v639, %v655
    %v692 = vld [vmem:[%s3] sm:$0xff]
    %709 = vrot.lane.b32.xlu0 %v676, 103
    %v710 = vpop.permute.xlu0 %709
    %711 = vrot.lane.b32.xlu0 %v677, 103
    %v712 = vpop.permute.xlu0 %711
    %713 = vrot.lane.b32.xlu0 %v678, 103
    %v714 = vpop.permute.xlu0 %713
    %715 = vrot.lane.b32.xlu0 %v679, 103
    %v716 = vpop.permute.xlu0 %715
    %717 = vrot.lane.b32.xlu0 %v680, 103
    %v718 = vpop.permute.xlu0 %717
    %719 = vrot.lane.b32.xlu0 %v681, 103
    %v720 = vpop.permute.xlu0 %719
    %721 = vrot.lane.b32.xlu0 %v682, 103
    %v722 = vpop.permute.xlu0 %721
    %723 = vrot.lane.b32.xlu0 %v683, 103
    %v724 = vpop.permute.xlu0 %723
    %725 = vrot.lane.b32.xlu0 %v684, 103
    %v726 = vpop.permute.xlu0 %725
    %727 = vrot.lane.b32.xlu0 %v685, 103
    %v728 = vpop.permute.xlu0 %727
    %729 = vrot.lane.b32.xlu0 %v686, 103
    %v730 = vpop.permute.xlu0 %729
    %731 = vrot.lane.b32.xlu0 %v687, 103
    %v732 = vpop.permute.xlu0 %731
    %733 = vrot.lane.b32.xlu0 %v688, 103
    %v734 = vpop.permute.xlu0 %733
    %735 = vrot.lane.b32.xlu0 %v689, 103
    %v736 = vpop.permute.xlu0 %735
    %737 = vrot.lane.b32.xlu0 %v690, 103
    %v738 = vpop.permute.xlu0 %737
    %739 = vrot.lane.b32.xlu0 %v691, 103
    %v740 = vpop.permute.xlu0 %739
    %741 = vrot.lane.b32.xlu0 %v673, 103
    %v742 = vpop.permute.xlu0 %741
    %743 = vrot.lane.b32.xlu0 %v674, 103
    %v744 = vpop.permute.xlu0 %743
    %745 = vrot.lane.b32.xlu0 %v675, 103
    %v746 = vpop.permute.xlu0 %745
    %747 = vrot.lane.b32.xlu0 %v671, 103
    %v748 = vpop.permute.xlu0 %747
    %v749 = vsel %vm111, %v710, %v712
    %v750 = vsel %vm111, %v712, %v714
    %v751 = vsel %vm111, %v714, %v716
    %v752 = vsel %vm111, %v718, %v720
    %v753 = vsel %vm111, %v720, %v722
    %v754 = vsel %vm111, %v722, %v724
    %v755 = vsel %vm111, %v726, %v728
    %v756 = vsel %vm111, %v728, %v730
    %v757 = vsel %vm111, %v730, %v732
    %v758 = vsel %vm111, %v734, %v736
    %v759 = vsel %vm111, %v736, %v738
    %v760 = vsel %vm111, %v738, %v740
    %v761 = vsel %vm111, %v742, %v744
    %v762 = vsel %vm111, %v744, %v746
    %v763 = vsel %vm111, %v746, %v748
    %v777 = vsel %vm281, %v692, 0
    %v779 = vsel %vm179, %v761, 0
    %v781 = vsel %vm179, %v762, 0
    %v783 = vsel %vm179, %v763, 0
    %785 = vmatprep.subr.mxu0 0.0
    %786 = vmatpush1.msra.mxu0 0.0
    %787 = vmatprep.subr.mxu0 0.0
    %788 = vmatpush1.msra.mxu0 0.0
    %789 = vmatprep.subr.mxu0 0.0
    %790 = vmatpush1.msra.mxu0 0.0
    %791 = vmatprep.subr.mxu0 0.0
    %792 = vmatpush1.msra.mxu0 0.0
    %793 = vmatprep.subr.mxu0 0.0
    %794 = vmatpush1.msra.mxu0 0.0
    %795 = vmatprep.subr.mxu0 0.0
    %796 = vmatpush1.msra.mxu0 0.0
    %797 = vmatprep.subr.mxu0 0.0
    %798 = vmatpush1.msra.mxu0 0.0
    %799 = vmatprep.subr.mxu0 0.0
    %800 = vmatpush1.msra.mxu0 0.0
    %801 = vmatprep.subr.mxu0 0.0
    %802 = vmatpush1.msra.mxu0 0.0
    %803 = vmatprep.subr.mxu0 0.0
    %804 = vmatpush1.msra.mxu0 0.0
    %805 = vmatprep.subr.mxu0 0.0
    %806 = vmatpush1.msra.mxu0 0.0
    %807 = vmatprep.subr.mxu0 %v781
    %808 = vmatpush1.msra.mxu0 %v779
    %809 = vmatprep.subr.mxu0 %v759
    %810 = vmatpush1.msra.mxu0 %v758
    %811 = vmatprep.subr.mxu0 %v756
    %812 = vmatpush1.msra.mxu0 %v755
    %813 = vmatprep.subr.mxu0 %v753
    %814 = vmatpush1.msra.mxu0 %v752
    %815 = vmatprep.subr.mxu0 %v750
    %816 = vmatpush1.msra.mxu0 %v749
    %817 = vmatprep.subr.mxu0 0.0
    %818 = vmatpush2.msra.mxu0 0.0
    %819 = vmatprep.subr.mxu0 0.0
    %820 = vmatpush2.msra.mxu0 0.0
    %821 = vmatprep.subr.mxu0 0.0
    %822 = vmatpush2.msra.mxu0 0.0
    %823 = vmatprep.subr.mxu0 0.0
    %824 = vmatpush2.msra.mxu0 0.0
    %825 = vmatprep.subr.mxu0 0.0
    %826 = vmatpush2.msra.mxu0 0.0
    %827 = vmatprep.subr.mxu0 0.0
    %828 = vmatpush2.msra.mxu0 0.0
    %829 = vmatprep.subr.mxu0 0.0
    %830 = vmatpush2.msra.mxu0 0.0
    %831 = vmatprep.subr.mxu0 0.0
    %832 = vmatpush2.msra.mxu0 0.0
    %833 = vmatprep.subr.mxu0 0.0
    %834 = vmatpush2.msra.mxu0 0.0
    %835 = vmatprep.subr.mxu0 0.0
    %836 = vmatpush2.msra.mxu0 0.0
    %837 = vmatprep.subr.mxu0 0.0
    %838 = vmatpush2.msra.mxu0 0.0
    %839 = vmatprep.subr.mxu0 0.0
    %840 = vmatpush2.msra.mxu0 0.0
    %841 = vmatprep.subr.mxu0 0.0
    %842 = vmatpush2.msra.mxu0 0.0
    %843 = vmatprep.subr.mxu0 0.0
    %844 = vmatpush2.msra.mxu0 0.0
    %845 = vmatprep.subr.mxu0 0.0
    %846 = vmatpush2.msra.mxu0 0.0
    %847 = vmatprep.subr.mxu0 0.0
    %848 = vmatpush2.msra.mxu0 0.0
    %849 = vmatprep.mubr.f32.mxu0 0.0
    %850 = vmatmul.mubr.f32.gmra.mxu0 %v777
    %v851 = vpop.f32.mrf.mxu0
    %v852 = vadd.f32 0.0, %v851
    %v853 = vpop.f32.mrf.mxu0
    %v854 = vadd.f32 0.0, %v853
    %855 = vdwg.mxu0
    %856 = vmatprep.subr.mxu0 0.0
    %857 = vmatpush1.msra.mxu0 0.0
    %858 = vmatprep.subr.mxu0 0.0
    %859 = vmatpush1.msra.mxu0 0.0
    %860 = vmatprep.subr.mxu0 0.0
    %861 = vmatpush1.msra.mxu0 0.0
    %862 = vmatprep.subr.mxu0 0.0
    %863 = vmatpush1.msra.mxu0 0.0
    %864 = vmatprep.subr.mxu0 0.0
    %865 = vmatpush1.msra.mxu0 0.0
    %866 = vmatprep.subr.mxu0 0.0
    %867 = vmatpush1.msra.mxu0 0.0
    %868 = vmatprep.subr.mxu0 0.0
    %869 = vmatpush1.msra.mxu0 0.0
    %870 = vmatprep.subr.mxu0 0.0
    %871 = vmatpush1.msra.mxu0 0.0
    %872 = vmatprep.subr.mxu0 0.0
    %873 = vmatpush1.msra.mxu0 0.0
    %874 = vmatprep.subr.mxu0 0.0
    %875 = vmatpush1.msra.mxu0 0.0
    %876 = vmatprep.subr.mxu0 0.0
    %877 = vmatpush1.msra.mxu0 0.0
    %878 = vmatprep.subr.mxu0 0.0
    %879 = vmatpush1.msra.mxu0 %v783
    %880 = vmatprep.subr.mxu0 0.0
    %881 = vmatpush1.msra.mxu0 %v760
    %882 = vmatprep.subr.mxu0 0.0
    %883 = vmatpush1.msra.mxu0 %v757
    %884 = vmatprep.subr.mxu0 0.0
    %885 = vmatpush1.msra.mxu0 %v754
    %886 = vmatprep.subr.mxu0 0.0
    %887 = vmatpush1.msra.mxu0 %v751
    %888 = vmatprep.subr.mxu0 0.0
    %889 = vmatpush2.msra.mxu0 0.0
    %890 = vmatprep.subr.mxu0 0.0
    %891 = vmatpush2.msra.mxu0 0.0
    %892 = vmatprep.subr.mxu0 0.0
    %893 = vmatpush2.msra.mxu0 0.0
    %894 = vmatprep.subr.mxu0 0.0
    %895 = vmatpush2.msra.mxu0 0.0
    %896 = vmatprep.subr.mxu0 0.0
    %897 = vmatpush2.msra.mxu0 0.0
    %898 = vmatprep.subr.mxu0 0.0
    %899 = vmatpush2.msra.mxu0 0.0
    %900 = vmatprep.subr.mxu0 0.0
    %901 = vmatpush2.msra.mxu0 0.0
    %902 = vmatprep.subr.mxu0 0.0
    %903 = vmatpush2.msra.mxu0 0.0
    %904 = vmatprep.subr.mxu0 0.0
    %905 = vmatpush2.msra.mxu0 0.0
    %906 = vmatprep.subr.mxu0 0.0
    %907 = vmatpush2.msra.mxu0 0.0
    %908 = vmatprep.subr.mxu0 0.0
    %909 = vmatpush2.msra.mxu0 0.0
    %910 = vmatprep.subr.mxu0 0.0
    %911 = vmatpush2.msra.mxu0 0.0
    %912 = vmatprep.subr.mxu0 0.0
    %913 = vmatpush2.msra.mxu0 0.0
    %914 = vmatprep.subr.mxu0 0.0
    %915 = vmatpush2.msra.mxu0 0.0
    %916 = vmatprep.subr.mxu0 0.0
    %917 = vmatpush2.msra.mxu0 0.0
    %918 = vmatprep.subr.mxu0 0.0
    %919 = vmatpush2.msra.mxu0 0.0
    %920 = vmatprep.mubr.f32.mxu0 0.0
    %921 = vmatmul.mubr.f32.gmra.mxu0 %v777
    %v922 = vpop.f32.mrf.mxu0
    %v923 = vadd.f32 0.0, %v922
    %v924 = vpop.f32.mrf.mxu0
    %925 = vdwg.mxu0
    %942 = vrot.lane.b32.xlu0 %v536, 78
    %v943 = vpop.permute.xlu0 %942
    %944 = vrot.lane.b32.xlu0 %v537, 78
    %v945 = vpop.permute.xlu0 %944
    %946 = vrot.lane.b32.xlu0 %v538, 78
    %v947 = vpop.permute.xlu0 %946
    %948 = vrot.lane.b32.xlu0 %v539, 78
    %v949 = vpop.permute.xlu0 %948
    %950 = vrot.lane.b32.xlu0 %v540, 78
    %v951 = vpop.permute.xlu0 %950
    %952 = vrot.lane.b32.xlu0 %v541, 78
    %v953 = vpop.permute.xlu0 %952
    %954 = vrot.lane.b32.xlu0 %v542, 78
    %v955 = vpop.permute.xlu0 %954
    %956 = vrot.lane.b32.xlu0 %v543, 78
    %v957 = vpop.permute.xlu0 %956
    %958 = vrot.lane.b32.xlu0 %v544, 78
    %v959 = vpop.permute.xlu0 %958
    %960 = vrot.lane.b32.xlu0 %v545, 78
    %v961 = vpop.permute.xlu0 %960
    %962 = vrot.lane.b32.xlu0 %v546, 78
    %v963 = vpop.permute.xlu0 %962
    %964 = vrot.lane.b32.xlu0 %v547, 78
    %v965 = vpop.permute.xlu0 %964
    %966 = vrot.lane.b32.xlu0 %v548, 78
    %v967 = vpop.permute.xlu0 %966
    %968 = vrot.lane.b32.xlu0 %v549, 78
    %v969 = vpop.permute.xlu0 %968
    %970 = vrot.lane.b32.xlu0 %v550, 78
    %v971 = vpop.permute.xlu0 %970
    %972 = vrot.lane.b32.xlu0 %v551, 78
    %v973 = vpop.permute.xlu0 %972
    %974 = vrot.lane.b32.xlu0 %v525, 78
    %v975 = vpop.permute.xlu0 %974
    %976 = vrot.lane.b32.xlu0 %v533, 78
    %v977 = vpop.permute.xlu0 %976
    %978 = vrot.lane.b32.xlu0 %v534, 78
    %v979 = vpop.permute.xlu0 %978
    %980 = vrot.lane.b32.xlu0 %v535, 78
    %v981 = vpop.permute.xlu0 %980
    %v982 = vsel %vm175, %v943, %v945
    %v983 = vsel %vm175, %v945, %v947
    %v984 = vsel %vm175, %v947, %v949
    %v985 = vsel %vm175, %v951, %v953
    %v986 = vsel %vm175, %v953, %v955
    %v987 = vsel %vm175, %v955, %v957
    %v988 = vsel %vm175, %v959, %v961
    %v989 = vsel %vm175, %v961, %v963
    %v990 = vsel %vm175, %v963, %v965
    %v991 = vsel %vm175, %v967, %v969
    %v992 = vsel %vm175, %v969, %v971
    %v993 = vsel %vm175, %v971, %v973
    %v994 = vsel %vm175, %v975, %v977
    %v995 = vsel %vm175, %v977, %v979
    %v996 = vsel %vm175, %v979, %v981
    %v1010 = vsel %vm281, %v552, 0
    %v1012 = vsel %vm179, %v994, 0
    %v1014 = vsel %vm179, %v995, 0
    %v1016 = vsel %vm179, %v996, 0
    %1018 = vmatprep.subr.mxu0 0.0
    %1019 = vmatpush1.msra.mxu0 0.0
    %1020 = vmatprep.subr.mxu0 0.0
    %1021 = vmatpush1.msra.mxu0 0.0
    %1022 = vmatprep.subr.mxu0 0.0
    %1023 = vmatpush1.msra.mxu0 0.0
    %1024 = vmatprep.subr.mxu0 0.0
    %1025 = vmatpush1.msra.mxu0 0.0
    %1026 = vmatprep.subr.mxu0 0.0
    %1027 = vmatpush1.msra.mxu0 0.0
    %1028 = vmatprep.subr.mxu0 0.0
    %1029 = vmatpush1.msra.mxu0 0.0
    %1030 = vmatprep.subr.mxu0 0.0
    %1031 = vmatpush1.msra.mxu0 0.0
    %1032 = vmatprep.subr.mxu0 0.0
    %1033 = vmatpush1.msra.mxu0 0.0
    %1034 = vmatprep.subr.mxu0 0.0
    %1035 = vmatpush1.msra.mxu0 0.0
    %1036 = vmatprep.subr.mxu0 0.0
    %1037 = vmatpush1.msra.mxu0 0.0
    %1038 = vmatprep.subr.mxu0 0.0
    %1039 = vmatpush1.msra.mxu0 0.0
    %1040 = vmatprep.subr.mxu0 %v1014
    %1041 = vmatpush1.msra.mxu0 %v1012
    %1042 = vmatprep.subr.mxu0 %v992
    %1043 = vmatpush1.msra.mxu0 %v991
    %1044 = vmatprep.subr.mxu0 %v989
    %1045 = vmatpush1.msra.mxu0 %v988
    %1046 = vmatprep.subr.mxu0 %v986
    %1047 = vmatpush1.msra.mxu0 %v985
    %1048 = vmatprep.subr.mxu0 %v983
    %1049 = vmatpush1.msra.mxu0 %v982
    %1050 = vmatprep.subr.mxu0 0.0
    %1051 = vmatpush2.msra.mxu0 0.0
    %1052 = vmatprep.subr.mxu0 0.0
    %1053 = vmatpush2.msra.mxu0 0.0
    %1054 = vmatprep.subr.mxu0 0.0
    %1055 = vmatpush2.msra.mxu0 0.0
    %1056 = vmatprep.subr.mxu0 0.0
    %1057 = vmatpush2.msra.mxu0 0.0
    %1058 = vmatprep.subr.mxu0 0.0
    %1059 = vmatpush2.msra.mxu0 0.0
    %1060 = vmatprep.subr.mxu0 0.0
    %1061 = vmatpush2.msra.mxu0 0.0
    %1062 = vmatprep.subr.mxu0 0.0
    %1063 = vmatpush2.msra.mxu0 0.0
    %1064 = vmatprep.subr.mxu0 0.0
    %1065 = vmatpush2.msra.mxu0 0.0
    %1066 = vmatprep.subr.mxu0 0.0
    %1067 = vmatpush2.msra.mxu0 0.0
    %1068 = vmatprep.subr.mxu0 0.0
    %1069 = vmatpush2.msra.mxu0 0.0
    %1070 = vmatprep.subr.mxu0 0.0
    %1071 = vmatpush2.msra.mxu0 0.0
    %1072 = vmatprep.subr.mxu0 0.0
    %1073 = vmatpush2.msra.mxu0 0.0
    %1074 = vmatprep.subr.mxu0 0.0
    %1075 = vmatpush2.msra.mxu0 0.0
    %1076 = vmatprep.subr.mxu0 0.0
    %1077 = vmatpush2.msra.mxu0 0.0
    %1078 = vmatprep.subr.mxu0 0.0
    %1079 = vmatpush2.msra.mxu0 0.0
    %1080 = vmatprep.subr.mxu0 0.0
    %1081 = vmatpush2.msra.mxu0 0.0
    %1082 = vmatprep.mubr.f32.mxu0 0.0
    %1083 = vmatmul.mubr.f32.gmra.mxu0 %v1010
    %v1084 = vpop.f32.mrf.mxu0
    %v1085 = vadd.f32 %v852, %v1084
    %v1086 = vpop.f32.mrf.mxu0
    %v1087 = vadd.f32 %v854, %v1086
    %1088 = vdwg.mxu0
    %1089 = vmatprep.subr.mxu0 0.0
    %1090 = vmatpush1.msra.mxu0 0.0
    %1091 = vmatprep.subr.mxu0 0.0
    %1092 = vmatpush1.msra.mxu0 0.0
    %1093 = vmatprep.subr.mxu0 0.0
    %1094 = vmatpush1.msra.mxu0 0.0
    %1095 = vmatprep.subr.mxu0 0.0
    %1096 = vmatpush1.msra.mxu0 0.0
    %1097 = vmatprep.subr.mxu0 0.0
    %1098 = vmatpush1.msra.mxu0 0.0
    %1099 = vmatprep.subr.mxu0 0.0
    %1100 = vmatpush1.msra.mxu0 0.0
    %1101 = vmatprep.subr.mxu0 0.0
    %1102 = vmatpush1.msra.mxu0 0.0
    %1103 = vmatprep.subr.mxu0 0.0
    %1104 = vmatpush1.msra.mxu0 0.0
    %1105 = vmatprep.subr.mxu0 0.0
    %1106 = vmatpush1.msra.mxu0 0.0
    %1107 = vmatprep.subr.mxu0 0.0
    %1108 = vmatpush1.msra.mxu0 0.0
    %1109 = vmatprep.subr.mxu0 0.0
    %1110 = vmatpush1.msra.mxu0 0.0
    %1111 = vmatprep.subr.mxu0 0.0
    %1112 = vmatpush1.msra.mxu0 %v1016
    %1113 = vmatprep.subr.mxu0 0.0
    %1114 = vmatpush1.msra.mxu0 %v993
    %1115 = vmatprep.subr.mxu0 0.0
    %1116 = vmatpush1.msra.mxu0 %v990
    %1117 = vmatprep.subr.mxu0 0.0
    %1118 = vmatpush1.msra.mxu0 %v987
    %1119 = vmatprep.subr.mxu0 0.0
    %1120 = vmatpush1.msra.mxu0 %v984
    %1121 = vmatprep.subr.mxu0 0.0
    %1122 = vmatpush2.msra.mxu0 0.0
    %1123 = vmatprep.subr.mxu0 0.0
    %1124 = vmatpush2.msra.mxu0 0.0
    %1125 = vmatprep.subr.mxu0 0.0
    %1126 = vmatpush2.msra.mxu0 0.0
    %1127 = vmatprep.subr.mxu0 0.0
    %1128 = vmatpush2.msra.mxu0 0.0
    %1129 = vmatprep.subr.mxu0 0.0
    %1130 = vmatpush2.msra.mxu0 0.0
    %1131 = vmatprep.subr.mxu0 0.0
    %1132 = vmatpush2.msra.mxu0 0.0
    %1133 = vmatprep.subr.mxu0 0.0
    %1134 = vmatpush2.msra.mxu0 0.0
    %1135 = vmatprep.subr.mxu0 0.0
    %1136 = vmatpush2.msra.mxu0 0.0
    %1137 = vmatprep.subr.mxu0 0.0
    %1138 = vmatpush2.msra.mxu0 0.0
    %1139 = vmatprep.subr.mxu0 0.0
    %1140 = vmatpush2.msra.mxu0 0.0
    %1141 = vmatprep.subr.mxu0 0.0
    %1142 = vmatpush2.msra.mxu0 0.0
    %1143 = vmatprep.subr.mxu0 0.0
    %1144 = vmatpush2.msra.mxu0 0.0
    %1145 = vmatprep.subr.mxu0 0.0
    %1146 = vmatpush2.msra.mxu0 0.0
    %1147 = vmatprep.subr.mxu0 0.0
    %1148 = vmatpush2.msra.mxu0 0.0
    %1149 = vmatprep.subr.mxu0 0.0
    %1150 = vmatpush2.msra.mxu0 0.0
    %1151 = vmatprep.subr.mxu0 0.0
    %1152 = vmatpush2.msra.mxu0 0.0
    %1153 = vmatprep.mubr.f32.mxu0 0.0
    %1154 = vmatmul.mubr.f32.gmra.mxu0 %v1010
    %v1155 = vpop.f32.mrf.mxu0
    %v1156 = vadd.f32 %v923, %v1155
    %v1157 = vpop.f32.mrf.mxu0
    %1158 = vdwg.mxu0
    %1159 = vrot.lane.b32.xlu0 %v53, 124
    %v1160 = vpop.permute.xlu0 %1159
    %1161 = vrot.lane.b32.xlu0 %v54, 124
    %v1162 = vpop.permute.xlu0 %1161
    %v1163 = vsel %vm451, %v1160, %v444
    %v1164 = vsel %vm451, %v444, %v1162
    %1168 = vrot.lane.b32.xlu0 %v44, 120
    %v1169 = vpop.permute.xlu0 %1168
    %1170 = vrot.lane.b32.xlu0 %v49, 120
    %v1171 = vpop.permute.xlu0 %1170
    %1172 = vrot.lane.b32.xlu0 %v45, 120
    %v1173 = vpop.permute.xlu0 %1172
    %vm1174 = vcmask 982016
    %v1175 = vsel %vm1174, %v1169, %v1171
    %v1176 = vsel %vm1174, %v1171, %v1173
    %1180 = vrot.lane.b32.xlu0 %v53, 32
    %v1181 = vpop.permute.xlu0 %1180
    %1182 = vrot.lane.b32.xlu0 %v44, 32
    %v1183 = vpop.permute.xlu0 %1182
    %1184 = vrot.lane.b32.xlu0 %v54, 32
    %v1185 = vpop.permute.xlu0 %1184
    %v1186 = vsel %vm499, %v1181, %v1183
    %v1187 = vsel %vm499, %v1183, %v1185
    %v1188 = vsel %vm499, %v1185, %v494
    %1192 = vrot.lane.b32.xlu0 %v44, 28
    %v1193 = vpop.permute.xlu0 %1192
    %v1194 = vsel %vm532, %v1193, %v525
    %1198 = vrot.lane.b32.xlu0 %v53, 24
    %v1199 = vpop.permute.xlu0 %1198
    %1200 = vrot.lane.b32.xlu0 %v44, 24
    %v1201 = vpop.permute.xlu0 %1200
    %1202 = vrot.lane.b32.xlu0 %v54, 24
    %v1203 = vpop.permute.xlu0 %1202
    %1204 = vrot.lane.b32.xlu0 %v45, 24
    %v1205 = vpop.permute.xlu0 %1204
    %vm1206 = vcmask 195584
    %v1207 = vsel %vm1206, %v1199, %v1201
    %v1208 = vsel %vm1206, %v1201, %v1203
    %v1209 = vsel %vm1206, %v1203, %v1205
    %1213 = vrot.lane.b32.xlu0 %v49, 64
    %v1214 = vpop.permute.xlu0 %1213
    %1215 = vrot.lane.b32.xlu0 %v45, 64
    %v1216 = vpop.permute.xlu0 %1215
    %1217 = vrot.lane.b32.xlu0 %v50, 64
    %v1218 = vpop.permute.xlu0 %1217
    %1219 = vrot.lane.b32.xlu0 %v46, 64
    %v1220 = vpop.permute.xlu0 %1219
    %vm1221 = vcmask 523264
    %v1222 = vsel %vm1221, %v1214, %v1216
    %v1223 = vsel %vm1221, %v1216, %v1218
    %v1224 = vsel %vm1221, %v1218, %v1220
    %1228 = vrot.lane.b32.xlu0 %v44, 60
    %v1229 = vpop.permute.xlu0 %1228
    %1230 = vrot.lane.b32.xlu0 %v54, 60
    %v1231 = vpop.permute.xlu0 %1230
    %1232 = vrot.lane.b32.xlu0 %v45, 60
    %v1233 = vpop.permute.xlu0 %1232
    %1234 = vrot.lane.b32.xlu0 %v507, 60
    %v1235 = vpop.permute.xlu0 %1234
    %vm1236 = vcmask 490496
    %v1237 = vsel %vm1236, %v1229, %v1231
    %v1238 = vsel %vm1236, %v1231, %v1233
    %v1239 = vsel %vm1236, %v1233, %v1235
    %1243 = vrot.lane.b32.xlu0 %v49, 56
    %v1244 = vpop.permute.xlu0 %1243
    %1245 = vrot.lane.b32.xlu0 %v50, 56
    %v1246 = vpop.permute.xlu0 %1245
    %1247 = vrot.lane.b32.xlu0 %v46, 56
    %v1248 = vpop.permute.xlu0 %1247
    %v1249 = vsel %vm593, %v1244, %v592
    %v1250 = vsel %vm593, %v592, %v1246
    %v1251 = vsel %vm593, %v1246, %v1248
    %v1252 = vsel %vm179, %v44, %v1163
    %v1253 = vsel %vm179, %v49, %v1164
    %v1254 = vsel %vm179, %v45, %v1162
    %v1255 = vsel %vm179, %v1175, %v1186
    %v1256 = vsel %vm179, %v1176, %v1187
    %v1257 = vsel %vm179, %v1173, %v1188
    %v1258 = vsel %vm179, %v1194, %v1207
    %v1259 = vsel %vm179, %v533, %v1208
    %v1260 = vsel %vm179, %v534, %v1209
    %v1261 = vsel %vm179, %v1222, %v1237
    %v1262 = vsel %vm179, %v1223, %v1238
    %v1263 = vsel %vm179, %v1224, %v1239
    %v1264 = vld [vmem:[%s4] sm:$0xff]
    %v1266 = vsel %vm281, %v1264, 0
    %v1268 = vsel %vm179, %v1249, 0
    %v1270 = vsel %vm179, %v1250, 0
    %v1272 = vsel %vm179, %v1251, 0
    %1274 = vmatprep.subr.mxu0 0.0
    %1275 = vmatpush1.msra.mxu0 0.0
    %1276 = vmatprep.subr.mxu0 0.0
    %1277 = vmatpush1.msra.mxu0 0.0
    %1278 = vmatprep.subr.mxu0 0.0
    %1279 = vmatpush1.msra.mxu0 0.0
    %1280 = vmatprep.subr.mxu0 0.0
    %1281 = vmatpush1.msra.mxu0 0.0
    %1282 = vmatprep.subr.mxu0 0.0
    %1283 = vmatpush1.msra.mxu0 0.0
    %1284 = vmatprep.subr.mxu0 0.0
    %1285 = vmatpush1.msra.mxu0 0.0
    %1286 = vmatprep.subr.mxu0 0.0
    %1287 = vmatpush1.msra.mxu0 0.0
    %1288 = vmatprep.subr.mxu0 0.0
    %1289 = vmatpush1.msra.mxu0 0.0
    %1290 = vmatprep.subr.mxu0 0.0
    %1291 = vmatpush1.msra.mxu0 0.0
    %1292 = vmatprep.subr.mxu0 0.0
    %1293 = vmatpush1.msra.mxu0 0.0
    %1294 = vmatprep.subr.mxu0 0.0
    %1295 = vmatpush1.msra.mxu0 0.0
    %1296 = vmatprep.subr.mxu0 %v1270
    %1297 = vmatpush1.msra.mxu0 %v1268
    %1298 = vmatprep.subr.mxu0 %v1262
    %1299 = vmatpush1.msra.mxu0 %v1261
    %1300 = vmatprep.subr.mxu0 %v1259
    %1301 = vmatpush1.msra.mxu0 %v1258
    %1302 = vmatprep.subr.mxu0 %v1256
    %1303 = vmatpush1.msra.mxu0 %v1255
    %1304 = vmatprep.subr.mxu0 %v1253
    %1305 = vmatpush1.msra.mxu0 %v1252
    %1306 = vmatprep.subr.mxu0 0.0
    %1307 = vmatpush2.msra.mxu0 0.0
    %1308 = vmatprep.subr.mxu0 0.0
    %1309 = vmatpush2.msra.mxu0 0.0
    %1310 = vmatprep.subr.mxu0 0.0
    %1311 = vmatpush2.msra.mxu0 0.0
    %1312 = vmatprep.subr.mxu0 0.0
    %1313 = vmatpush2.msra.mxu0 0.0
    %1314 = vmatprep.subr.mxu0 0.0
    %1315 = vmatpush2.msra.mxu0 0.0
    %1316 = vmatprep.subr.mxu0 0.0
    %1317 = vmatpush2.msra.mxu0 0.0
    %1318 = vmatprep.subr.mxu0 0.0
    %1319 = vmatpush2.msra.mxu0 0.0
    %1320 = vmatprep.subr.mxu0 0.0
    %1321 = vmatpush2.msra.mxu0 0.0
    %1322 = vmatprep.subr.mxu0 0.0
    %1323 = vmatpush2.msra.mxu0 0.0
    %1324 = vmatprep.subr.mxu0 0.0
    %1325 = vmatpush2.msra.mxu0 0.0
    %1326 = vmatprep.subr.mxu0 0.0
    %1327 = vmatpush2.msra.mxu0 0.0
    %1328 = vmatprep.subr.mxu0 0.0
    %1329 = vmatpush2.msra.mxu0 0.0
    %1330 = vmatprep.subr.mxu0 0.0
    %1331 = vmatpush2.msra.mxu0 0.0
    %1332 = vmatprep.subr.mxu0 0.0
    %1333 = vmatpush2.msra.mxu0 0.0
    %1334 = vmatprep.subr.mxu0 0.0
    %1335 = vmatpush2.msra.mxu0 0.0
    %1336 = vmatprep.subr.mxu0 0.0
    %1337 = vmatpush2.msra.mxu0 0.0
    %1338 = vmatprep.mubr.f32.mxu0 0.0
    %1339 = vmatmul.mubr.f32.gmra.mxu0 %v1266
    %v1340 = vpop.f32.mrf.mxu0
    %v1341 = vadd.f32 0.0, %v1340
    %v1342 = vpop.f32.mrf.mxu0
    %v1343 = vadd.f32 0.0, %v1342
    %1344 = vdwg.mxu0
    %1345 = vmatprep.subr.mxu0 0.0
    %1346 = vmatpush1.msra.mxu0 0.0
    %1347 = vmatprep.subr.mxu0 0.0
    %1348 = vmatpush1.msra.mxu0 0.0
    %1349 = vmatprep.subr.mxu0 0.0
    %1350 = vmatpush1.msra.mxu0 0.0
    %1351 = vmatprep.subr.mxu0 0.0
    %1352 = vmatpush1.msra.mxu0 0.0
    %1353 = vmatprep.subr.mxu0 0.0
    %1354 = vmatpush1.msra.mxu0 0.0
    %1355 = vmatprep.subr.mxu0 0.0
    %1356 = vmatpush1.msra.mxu0 0.0
    %1357 = vmatprep.subr.mxu0 0.0
    %1358 = vmatpush1.msra.mxu0 0.0
    %1359 = vmatprep.subr.mxu0 0.0
    %1360 = vmatpush1.msra.mxu0 0.0
    %1361 = vmatprep.subr.mxu0 0.0
    %1362 = vmatpush1.msra.mxu0 0.0
    %1363 = vmatprep.subr.mxu0 0.0
    %1364 = vmatpush1.msra.mxu0 0.0
    %1365 = vmatprep.subr.mxu0 0.0
    %1366 = vmatpush1.msra.mxu0 0.0
    %1367 = vmatprep.subr.mxu0 0.0
    %1368 = vmatpush1.msra.mxu0 %v1272
    %1369 = vmatprep.subr.mxu0 0.0
    %1370 = vmatpush1.msra.mxu0 %v1263
    %1371 = vmatprep.subr.mxu0 0.0
    %1372 = vmatpush1.msra.mxu0 %v1260
    %1373 = vmatprep.subr.mxu0 0.0
    %1374 = vmatpush1.msra.mxu0 %v1257
    %1375 = vmatprep.subr.mxu0 0.0
    %1376 = vmatpush1.msra.mxu0 %v1254
    %1377 = vmatprep.subr.mxu0 0.0
    %1378 = vmatpush2.msra.mxu0 0.0
    %1379 = vmatprep.subr.mxu0 0.0
    %1380 = vmatpush2.msra.mxu0 0.0
    %1381 = vmatprep.subr.mxu0 0.0
    %1382 = vmatpush2.msra.mxu0 0.0
    %1383 = vmatprep.subr.mxu0 0.0
    %1384 = vmatpush2.msra.mxu0 0.0
    %1385 = vmatprep.subr.mxu0 0.0
    %1386 = vmatpush2.msra.mxu0 0.0
    %1387 = vmatprep.subr.mxu0 0.0
    %1388 = vmatpush2.msra.mxu0 0.0
    %1389 = vmatprep.subr.mxu0 0.0
    %1390 = vmatpush2.msra.mxu0 0.0
    %1391 = vmatprep.subr.mxu0 0.0
    %1392 = vmatpush2.msra.mxu0 0.0
    %1393 = vmatprep.subr.mxu0 0.0
    %1394 = vmatpush2.msra.mxu0 0.0
    %1395 = vmatprep.subr.mxu0 0.0
    %1396 = vmatpush2.msra.mxu0 0.0
    %1397 = vmatprep.subr.mxu0 0.0
    %1398 = vmatpush2.msra.mxu0 0.0
    %1399 = vmatprep.subr.mxu0 0.0
    %1400 = vmatpush2.msra.mxu0 0.0
    %1401 = vmatprep.subr.mxu0 0.0
    %1402 = vmatpush2.msra.mxu0 0.0
    %1403 = vmatprep.subr.mxu0 0.0
    %1404 = vmatpush2.msra.mxu0 0.0
    %1405 = vmatprep.subr.mxu0 0.0
    %1406 = vmatpush2.msra.mxu0 0.0
    %1407 = vmatprep.subr.mxu0 0.0
    %1408 = vmatpush2.msra.mxu0 0.0
    %1409 = vmatprep.mubr.f32.mxu0 0.0
    %1410 = vmatmul.mubr.f32.gmra.mxu0 %v1266
    %v1411 = vpop.f32.mrf.mxu0
    %v1412 = vadd.f32 0.0, %v1411
    %v1413 = vpop.f32.mrf.mxu0
    %1414 = vdwg.mxu0
    %v1415 = vadd.f32 %v1085, %v1341
    %v1416 = vadd.f32 %v1087, %v1343
    %v1417 = vadd.f32 %v1156, %v1412
    %v1418 = vld [vmem:[#allocation2] sm:$0xff]
    %v1419 = vld [vmem:[#allocation2 + $0x8] sm:$0xff]
    %v1420 = vld [vmem:[#allocation2 + $0x10] sm:$0xff]
    %v1421 = vld [vmem:[#allocation2 + $0x18] sm:$0xff]
    %v1422 = vld [vmem:[#allocation2 + $0x20] sm:$0xff]
    %v1423 = vld [vmem:[#allocation2 + $0x28] sm:$0xff]
    %v1424 = vld [vmem:[#allocation2 + $0x30] sm:$0xff]
    %v1425 = vld [vmem:[#allocation2 + $0x38] sm:$0xff]
    %v1426 = vld [vmem:[#allocation2 + $0x40] sm:$0xff]
    %v1427 = vld [vmem:[#allocation2 + $0x48] sm:$0xff]
    %v1428 = vld [vmem:[#allocation2 + $0x50] sm:$0xff]
    %v1429 = vld [vmem:[#allocation2 + $0x58] sm:$0xff]
    %v1430 = vld [vmem:[#allocation2 + $0x60] sm:$0xff]
    %v1431 = vld [vmem:[#allocation2 + $0x68] sm:$0xff]
    %v1432 = vld [vmem:[#allocation2 + $0x70] sm:$0xff]
    %v1433 = vld [vmem:[#allocation2 + $0x78] sm:$0xff]
    %v1434 = vld [vmem:[#allocation2 + $0x80] sm:$0xff]
    %v1435 = vld [vmem:[#allocation2 + $0x88] sm:$0xff]
    %v1436 = vld [vmem:[#allocation2 + $0x90] sm:$0xff]
    %v1437 = vld [vmem:[#allocation2 + $0x98] sm:$0xff]
    %v1438 = vld [vmem:[#allocation2 + $0xa0] sm:$0xff]
    %v1439 = vld [vmem:[#allocation2 + $0xa8] sm:$0xff]
    %v1440 = vld [vmem:[#allocation2 + $0xb0] sm:$0xff]
    %v1441 = vld [vmem:[#allocation2 + $0xb8] sm:$0xff]
    %v1442 = vld [vmem:[#allocation2 + $0xc0] sm:$0xff]
    %v1443 = vld [vmem:[#allocation2 + $0xc8] sm:$0xff]
    %v1444 = vld [vmem:[#allocation2 + $0xd0] sm:$0xff]
    %v1445 = vld [vmem:[#allocation2 + $0xd8] sm:$0xff]
    %v1446 = vld [vmem:[#allocation2 + $0xe0] sm:$0xff]
    %v1447 = vld [vmem:[#allocation2 + $0xe8] sm:$0xff]
    %v1448 = vld [vmem:[#allocation2 + $0xf0] sm:$0xff]
    %v1449 = vld [vmem:[#allocation2 + $0xf8] sm:$0xff]
    %v1450 = vld [vmem:[#allocation2 + $0x100] sm:$0xff]
    %v1451 = vld [vmem:[#allocation2 + $0x108] sm:$0xff]
    %v1452 = vld [vmem:[#allocation2 + $0x110] sm:$0xff]
    %v1453 = vld [vmem:[#allocation2 + $0x118] sm:$0xff]
    %v1454 = vld [vmem:[#allocation2 + $0x120] sm:$0xff]
    %v1455 = vld [vmem:[#allocation2 + $0x128] sm:$0xff]
    %v1456 = vld [vmem:[#allocation2 + $0x130] sm:$0xff]
    %v1457 = vld [vmem:[#allocation2 + $0x138] sm:$0xff]
    %v1458 = vld [vmem:[#allocation2 + $0x140] sm:$0xff]
    %v1459 = vld [vmem:[#allocation2 + $0x148] sm:$0xff]
    %v1460 = vld [vmem:[#allocation2 + $0x150] sm:$0xff]
    %v1461 = vld [vmem:[#allocation2 + $0x158] sm:$0xff]
    %v1462 = vld [vmem:[#allocation2 + $0x160] sm:$0xff]
    %v1463 = vld [vmem:[#allocation2 + $0x168] sm:$0xff]
    %v1464 = vld [vmem:[#allocation2 + $0x170] sm:$0xff]
    %v1465 = vld [vmem:[#allocation2 + $0x178] sm:$0xff]
    %v1466 = vld [vmem:[#allocation2 + $0x180] sm:$0xff]
    %v1467 = vld [vmem:[#allocation2 + $0x188] sm:$0xff]
    %v1468 = vld [vmem:[#allocation2 + $0x190] sm:$0xff]
    %v1469 = vld [vmem:[#allocation2 + $0x198] sm:$0xff]
    %v1470 = vld [vmem:[#allocation2 + $0x1a0] sm:$0xff]
    %v1471 = vld [vmem:[#allocation2 + $0x1a8] sm:$0xff]
    %v1472 = vld [vmem:[#allocation2 + $0x1b0] sm:$0xff]
    %v1473 = vld [vmem:[#allocation2 + $0x1b8] sm:$0xff]
    %v1474 = vld [vmem:[#allocation2 + $0x1c0] sm:$0xff]
    %v1475 = vld [vmem:[#allocation2 + $0x1c8] sm:$0xff]
    %v1476 = vld [vmem:[#allocation2 + $0x1d0] sm:$0xff]
    %v1477 = vld [vmem:[#allocation2 + $0x1d8] sm:$0xff]
    %v1478 = vld [vmem:[#allocation2 + $0x1e0] sm:$0xff]
    %v1479 = vld [vmem:[#allocation2 + $0x1e8] sm:$0xff]
    %v1480 = vld [vmem:[#allocation2 + $0x1f0] sm:$0xff]
    %v1481 = vld [vmem:[#allocation2 + $0x1f8] sm:$0xff]
    %v1482 = vld [vmem:[#allocation2 + $0x200] sm:$0xff]
    %v1483 = vld [vmem:[#allocation2 + $0x208] sm:$0xff]
    %v1484 = vld [vmem:[#allocation2 + $0x210] sm:$0xff]
    %v1485 = vld [vmem:[#allocation2 + $0x218] sm:$0xff]
    %v1486 = vld [vmem:[#allocation2 + $0x220] sm:$0xff]
    %v1487 = vld [vmem:[#allocation2 + $0x228] sm:$0xff]
    %v1488 = vld [vmem:[#allocation2 + $0x230] sm:$0xff]
    %v1489 = vld [vmem:[#allocation2 + $0x238] sm:$0xff]
    %v1490 = vld [vmem:[#allocation2 + $0x240] sm:$0xff]
    %v1491 = vld [vmem:[#allocation2 + $0x248] sm:$0xff]
    %v1492 = vld [vmem:[#allocation2 + $0x250] sm:$0xff]
    %v1493 = vld [vmem:[#allocation2 + $0x258] sm:$0xff]
    %v1494 = vld [vmem:[#allocation2 + $0x260] sm:$0xff]
    %v1495 = vld [vmem:[#allocation2 + $0x268] sm:$0xff]
    %v1496 = vld [vmem:[#allocation2 + $0x270] sm:$0xff]
    %v1497 = vld [vmem:[#allocation2 + $0x278] sm:$0xff]
    %v1498 = vld [vmem:[#allocation2 + $0x280] sm:$0xff]
    %v1499 = vld [vmem:[#allocation2 + $0x288] sm:$0xff]
    %v1500 = vld [vmem:[#allocation2 + $0x290] sm:$0xff]
    %v1501 = vld [vmem:[#allocation2 + $0x298] sm:$0xff]
    %v1502 = vld [vmem:[#allocation2 + $0x2a0] sm:$0xff]
    %v1503 = vld [vmem:[#allocation2 + $0x2a8] sm:$0xff]
    %v1504 = vld [vmem:[#allocation2 + $0x2b0] sm:$0xff]
    %v1505 = vld [vmem:[#allocation2 + $0x2b8] sm:$0xff]
    %v1506 = vld [vmem:[#allocation2 + $0x2c0] sm:$0xff]
    %v1507 = vld [vmem:[#allocation2 + $0x2c8] sm:$0xff]
    %v1508 = vld [vmem:[#allocation2 + $0x2d0] sm:$0xff]
    %v1509 = vld [vmem:[#allocation2 + $0x2d8] sm:$0xff]
    %v1510 = vld [vmem:[#allocation2 + $0x2e0] sm:$0xff]
    %v1511 = vld [vmem:[#allocation2 + $0x2e8] sm:$0xff]
    %v1512 = vld [vmem:[#allocation2 + $0x2f0] sm:$0xff]
    %v1513 = vld [vmem:[#allocation2 + $0x2f8] sm:$0xff]
    %v1515 = vsel %vm1174, %v429, 0
    %v1518 = vsel %vm1174, %v1420, 0
    %v1521 = vsel %vm1174, %v1423, 0
    %v1524 = vsel %vm1174, %v1426, 0
    %v1527 = vsel %vm1174, %v1429, 0
    %v1530 = vsel %vm1174, %v1432, 0
    %v1533 = vsel %vm1174, %v1435, 0
    %v1536 = vsel %vm1174, %v1438, 0
    %v1539 = vsel %vm1174, %v1441, 0
    %v1542 = vsel %vm1174, %v1444, 0
    %v1545 = vsel %vm1174, %v1447, 0
    %v1548 = vsel %vm1174, %v1450, 0
    %v1551 = vsel %vm1174, %v1453, 0
    %v1554 = vsel %vm1174, %v1456, 0
    %v1557 = vsel %vm1174, %v1459, 0
    %v1560 = vsel %vm1174, %v1462, 0
    %v1563 = vsel %vm1174, %v1465, 0
    %v1566 = vsel %vm1174, %v1468, 0
    %v1569 = vsel %vm1174, %v1471, 0
    %v1572 = vsel %vm1174, %v1474, 0
    %v1575 = vsel %vm1174, %v1477, 0
    %v1578 = vsel %vm1174, %v1480, 0
    %v1581 = vsel %vm1174, %v1483, 0
    %v1584 = vsel %vm1174, %v1486, 0
    %v1587 = vsel %vm1174, %v1489, 0
    %v1590 = vsel %vm1174, %v1492, 0
    %v1593 = vsel %vm1174, %v1495, 0
    %v1596 = vsel %vm1174, %v1498, 0
    %v1599 = vsel %vm1174, %v1501, 0
    %v1602 = vsel %vm1174, %v1504, 0
    %v1605 = vsel %vm1174, %v1507, 0
    %v1608 = vsel %vm1174, %v1510, 0
    %v1611 = vsel %vm1174, %v1513, 0
    %1613 = vmatprep.subr.mxu0 %v1464
    %1614 = vmatpush1.xpose.msra.mxu0 %v1463
    %1615 = vmatprep.subr.mxu0 %v1461
    %1616 = vmatpush1.xpose.msra.mxu0 %v1460
    %1617 = vmatprep.subr.mxu0 %v1458
    %1618 = vmatpush1.xpose.msra.mxu0 %v1457
    %1619 = vmatprep.subr.mxu0 %v1455
    %1620 = vmatpush1.xpose.msra.mxu0 %v1454
    %1621 = vmatprep.subr.mxu0 %v1452
    %1622 = vmatpush1.xpose.msra.mxu0 %v1451
    %1623 = vmatprep.subr.mxu0 %v1449
    %1624 = vmatpush1.xpose.msra.mxu0 %v1448
    %1625 = vmatprep.subr.mxu0 %v1446
    %1626 = vmatpush1.xpose.msra.mxu0 %v1445
    %1627 = vmatprep.subr.mxu0 %v1443
    %1628 = vmatpush1.xpose.msra.mxu0 %v1442
    %1629 = vmatprep.subr.mxu0 %v1440
    %1630 = vmatpush1.xpose.msra.mxu0 %v1439
    %1631 = vmatprep.subr.mxu0 %v1437
    %1632 = vmatpush1.xpose.msra.mxu0 %v1436
    %1633 = vmatprep.subr.mxu0 %v1434
    %1634 = vmatpush1.xpose.msra.mxu0 %v1433
    %1635 = vmatprep.subr.mxu0 %v1431
    %1636 = vmatpush1.xpose.msra.mxu0 %v1430
    %1637 = vmatprep.subr.mxu0 %v1428
    %1638 = vmatpush1.xpose.msra.mxu0 %v1427
    %1639 = vmatprep.subr.mxu0 %v1425
    %1640 = vmatpush1.xpose.msra.mxu0 %v1424
    %1641 = vmatprep.subr.mxu0 %v1422
    %1642 = vmatpush1.xpose.msra.mxu0 %v1421
    %1643 = vmatprep.subr.mxu0 %v1419
    %1644 = vmatpush1.xpose.msra.mxu0 %v1418
    %1645 = vmatprep.subr.mxu0 %v1512
    %1646 = vmatpush2.xpose.msra.mxu0 %v1511
    %1647 = vmatprep.subr.mxu0 %v1509
    %1648 = vmatpush2.xpose.msra.mxu0 %v1508
    %1649 = vmatprep.subr.mxu0 %v1506
    %1650 = vmatpush2.xpose.msra.mxu0 %v1505
    %1651 = vmatprep.subr.mxu0 %v1503
    %1652 = vmatpush2.xpose.msra.mxu0 %v1502
    %1653 = vmatprep.subr.mxu0 %v1500
    %1654 = vmatpush2.xpose.msra.mxu0 %v1499
    %1655 = vmatprep.subr.mxu0 %v1497
    %1656 = vmatpush2.xpose.msra.mxu0 %v1496
    %1657 = vmatprep.subr.mxu0 %v1494
    %1658 = vmatpush2.xpose.msra.mxu0 %v1493
    %1659 = vmatprep.subr.mxu0 %v1491
    %1660 = vmatpush2.xpose.msra.mxu0 %v1490
    %1661 = vmatprep.subr.mxu0 %v1488
    %1662 = vmatpush2.xpose.msra.mxu0 %v1487
    %1663 = vmatprep.subr.mxu0 %v1485
    %1664 = vmatpush2.xpose.msra.mxu0 %v1484
    %1665 = vmatprep.subr.mxu0 %v1482
    %1666 = vmatpush2.xpose.msra.mxu0 %v1481
    %1667 = vmatprep.subr.mxu0 %v1479
    %1668 = vmatpush2.xpose.msra.mxu0 %v1478
    %1669 = vmatprep.subr.mxu0 %v1476
    %1670 = vmatpush2.xpose.msra.mxu0 %v1475
    %1671 = vmatprep.subr.mxu0 %v1473
    %1672 = vmatpush2.xpose.msra.mxu0 %v1472
    %1673 = vmatprep.subr.mxu0 %v1470
    %1674 = vmatpush2.xpose.msra.mxu0 %v1469
    %1675 = vmatprep.subr.mxu0 %v1467
    %1676 = vmatpush2.xpose.msra.mxu0 %v1466
    %1677 = vmatprep.mubr.f32.mxu0 %v360
    %1678 = vmatmul.mubr.f32.gmra.mxu0 %v358
    %v1679 = vpop.f32.mrf.mxu0
    %v1680 = vadd.f32 0.0, %v1679
    %v1681 = vpop.f32.mrf.mxu0
    %v1682 = vadd.f32 0.0, %v1681
    %1683 = vdwg.mxu0
    %1684 = vmatprep.subr.mxu0 0.0
    %1685 = vmatpush1.xpose.msra.mxu0 %v1563
    %1686 = vmatprep.subr.mxu0 0.0
    %1687 = vmatpush1.xpose.msra.mxu0 %v1560
    %1688 = vmatprep.subr.mxu0 0.0
    %1689 = vmatpush1.xpose.msra.mxu0 %v1557
    %1690 = vmatprep.subr.mxu0 0.0
    %1691 = vmatpush1.xpose.msra.mxu0 %v1554
    %1692 = vmatprep.subr.mxu0 0.0
    %1693 = vmatpush1.xpose.msra.mxu0 %v1551
    %1694 = vmatprep.subr.mxu0 0.0
    %1695 = vmatpush1.xpose.msra.mxu0 %v1548
    %1696 = vmatprep.subr.mxu0 0.0
    %1697 = vmatpush1.xpose.msra.mxu0 %v1545
    %1698 = vmatprep.subr.mxu0 0.0
    %1699 = vmatpush1.xpose.msra.mxu0 %v1542
    %1700 = vmatprep.subr.mxu0 0.0
    %1701 = vmatpush1.xpose.msra.mxu0 %v1539
    %1702 = vmatprep.subr.mxu0 0.0
    %1703 = vmatpush1.xpose.msra.mxu0 %v1536
    %1704 = vmatprep.subr.mxu0 0.0
    %1705 = vmatpush1.xpose.msra.mxu0 %v1533
    %1706 = vmatprep.subr.mxu0 0.0
    %1707 = vmatpush1.xpose.msra.mxu0 %v1530
    %1708 = vmatprep.subr.mxu0 0.0
    %1709 = vmatpush1.xpose.msra.mxu0 %v1527
    %1710 = vmatprep.subr.mxu0 0.0
    %1711 = vmatpush1.xpose.msra.mxu0 %v1524
    %1712 = vmatprep.subr.mxu0 0.0
    %1713 = vmatpush1.xpose.msra.mxu0 %v1521
    %1714 = vmatprep.subr.mxu0 0.0
    %1715 = vmatpush1.xpose.msra.mxu0 %v1518
    %1716 = vmatprep.subr.mxu0 0.0
    %1717 = vmatpush2.xpose.msra.mxu0 %v1611
    %1718 = vmatprep.subr.mxu0 0.0
    %1719 = vmatpush2.xpose.msra.mxu0 %v1608
    %1720 = vmatprep.subr.mxu0 0.0
    %1721 = vmatpush2.xpose.msra.mxu0 %v1605
    %1722 = vmatprep.subr.mxu0 0.0
    %1723 = vmatpush2.xpose.msra.mxu0 %v1602
    %1724 = vmatprep.subr.mxu0 0.0
    %1725 = vmatpush2.xpose.msra.mxu0 %v1599
    %1726 = vmatprep.subr.mxu0 0.0
    %1727 = vmatpush2.xpose.msra.mxu0 %v1596
    %1728 = vmatprep.subr.mxu0 0.0
    %1729 = vmatpush2.xpose.msra.mxu0 %v1593
    %1730 = vmatprep.subr.mxu0 0.0
    %1731 = vmatpush2.xpose.msra.mxu0 %v1590
    %1732 = vmatprep.subr.mxu0 0.0
    %1733 = vmatpush2.xpose.msra.mxu0 %v1587
    %1734 = vmatprep.subr.mxu0 0.0
    %1735 = vmatpush2.xpose.msra.mxu0 %v1584
    %1736 = vmatprep.subr.mxu0 0.0
    %1737 = vmatpush2.xpose.msra.mxu0 %v1581
    %1738 = vmatprep.subr.mxu0 0.0
    %1739 = vmatpush2.xpose.msra.mxu0 %v1578
    %1740 = vmatprep.subr.mxu0 0.0
    %1741 = vmatpush2.xpose.msra.mxu0 %v1575
    %1742 = vmatprep.subr.mxu0 0.0
    %1743 = vmatpush2.xpose.msra.mxu0 %v1572
    %1744 = vmatprep.subr.mxu0 0.0
    %1745 = vmatpush2.xpose.msra.mxu0 %v1569
    %1746 = vmatprep.subr.mxu0 0.0
    %1747 = vmatpush2.xpose.msra.mxu0 %v1566
    %1748 = vmatprep.mubr.f32.mxu0 0.0
    %1749 = vmatmul.mubr.f32.gmra.mxu0 %v1515
    %v1750 = vpop.f32.mrf.mxu0
    %v1751 = vadd.f32 %v1680, %v1750
    %v1752 = vpop.f32.mrf.mxu0
    %v1753 = vadd.f32 %v1682, %v1752
    %1754 = vdwg.mxu0
    %1756 = vset.pattern.permute.xlu0 0
    %1757 = vperm.xlu0 %1756, %v43
    %v1758 = vpop.permute.xlu0 %1757
    %v1760 = vadd.f32 %v1758, %v1751
    %v1761 = vadd.f32 %v1758, %v1753
    %v1762 = vld [vmem:[%s6] sm:$0xff]
    %v1763 = vld [vmem:[%s6 + $0x8] sm:$0xff]
    %v1764 = vld [vmem:[%s6 + $0x10] sm:$0xff]
    %v1765 = vld [vmem:[%s6 + $0x18] sm:$0xff]
    %v1766 = vld [vmem:[%s6 + $0x20] sm:$0xff]
    %v1767 = vld [vmem:[%s6 + $0x28] sm:$0xff]
    %v1768 = vld [vmem:[%s6 + $0x30] sm:$0xff]
    %v1769 = vld [vmem:[%s6 + $0x38] sm:$0xff]
    %v1770 = vld [vmem:[%s6 + $0x40] sm:$0xff]
    %v1771 = vld [vmem:[%s6 + $0x48] sm:$0xff]
    %v1772 = vld [vmem:[%s6 + $0x50] sm:$0xff]
    %v1773 = vld [vmem:[%s6 + $0x58] sm:$0xff]
    %v1774 = vld [vmem:[%s6 + $0x60] sm:$0xff]
    %v1775 = vld [vmem:[%s6 + $0x68] sm:$0xff]
    %v1776 = vld [vmem:[%s6 + $0x70] sm:$0xff]
    %v1777 = vld [vmem:[%s6 + $0x78] sm:$0xff]
    %v1778 = vld [vmem:[%s6 + $0x80] sm:$0xff]
    %v1779 = vld [vmem:[%s6 + $0x88] sm:$0xff]
    %v1780 = vld [vmem:[%s6 + $0x90] sm:$0xff]
    %v1781 = vld [vmem:[%s6 + $0x98] sm:$0xff]
    %v1782 = vld [vmem:[%s6 + $0xa0] sm:$0xff]
    %v1783 = vld [vmem:[%s6 + $0xa8] sm:$0xff]
    %v1784 = vld [vmem:[%s6 + $0xb0] sm:$0xff]
    %v1785 = vld [vmem:[%s6 + $0xb8] sm:$0xff]
    %v1786 = vld [vmem:[%s6 + $0xc0] sm:$0xff]
    %v1787 = vld [vmem:[%s6 + $0xc8] sm:$0xff]
    %v1788 = vld [vmem:[%s6 + $0xd0] sm:$0xff]
    %v1789 = vld [vmem:[%s6 + $0xd8] sm:$0xff]
    %v1790 = vld [vmem:[%s6 + $0xe0] sm:$0xff]
    %v1791 = vld [vmem:[%s6 + $0xe8] sm:$0xff]
    %v1792 = vld [vmem:[%s6 + $0xf0] sm:$0xff]
    %v1793 = vld [vmem:[%s6 + $0xf8] sm:$0xff]
    %v1794 = vld [vmem:[%s6 + $0x100] sm:$0xff]
    %v1795 = vld [vmem:[%s6 + $0x108] sm:$0xff]
    %v1796 = vld [vmem:[%s6 + $0x110] sm:$0xff]
    %v1797 = vld [vmem:[%s6 + $0x118] sm:$0xff]
    %v1798 = vld [vmem:[%s6 + $0x120] sm:$0xff]
    %v1799 = vld [vmem:[%s6 + $0x128] sm:$0xff]
    %v1800 = vld [vmem:[%s6 + $0x130] sm:$0xff]
    %v1801 = vld [vmem:[%s6 + $0x138] sm:$0xff]
    %v1802 = vld [vmem:[%s6 + $0x140] sm:$0xff]
    %v1803 = vld [vmem:[%s6 + $0x148] sm:$0xff]
    %v1804 = vld [vmem:[%s6 + $0x150] sm:$0xff]
    %v1805 = vld [vmem:[%s6 + $0x158] sm:$0xff]
    %v1806 = vld [vmem:[%s6 + $0x160] sm:$0xff]
    %v1807 = vld [vmem:[%s6 + $0x168] sm:$0xff]
    %v1808 = vld [vmem:[%s6 + $0x170] sm:$0xff]
    %v1809 = vld [vmem:[%s6 + $0x178] sm:$0xff]
    %v1810 = vld [vmem:[%s6 + $0x180] sm:$0xff]
    %v1811 = vld [vmem:[%s6 + $0x188] sm:$0xff]
    %v1812 = vld [vmem:[%s6 + $0x190] sm:$0xff]
    %v1813 = vld [vmem:[%s6 + $0x198] sm:$0xff]
    %v1814 = vld [vmem:[%s6 + $0x1a0] sm:$0xff]
    %v1815 = vld [vmem:[%s6 + $0x1a8] sm:$0xff]
    %v1816 = vld [vmem:[%s6 + $0x1b0] sm:$0xff]
    %v1817 = vld [vmem:[%s6 + $0x1b8] sm:$0xff]
    %v1818 = vld [vmem:[%s6 + $0x1c0] sm:$0xff]
    %v1819 = vld [vmem:[%s6 + $0x1c8] sm:$0xff]
    %v1820 = vld [vmem:[%s6 + $0x1d0] sm:$0xff]
    %v1821 = vld [vmem:[%s6 + $0x1d8] sm:$0xff]
    %v1822 = vld [vmem:[%s6 + $0x1e0] sm:$0xff]
    %v1823 = vld [vmem:[%s6 + $0x1e8] sm:$0xff]
    %v1824 = vld [vmem:[%s6 + $0x1f0] sm:$0xff]
    %v1825 = vld [vmem:[%s6 + $0x1f8] sm:$0xff]
    %v1826 = vld [vmem:[%s6 + $0x200] sm:$0xff]
    %v1827 = vld [vmem:[%s6 + $0x208] sm:$0xff]
    %v1828 = vld [vmem:[%s6 + $0x210] sm:$0xff]
    %v1829 = vld [vmem:[%s6 + $0x218] sm:$0xff]
    %v1830 = vld [vmem:[%s6 + $0x220] sm:$0xff]
    %v1831 = vld [vmem:[%s6 + $0x228] sm:$0xff]
    %v1832 = vld [vmem:[%s6 + $0x230] sm:$0xff]
    %v1833 = vld [vmem:[%s6 + $0x238] sm:$0xff]
    %v1834 = vld [vmem:[%s6 + $0x240] sm:$0xff]
    %v1835 = vld [vmem:[%s6 + $0x248] sm:$0xff]
    %v1836 = vld [vmem:[%s6 + $0x250] sm:$0xff]
    %v1837 = vld [vmem:[%s6 + $0x258] sm:$0xff]
    %v1838 = vld [vmem:[%s6 + $0x260] sm:$0xff]
    %v1839 = vld [vmem:[%s6 + $0x268] sm:$0xff]
    %v1840 = vld [vmem:[%s6 + $0x270] sm:$0xff]
    %v1841 = vld [vmem:[%s6 + $0x278] sm:$0xff]
    %v1842 = vld [vmem:[%s6 + $0x280] sm:$0xff]
    %v1843 = vld [vmem:[%s6 + $0x288] sm:$0xff]
    %v1844 = vld [vmem:[%s6 + $0x290] sm:$0xff]
    %v1845 = vld [vmem:[%s6 + $0x298] sm:$0xff]
    %v1846 = vld [vmem:[%s6 + $0x2a0] sm:$0xff]
    %v1847 = vld [vmem:[%s6 + $0x2a8] sm:$0xff]
    %v1848 = vld [vmem:[%s6 + $0x2b0] sm:$0xff]
    %v1849 = vld [vmem:[%s6 + $0x2b8] sm:$0xff]
    %v1850 = vld [vmem:[%s6 + $0x2c0] sm:$0xff]
    %v1851 = vld [vmem:[%s6 + $0x2c8] sm:$0xff]
    %v1852 = vld [vmem:[%s6 + $0x2d0] sm:$0xff]
    %v1853 = vld [vmem:[%s6 + $0x2d8] sm:$0xff]
    %v1854 = vld [vmem:[%s6 + $0x2e0] sm:$0xff]
    %v1855 = vld [vmem:[%s6 + $0x2e8] sm:$0xff]
    %v1856 = vld [vmem:[%s6 + $0x2f0] sm:$0xff]
    %v1857 = vld [vmem:[%s6 + $0x2f8] sm:$0xff]
    %v1859 = vsel %vm1174, %v1417, 0
    %v1862 = vsel %vm1174, %v1764, 0
    %v1865 = vsel %vm1174, %v1767, 0
    %v1868 = vsel %vm1174, %v1770, 0
    %v1871 = vsel %vm1174, %v1773, 0
    %v1874 = vsel %vm1174, %v1776, 0
    %v1877 = vsel %vm1174, %v1779, 0
    %v1880 = vsel %vm1174, %v1782, 0
    %v1883 = vsel %vm1174, %v1785, 0
    %v1886 = vsel %vm1174, %v1788, 0
    %v1889 = vsel %vm1174, %v1791, 0
    %v1892 = vsel %vm1174, %v1794, 0
    %v1895 = vsel %vm1174, %v1797, 0
    %v1898 = vsel %vm1174, %v1800, 0
    %v1901 = vsel %vm1174, %v1803, 0
    %v1904 = vsel %vm1174, %v1806, 0
    %v1907 = vsel %vm1174, %v1809, 0
    %v1910 = vsel %vm1174, %v1812, 0
    %v1913 = vsel %vm1174, %v1815, 0
    %v1916 = vsel %vm1174, %v1818, 0
    %v1919 = vsel %vm1174, %v1821, 0
    %v1922 = vsel %vm1174, %v1824, 0
    %v1925 = vsel %vm1174, %v1827, 0
    %v1928 = vsel %vm1174, %v1830, 0
    %v1931 = vsel %vm1174, %v1833, 0
    %v1934 = vsel %vm1174, %v1836, 0
    %v1937 = vsel %vm1174, %v1839, 0
    %v1940 = vsel %vm1174, %v1842, 0
    %v1943 = vsel %vm1174, %v1845, 0
    %v1946 = vsel %vm1174, %v1848, 0
    %v1949 = vsel %vm1174, %v1851, 0
    %v1952 = vsel %vm1174, %v1854, 0
    %v1955 = vsel %vm1174, %v1857, 0
    %1957 = vmatprep.subr.mxu0 %v1808
    %1958 = vmatpush1.xpose.msra.mxu0 %v1807
    %1959 = vmatprep.subr.mxu0 %v1805
    %1960 = vmatpush1.xpose.msra.mxu0 %v1804
    %1961 = vmatprep.subr.mxu0 %v1802
    %1962 = vmatpush1.xpose.msra.mxu0 %v1801
    %1963 = vmatprep.subr.mxu0 %v1799
    %1964 = vmatpush1.xpose.msra.mxu0 %v1798
    %1965 = vmatprep.subr.mxu0 %v1796
    %1966 = vmatpush1.xpose.msra.mxu0 %v1795
    %1967 = vmatprep.subr.mxu0 %v1793
    %1968 = vmatpush1.xpose.msra.mxu0 %v1792
    %1969 = vmatprep.subr.mxu0 %v1790
    %1970 = vmatpush1.xpose.msra.mxu0 %v1789
    %1971 = vmatprep.subr.mxu0 %v1787
    %1972 = vmatpush1.xpose.msra.mxu0 %v1786
    %1973 = vmatprep.subr.mxu0 %v1784
    %1974 = vmatpush1.xpose.msra.mxu0 %v1783
    %1975 = vmatprep.subr.mxu0 %v1781
    %1976 = vmatpush1.xpose.msra.mxu0 %v1780
    %1977 = vmatprep.subr.mxu0 %v1778
    %1978 = vmatpush1.xpose.msra.mxu0 %v1777
    %1979 = vmatprep.subr.mxu0 %v1775
    %1980 = vmatpush1.xpose.msra.mxu0 %v1774
    %1981 = vmatprep.subr.mxu0 %v1772
    %1982 = vmatpush1.xpose.msra.mxu0 %v1771
    %1983 = vmatprep.subr.mxu0 %v1769
    %1984 = vmatpush1.xpose.msra.mxu0 %v1768
    %1985 = vmatprep.subr.mxu0 %v1766
    %1986 = vmatpush1.xpose.msra.mxu0 %v1765
    %1987 = vmatprep.subr.mxu0 %v1763
    %1988 = vmatpush1.xpose.msra.mxu0 %v1762
    %1989 = vmatprep.subr.mxu0 %v1856
    %1990 = vmatpush2.xpose.msra.mxu0 %v1855
    %1991 = vmatprep.subr.mxu0 %v1853
    %1992 = vmatpush2.xpose.msra.mxu0 %v1852
    %1993 = vmatprep.subr.mxu0 %v1850
    %1994 = vmatpush2.xpose.msra.mxu0 %v1849
    %1995 = vmatprep.subr.mxu0 %v1847
    %1996 = vmatpush2.xpose.msra.mxu0 %v1846
    %1997 = vmatprep.subr.mxu0 %v1844
    %1998 = vmatpush2.xpose.msra.mxu0 %v1843
    %1999 = vmatprep.subr.mxu0 %v1841
    %2000 = vmatpush2.xpose.msra.mxu0 %v1840
    %2001 = vmatprep.subr.mxu0 %v1838
    %2002 = vmatpush2.xpose.msra.mxu0 %v1837
    %2003 = vmatprep.subr.mxu0 %v1835
    %2004 = vmatpush2.xpose.msra.mxu0 %v1834
    %2005 = vmatprep.subr.mxu0 %v1832
    %2006 = vmatpush2.xpose.msra.mxu0 %v1831
    %2007 = vmatprep.subr.mxu0 %v1829
    %2008 = vmatpush2.xpose.msra.mxu0 %v1828
    %2009 = vmatprep.subr.mxu0 %v1826
    %2010 = vmatpush2.xpose.msra.mxu0 %v1825
    %2011 = vmatprep.subr.mxu0 %v1823
    %2012 = vmatpush2.xpose.msra.mxu0 %v1822
    %2013 = vmatprep.subr.mxu0 %v1820
    %2014 = vmatpush2.xpose.msra.mxu0 %v1819
    %2015 = vmatprep.subr.mxu0 %v1817
    %2016 = vmatpush2.xpose.msra.mxu0 %v1816
    %2017 = vmatprep.subr.mxu0 %v1814
    %2018 = vmatpush2.xpose.msra.mxu0 %v1813
    %2019 = vmatprep.subr.mxu0 %v1811
    %2020 = vmatpush2.xpose.msra.mxu0 %v1810
    %2021 = vmatprep.mubr.f32.mxu0 %v1416
    %2022 = vmatmul.mubr.f32.gmra.mxu0 %v1415
    %v2023 = vpop.f32.mrf.mxu0
    %v2024 = vadd.f32 0.0, %v2023
    %v2025 = vpop.f32.mrf.mxu0
    %v2026 = vadd.f32 0.0, %v2025
    %2027 = vdwg.mxu0
    %2028 = vmatprep.subr.mxu0 0.0
    %2029 = vmatpush1.xpose.msra.mxu0 %v1907
    %2030 = vmatprep.subr.mxu0 0.0
    %2031 = vmatpush1.xpose.msra.mxu0 %v1904
    %2032 = vmatprep.subr.mxu0 0.0
    %2033 = vmatpush1.xpose.msra.mxu0 %v1901
    %2034 = vmatprep.subr.mxu0 0.0
    %2035 = vmatpush1.xpose.msra.mxu0 %v1898
    %2036 = vmatprep.subr.mxu0 0.0
    %2037 = vmatpush1.xpose.msra.mxu0 %v1895
    %2038 = vmatprep.subr.mxu0 0.0
    %2039 = vmatpush1.xpose.msra.mxu0 %v1892
    %2040 = vmatprep.subr.mxu0 0.0
    %2041 = vmatpush1.xpose.msra.mxu0 %v1889
    %2042 = vmatprep.subr.mxu0 0.0
    %2043 = vmatpush1.xpose.msra.mxu0 %v1886
    %2044 = vmatprep.subr.mxu0 0.0
    %2045 = vmatpush1.xpose.msra.mxu0 %v1883
    %2046 = vmatprep.subr.mxu0 0.0
    %2047 = vmatpush1.xpose.msra.mxu0 %v1880
    %2048 = vmatprep.subr.mxu0 0.0
    %2049 = vmatpush1.xpose.msra.mxu0 %v1877
    %2050 = vmatprep.subr.mxu0 0.0
    %2051 = vmatpush1.xpose.msra.mxu0 %v1874
    %2052 = vmatprep.subr.mxu0 0.0
    %2053 = vmatpush1.xpose.msra.mxu0 %v1871
    %2054 = vmatprep.subr.mxu0 0.0
    %2055 = vmatpush1.xpose.msra.mxu0 %v1868
    %2056 = vmatprep.subr.mxu0 0.0
    %2057 = vmatpush1.xpose.msra.mxu0 %v1865
    %2058 = vmatprep.subr.mxu0 0.0
    %2059 = vmatpush1.xpose.msra.mxu0 %v1862
    %2060 = vmatprep.subr.mxu0 0.0
    %2061 = vmatpush2.xpose.msra.mxu0 %v1955
    %2062 = vmatprep.subr.mxu0 0.0
    %2063 = vmatpush2.xpose.msra.mxu0 %v1952
    %2064 = vmatprep.subr.mxu0 0.0
    %2065 = vmatpush2.xpose.msra.mxu0 %v1949
    %2066 = vmatprep.subr.mxu0 0.0
    %2067 = vmatpush2.xpose.msra.mxu0 %v1946
    %2068 = vmatprep.subr.mxu0 0.0
    %2069 = vmatpush2.xpose.msra.mxu0 %v1943
    %2070 = vmatprep.subr.mxu0 0.0
    %2071 = vmatpush2.xpose.msra.mxu0 %v1940
    %2072 = vmatprep.subr.mxu0 0.0
    %2073 = vmatpush2.xpose.msra.mxu0 %v1937
    %2074 = vmatprep.subr.mxu0 0.0
    %2075 = vmatpush2.xpose.msra.mxu0 %v1934
    %2076 = vmatprep.subr.mxu0 0.0
    %2077 = vmatpush2.xpose.msra.mxu0 %v1931
    %2078 = vmatprep.subr.mxu0 0.0
    %2079 = vmatpush2.xpose.msra.mxu0 %v1928
    %2080 = vmatprep.subr.mxu0 0.0
    %2081 = vmatpush2.xpose.msra.mxu0 %v1925
    %2082 = vmatprep.subr.mxu0 0.0
    %2083 = vmatpush2.xpose.msra.mxu0 %v1922
    %2084 = vmatprep.subr.mxu0 0.0
    %2085 = vmatpush2.xpose.msra.mxu0 %v1919
    %2086 = vmatprep.subr.mxu0 0.0
    %2087 = vmatpush2.xpose.msra.mxu0 %v1916
    %2088 = vmatprep.subr.mxu0 0.0
    %2089 = vmatpush2.xpose.msra.mxu0 %v1913
    %2090 = vmatprep.subr.mxu0 0.0
    %2091 = vmatpush2.xpose.msra.mxu0 %v1910
    %2092 = vmatprep.mubr.f32.mxu0 0.0
    %2093 = vmatmul.mubr.f32.gmra.mxu0 %v1859
    %v2094 = vpop.f32.mrf.mxu0
    %v2095 = vadd.f32 %v2024, %v2094
    %v2096 = vpop.f32.mrf.mxu0
    %v2097 = vadd.f32 %v2026, %v2096
    %2098 = vdwg.mxu0
    %v2099 = vadd.f32 %v1760, %v2095
    %v2100 = vadd.f32 %v1761, %v2097
    %2101 = vst [vmem:[%s8] sm:$0xff] %v2099
    %2102 = vst [vmem:[%s8 + $0x8] sm:$0xff] %v2100
    %s2103 = scalar_lea.vmem %s0, 20
    %v2104 = vld [vmem:[%s2103] sm:$0xff]
    %v2105 = vld [vmem:[%s2103 + $0x8] sm:$0xff]
    %v2106 = vld [vmem:[%s2103 + $0x10] sm:$0xf]
    %v2109 = vcombine.high %v2104, %v2104
    %v2110 = vcombine.high %v2105, %v2105
    %v2113 = vcombine.low %v2104, %v2104
    %v2114 = vcombine.low %v2105, %v2105
    %2115 = vrot.lane.b32.xlu0 %v2113, 127
    %v2116 = vpop.permute.xlu0 %2115
    %2117 = vrot.lane.b32.xlu0 %v2104, 127
    %v2118 = vpop.permute.xlu0 %2117
    %2119 = vrot.lane.b32.xlu0 %v2114, 127
    %v2120 = vpop.permute.xlu0 %2119
    %2121 = vrot.lane.b32.xlu0 %v2105, 127
    %v2122 = vpop.permute.xlu0 %2121
    %v2123 = vsel %vm63, %v2116, %v2118
    %v2124 = vsel %vm63, %v2118, %v2120
    %v2125 = vsel %vm63, %v2120, %v2122
    %2130 = vrot.lane.b32.xlu0 %v2104, 126
    %v2131 = vpop.permute.xlu0 %2130
    %2132 = vrot.lane.b32.xlu0 %v2109, 126
    %v2133 = vpop.permute.xlu0 %2132
    %2134 = vrot.lane.b32.xlu0 %v2105, 126
    %v2135 = vpop.permute.xlu0 %2134
    %2136 = vrot.lane.b32.xlu0 %v2110, 126
    %v2137 = vpop.permute.xlu0 %2136
    %v2138 = vsel %vm79, %v2131, %v2133
    %v2139 = vsel %vm79, %v2133, %v2135
    %v2140 = vsel %vm79, %v2135, %v2137
    %2145 = vrot.lane.b32.xlu0 %v2113, 104
    %v2146 = vpop.permute.xlu0 %2145
    %2147 = vrot.lane.b32.xlu0 %v2104, 104
    %v2148 = vpop.permute.xlu0 %2147
    %2149 = vrot.lane.b32.xlu0 %v2114, 104
    %v2150 = vpop.permute.xlu0 %2149
    %2151 = vrot.lane.b32.xlu0 %v2105, 104
    %v2152 = vpop.permute.xlu0 %2151
    %v2153 = vsel %vm95, %v2146, %v2148
    %v2154 = vsel %vm95, %v2148, %v2150
    %v2155 = vsel %vm95, %v2150, %v2152
    %2160 = vrot.lane.b32.xlu0 %v2104, 103
    %v2161 = vpop.permute.xlu0 %2160
    %2162 = vrot.lane.b32.xlu0 %v2109, 103
    %v2163 = vpop.permute.xlu0 %2162
    %2164 = vrot.lane.b32.xlu0 %v2105, 103
    %v2165 = vpop.permute.xlu0 %2164
    %2166 = vrot.lane.b32.xlu0 %v2110, 103
    %v2167 = vpop.permute.xlu0 %2166
    %v2168 = vsel %vm111, %v2161, %v2163
    %v2169 = vsel %vm111, %v2163, %v2165
    %v2170 = vsel %vm111, %v2165, %v2167
    %2175 = vrot.lane.b32.xlu0 %v2113, 102
    %v2176 = vpop.permute.xlu0 %2175
    %2177 = vrot.lane.b32.xlu0 %v2104, 102
    %v2178 = vpop.permute.xlu0 %2177
    %2179 = vrot.lane.b32.xlu0 %v2114, 102
    %v2180 = vpop.permute.xlu0 %2179
    %2181 = vrot.lane.b32.xlu0 %v2105, 102
    %v2182 = vpop.permute.xlu0 %2181
    %v2183 = vsel %vm127, %v2176, %v2178
    %v2184 = vsel %vm127, %v2178, %v2180
    %v2185 = vsel %vm127, %v2180, %v2182
    %2190 = vrot.lane.b32.xlu0 %v2104, 80
    %v2191 = vpop.permute.xlu0 %2190
    %2192 = vrot.lane.b32.xlu0 %v2109, 80
    %v2193 = vpop.permute.xlu0 %2192
    %2194 = vrot.lane.b32.xlu0 %v2105, 80
    %v2195 = vpop.permute.xlu0 %2194
    %2196 = vrot.lane.b32.xlu0 %v2110, 80
    %v2197 = vpop.permute.xlu0 %2196
    %v2198 = vsel %vm143, %v2191, %v2193
    %v2199 = vsel %vm143, %v2193, %v2195
    %v2200 = vsel %vm143, %v2195, %v2197
    %2205 = vrot.lane.b32.xlu0 %v2113, 79
    %v2206 = vpop.permute.xlu0 %2205
    %2207 = vrot.lane.b32.xlu0 %v2104, 79
    %v2208 = vpop.permute.xlu0 %2207
    %2209 = vrot.lane.b32.xlu0 %v2114, 79
    %v2210 = vpop.permute.xlu0 %2209
    %2211 = vrot.lane.b32.xlu0 %v2105, 79
    %v2212 = vpop.permute.xlu0 %2211
    %v2213 = vsel %vm159, %v2206, %v2208
    %v2214 = vsel %vm159, %v2208, %v2210
    %v2215 = vsel %vm159, %v2210, %v2212
    %2220 = vrot.lane.b32.xlu0 %v2104, 78
    %v2221 = vpop.permute.xlu0 %2220
    %2222 = vrot.lane.b32.xlu0 %v2109, 78
    %v2223 = vpop.permute.xlu0 %2222
    %2224 = vrot.lane.b32.xlu0 %v2105, 78
    %v2225 = vpop.permute.xlu0 %2224
    %2226 = vrot.lane.b32.xlu0 %v2110, 78
    %v2227 = vpop.permute.xlu0 %2226
    %v2228 = vsel %vm175, %v2221, %v2223
    %v2229 = vsel %vm175, %v2223, %v2225
    %v2230 = vsel %vm175, %v2225, %v2227
    %v2231 = vsel %vm179, %v2104, %v2123
    %v2232 = vsel %vm179, %v2109, %v2124
    %v2233 = vsel %vm179, %v2105, %v2125
    %v2234 = vsel %vm179, %v2110, %v2122
    %v2235 = vsel %vm179, %v2138, %v2153
    %v2236 = vsel %vm179, %v2139, %v2154
    %v2237 = vsel %vm179, %v2140, %v2155
    %v2238 = vsel %vm179, %v2137, %v2152
    %v2239 = vsel %vm179, %v2168, %v2183
    %v2240 = vsel %vm179, %v2169, %v2184
    %v2241 = vsel %vm179, %v2170, %v2185
    %v2242 = vsel %vm179, %v2167, %v2182
    %v2243 = vsel %vm179, %v2198, %v2213
    %v2244 = vsel %vm179, %v2199, %v2214
    %v2245 = vsel %vm179, %v2200, %v2215
    %v2246 = vsel %vm179, %v2197, %v2212
    %v2247 = vld [vmem:[%s1] sm:$0xff]
    %2264 = vrot.lane.b32.xlu0 %v2231, 53
    %v2265 = vpop.permute.xlu0 %2264
    %2266 = vrot.lane.b32.xlu0 %v2232, 53
    %v2267 = vpop.permute.xlu0 %2266
    %2268 = vrot.lane.b32.xlu0 %v2233, 53
    %v2269 = vpop.permute.xlu0 %2268
    %2270 = vrot.lane.b32.xlu0 %v2234, 53
    %v2271 = vpop.permute.xlu0 %2270
    %2272 = vrot.lane.b32.xlu0 %v2235, 53
    %v2273 = vpop.permute.xlu0 %2272
    %2274 = vrot.lane.b32.xlu0 %v2236, 53
    %v2275 = vpop.permute.xlu0 %2274
    %2276 = vrot.lane.b32.xlu0 %v2237, 53
    %v2277 = vpop.permute.xlu0 %2276
    %2278 = vrot.lane.b32.xlu0 %v2238, 53
    %v2279 = vpop.permute.xlu0 %2278
    %2280 = vrot.lane.b32.xlu0 %v2239, 53
    %v2281 = vpop.permute.xlu0 %2280
    %2282 = vrot.lane.b32.xlu0 %v2240, 53
    %v2283 = vpop.permute.xlu0 %2282
    %2284 = vrot.lane.b32.xlu0 %v2241, 53
    %v2285 = vpop.permute.xlu0 %2284
    %2286 = vrot.lane.b32.xlu0 %v2242, 53
    %v2287 = vpop.permute.xlu0 %2286
    %2288 = vrot.lane.b32.xlu0 %v2243, 53
    %v2289 = vpop.permute.xlu0 %2288
    %2290 = vrot.lane.b32.xlu0 %v2244, 53
    %v2291 = vpop.permute.xlu0 %2290
    %2292 = vrot.lane.b32.xlu0 %v2245, 53
    %v2293 = vpop.permute.xlu0 %2292
    %2294 = vrot.lane.b32.xlu0 %v2246, 53
    %v2295 = vpop.permute.xlu0 %2294
    %2296 = vrot.lane.b32.xlu0 %v2228, 53
    %v2297 = vpop.permute.xlu0 %2296
    %2298 = vrot.lane.b32.xlu0 %v2229, 53
    %v2299 = vpop.permute.xlu0 %2298
    %2300 = vrot.lane.b32.xlu0 %v2230, 53
    %v2301 = vpop.permute.xlu0 %2300
    %2302 = vrot.lane.b32.xlu0 %v2227, 53
    %v2303 = vpop.permute.xlu0 %2302
    %v2304 = vsel %vm253, %v2265, %v2267
    %v2305 = vsel %vm253, %v2267, %v2269
    %v2306 = vsel %vm253, %v2269, %v2271
    %v2307 = vsel %vm253, %v2273, %v2275
    %v2308 = vsel %vm253, %v2275, %v2277
    %v2309 = vsel %vm253, %v2277, %v2279
    %v2310 = vsel %vm253, %v2281, %v2283
    %v2311 = vsel %vm253, %v2283, %v2285
    %v2312 = vsel %vm253, %v2285, %v2287
    %v2313 = vsel %vm253, %v2289, %v2291
    %v2314 = vsel %vm253, %v2291, %v2293
    %v2315 = vsel %vm253, %v2293, %v2295
    %v2316 = vsel %vm253, %v2297, %v2299
    %v2317 = vsel %vm253, %v2299, %v2301
    %v2318 = vsel %vm253, %v2301, %v2303
    %v2332 = vsel %vm281, %v2247, 0
    %v2334 = vsel %vm179, %v2316, 0
    %v2336 = vsel %vm179, %v2317, 0
    %v2338 = vsel %vm179, %v2318, 0
    %2340 = vmatprep.subr.mxu0 0.0
    %2341 = vmatpush1.msra.mxu0 0.0
    %2342 = vmatprep.subr.mxu0 0.0
    %2343 = vmatpush1.msra.mxu0 0.0
    %2344 = vmatprep.subr.mxu0 0.0
    %2345 = vmatpush1.msra.mxu0 0.0
    %2346 = vmatprep.subr.mxu0 0.0
    %2347 = vmatpush1.msra.mxu0 0.0
    %2348 = vmatprep.subr.mxu0 0.0
    %2349 = vmatpush1.msra.mxu0 0.0
    %2350 = vmatprep.subr.mxu0 0.0
    %2351 = vmatpush1.msra.mxu0 0.0
    %2352 = vmatprep.subr.mxu0 0.0
    %2353 = vmatpush1.msra.mxu0 0.0
    %2354 = vmatprep.subr.mxu0 0.0
    %2355 = vmatpush1.msra.mxu0 0.0
    %2356 = vmatprep.subr.mxu0 0.0
    %2357 = vmatpush1.msra.mxu0 0.0
    %2358 = vmatprep.subr.mxu0 0.0
    %2359 = vmatpush1.msra.mxu0 0.0
    %2360 = vmatprep.subr.mxu0 0.0
    %2361 = vmatpush1.msra.mxu0 0.0
    %2362 = vmatprep.subr.mxu0 %v2336
    %2363 = vmatpush1.msra.mxu0 %v2334
    %2364 = vmatprep.subr.mxu0 %v2314
    %2365 = vmatpush1.msra.mxu0 %v2313
    %2366 = vmatprep.subr.mxu0 %v2311
    %2367 = vmatpush1.msra.mxu0 %v2310
    %2368 = vmatprep.subr.mxu0 %v2308
    %2369 = vmatpush1.msra.mxu0 %v2307
    %2370 = vmatprep.subr.mxu0 %v2305
    %2371 = vmatpush1.msra.mxu0 %v2304
    %2372 = vmatprep.subr.mxu0 0.0
    %2373 = vmatpush2.msra.mxu0 0.0
    %2374 = vmatprep.subr.mxu0 0.0
    %2375 = vmatpush2.msra.mxu0 0.0
    %2376 = vmatprep.subr.mxu0 0.0
    %2377 = vmatpush2.msra.mxu0 0.0
    %2378 = vmatprep.subr.mxu0 0.0
    %2379 = vmatpush2.msra.mxu0 0.0
    %2380 = vmatprep.subr.mxu0 0.0
    %2381 = vmatpush2.msra.mxu0 0.0
    %2382 = vmatprep.subr.mxu0 0.0
    %2383 = vmatpush2.msra.mxu0 0.0
    %2384 = vmatprep.subr.mxu0 0.0
    %2385 = vmatpush2.msra.mxu0 0.0
    %2386 = vmatprep.subr.mxu0 0.0
    %2387 = vmatpush2.msra.mxu0 0.0
    %2388 = vmatprep.subr.mxu0 0.0
    %2389 = vmatpush2.msra.mxu0 0.0
    %2390 = vmatprep.subr.mxu0 0.0
    %2391 = vmatpush2.msra.mxu0 0.0
    %2392 = vmatprep.subr.mxu0 0.0
    %2393 = vmatpush2.msra.mxu0 0.0
    %2394 = vmatprep.subr.mxu0 0.0
    %2395 = vmatpush2.msra.mxu0 0.0
    %2396 = vmatprep.subr.mxu0 0.0
    %2397 = vmatpush2.msra.mxu0 0.0
    %2398 = vmatprep.subr.mxu0 0.0
    %2399 = vmatpush2.msra.mxu0 0.0
    %2400 = vmatprep.subr.mxu0 0.0
    %2401 = vmatpush2.msra.mxu0 0.0
    %2402 = vmatprep.subr.mxu0 0.0
    %2403 = vmatpush2.msra.mxu0 0.0
    %2404 = vmatprep.mubr.f32.mxu0 0.0
    %2405 = vmatmul.mubr.f32.gmra.mxu0 %v2332
    %v2406 = vpop.f32.mrf.mxu0
    %v2407 = vadd.f32 0.0, %v2406
    %v2408 = vpop.f32.mrf.mxu0
    %v2409 = vadd.f32 0.0, %v2408
    %2410 = vdwg.mxu0
    %2411 = vmatprep.subr.mxu0 0.0
    %2412 = vmatpush1.msra.mxu0 0.0
    %2413 = vmatprep.subr.mxu0 0.0
    %2414 = vmatpush1.msra.mxu0 0.0
    %2415 = vmatprep.subr.mxu0 0.0
    %2416 = vmatpush1.msra.mxu0 0.0
    %2417 = vmatprep.subr.mxu0 0.0
    %2418 = vmatpush1.msra.mxu0 0.0
    %2419 = vmatprep.subr.mxu0 0.0
    %2420 = vmatpush1.msra.mxu0 0.0
    %2421 = vmatprep.subr.mxu0 0.0
    %2422 = vmatpush1.msra.mxu0 0.0
    %2423 = vmatprep.subr.mxu0 0.0
    %2424 = vmatpush1.msra.mxu0 0.0
    %2425 = vmatprep.subr.mxu0 0.0
    %2426 = vmatpush1.msra.mxu0 0.0
    %2427 = vmatprep.subr.mxu0 0.0
    %2428 = vmatpush1.msra.mxu0 0.0
    %2429 = vmatprep.subr.mxu0 0.0
    %2430 = vmatpush1.msra.mxu0 0.0
    %2431 = vmatprep.subr.mxu0 0.0
    %2432 = vmatpush1.msra.mxu0 0.0
    %2433 = vmatprep.subr.mxu0 0.0
    %2434 = vmatpush1.msra.mxu0 %v2338
    %2435 = vmatprep.subr.mxu0 0.0
    %2436 = vmatpush1.msra.mxu0 %v2315
    %2437 = vmatprep.subr.mxu0 0.0
    %2438 = vmatpush1.msra.mxu0 %v2312
    %2439 = vmatprep.subr.mxu0 0.0
    %2440 = vmatpush1.msra.mxu0 %v2309
    %2441 = vmatprep.subr.mxu0 0.0
    %2442 = vmatpush1.msra.mxu0 %v2306
    %2443 = vmatprep.subr.mxu0 0.0
    %2444 = vmatpush2.msra.mxu0 0.0
    %2445 = vmatprep.subr.mxu0 0.0
    %2446 = vmatpush2.msra.mxu0 0.0
    %2447 = vmatprep.subr.mxu0 0.0
    %2448 = vmatpush2.msra.mxu0 0.0
    %2449 = vmatprep.subr.mxu0 0.0
    %2450 = vmatpush2.msra.mxu0 0.0
    %2451 = vmatprep.subr.mxu0 0.0
    %2452 = vmatpush2.msra.mxu0 0.0
    %2453 = vmatprep.subr.mxu0 0.0
    %2454 = vmatpush2.msra.mxu0 0.0
    %2455 = vmatprep.subr.mxu0 0.0
    %2456 = vmatpush2.msra.mxu0 0.0
    %2457 = vmatprep.subr.mxu0 0.0
    %2458 = vmatpush2.msra.mxu0 0.0
    %2459 = vmatprep.subr.mxu0 0.0
    %2460 = vmatpush2.msra.mxu0 0.0
    %2461 = vmatprep.subr.mxu0 0.0
    %2462 = vmatpush2.msra.mxu0 0.0
    %2463 = vmatprep.subr.mxu0 0.0
    %2464 = vmatpush2.msra.mxu0 0.0
    %2465 = vmatprep.subr.mxu0 0.0
    %2466 = vmatpush2.msra.mxu0 0.0
    %2467 = vmatprep.subr.mxu0 0.0
    %2468 = vmatpush2.msra.mxu0 0.0
    %2469 = vmatprep.subr.mxu0 0.0
    %2470 = vmatpush2.msra.mxu0 0.0
    %2471 = vmatprep.subr.mxu0 0.0
    %2472 = vmatpush2.msra.mxu0 0.0
    %2473 = vmatprep.subr.mxu0 0.0
    %2474 = vmatpush2.msra.mxu0 0.0
    %2475 = vmatprep.mubr.f32.mxu0 0.0
    %2476 = vmatmul.mubr.f32.gmra.mxu0 %v2332
    %v2477 = vpop.f32.mrf.mxu0
    %v2478 = vadd.f32 0.0, %v2477
    %v2479 = vpop.f32.mrf.mxu0
    %2480 = vdwg.mxu0
    %2481 = vrot.lane.b32.xlu0 %v2113, 126
    %v2482 = vpop.permute.xlu0 %2481
    %2483 = vrot.lane.b32.xlu0 %v2114, 126
    %v2484 = vpop.permute.xlu0 %2483
    %v2485 = vsel %vm79, %v2482, %v2131
    %v2486 = vsel %vm79, %v2131, %v2484
    %v2487 = vsel %vm79, %v2484, %v2135
    %2492 = vrot.lane.b32.xlu0 %v2104, 124
    %v2493 = vpop.permute.xlu0 %2492
    %2494 = vrot.lane.b32.xlu0 %v2109, 124
    %v2495 = vpop.permute.xlu0 %2494
    %2496 = vrot.lane.b32.xlu0 %v2105, 124
    %v2497 = vpop.permute.xlu0 %2496
    %2498 = vrot.lane.b32.xlu0 %v2110, 124
    %v2499 = vpop.permute.xlu0 %2498
    %v2500 = vsel %vm451, %v2493, %v2495
    %v2501 = vsel %vm451, %v2495, %v2497
    %v2502 = vsel %vm451, %v2497, %v2499
    %2507 = vrot.lane.b32.xlu0 %v2113, 80
    %v2508 = vpop.permute.xlu0 %2507
    %2509 = vrot.lane.b32.xlu0 %v2114, 80
    %v2510 = vpop.permute.xlu0 %2509
    %v2511 = vsel %vm143, %v2508, %v2191
    %v2512 = vsel %vm143, %v2191, %v2510
    %v2513 = vsel %vm143, %v2510, %v2195
    %2522 = vrot.lane.b32.xlu0 %v2113, 76
    %v2523 = vpop.permute.xlu0 %2522
    %2524 = vrot.lane.b32.xlu0 %v2104, 76
    %v2525 = vpop.permute.xlu0 %2524
    %2526 = vrot.lane.b32.xlu0 %v2114, 76
    %v2527 = vpop.permute.xlu0 %2526
    %2528 = vrot.lane.b32.xlu0 %v2105, 76
    %v2529 = vpop.permute.xlu0 %2528
    %v2530 = vsel %vm482, %v2523, %v2525
    %v2531 = vsel %vm482, %v2525, %v2527
    %v2532 = vsel %vm482, %v2527, %v2529
    %2538 = vrot.lane.b32.xlu0 %v2109, 32
    %v2539 = vpop.permute.xlu0 %2538
    %2540 = vrot.lane.b32.xlu0 %v2105, 32
    %v2541 = vpop.permute.xlu0 %2540
    %2542 = vrot.lane.b32.xlu0 %v2110, 32
    %v2543 = vpop.permute.xlu0 %2542
    %2544 = vrot.lane.b32.xlu0 %v2106, 32
    %v2545 = vpop.permute.xlu0 %2544
    %v2546 = vsel %vm499, %v2539, %v2541
    %v2547 = vsel %vm499, %v2541, %v2543
    %v2548 = vsel %vm499, %v2543, %v2545
    %v2553 = vcombine.low %v2106, %v2106
    %2554 = vrot.lane.b32.xlu0 %v2104, 30
    %v2555 = vpop.permute.xlu0 %2554
    %2556 = vrot.lane.b32.xlu0 %v2114, 30
    %v2557 = vpop.permute.xlu0 %2556
    %2558 = vrot.lane.b32.xlu0 %v2105, 30
    %v2559 = vpop.permute.xlu0 %2558
    %2560 = vrot.lane.b32.xlu0 %v2553, 30
    %v2561 = vpop.permute.xlu0 %2560
    %v2562 = vsel %vm516, %v2555, %v2557
    %v2563 = vsel %vm516, %v2557, %v2559
    %v2564 = vsel %vm516, %v2559, %v2561
    %2569 = vrot.lane.b32.xlu0 %v2109, 28
    %v2570 = vpop.permute.xlu0 %2569
    %2571 = vrot.lane.b32.xlu0 %v2105, 28
    %v2572 = vpop.permute.xlu0 %2571
    %2573 = vrot.lane.b32.xlu0 %v2110, 28
    %v2574 = vpop.permute.xlu0 %2573
    %2575 = vrot.lane.b32.xlu0 %v2106, 28
    %v2576 = vpop.permute.xlu0 %2575
    %v2577 = vsel %vm532, %v2570, %v2572
    %v2578 = vsel %vm532, %v2572, %v2574
    %v2579 = vsel %vm532, %v2574, %v2576
    %v2580 = vsel %vm179, %v2104, %v2485
    %v2581 = vsel %vm179, %v2109, %v2486
    %v2582 = vsel %vm179, %v2105, %v2487
    %v2583 = vsel %vm179, %v2110, %v2135
    %v2584 = vsel %vm179, %v2500, %v2511
    %v2585 = vsel %vm179, %v2501, %v2512
    %v2586 = vsel %vm179, %v2502, %v2513
    %v2587 = vsel %vm179, %v2499, %v2195
    %v2588 = vsel %vm179, %v2228, %v2530
    %v2589 = vsel %vm179, %v2229, %v2531
    %v2590 = vsel %vm179, %v2230, %v2532
    %v2591 = vsel %vm179, %v2227, %v2529
    %v2592 = vsel %vm179, %v2539, %v2555
    %v2593 = vsel %vm179, %v2546, %v2562
    %v2594 = vsel %vm179, %v2547, %v2563
    %v2595 = vsel %vm179, %v2548, %v2564
    %v2596 = vld [vmem:[%s2] sm:$0xff]
    %2597 = vrot.lane.b32.xlu0 %v2113, 125
    %v2598 = vpop.permute.xlu0 %2597
    %2599 = vrot.lane.b32.xlu0 %v2104, 125
    %v2600 = vpop.permute.xlu0 %2599
    %2601 = vrot.lane.b32.xlu0 %v2114, 125
    %v2602 = vpop.permute.xlu0 %2601
    %2603 = vrot.lane.b32.xlu0 %v2105, 125
    %v2604 = vpop.permute.xlu0 %2603
    %v2605 = vsel %vm561, %v2598, %v2600
    %v2606 = vsel %vm561, %v2600, %v2602
    %v2607 = vsel %vm561, %v2602, %v2604
    %2612 = vrot.lane.b32.xlu0 %v2104, 122
    %v2613 = vpop.permute.xlu0 %2612
    %2614 = vrot.lane.b32.xlu0 %v2109, 122
    %v2615 = vpop.permute.xlu0 %2614
    %2616 = vrot.lane.b32.xlu0 %v2105, 122
    %v2617 = vpop.permute.xlu0 %2616
    %2618 = vrot.lane.b32.xlu0 %v2110, 122
    %v2619 = vpop.permute.xlu0 %2618
    %v2620 = vsel %vm577, %v2613, %v2615
    %v2621 = vsel %vm577, %v2615, %v2617
    %v2622 = vsel %vm577, %v2617, %v2619
    %2627 = vrot.lane.b32.xlu0 %v2113, 56
    %v2628 = vpop.permute.xlu0 %2627
    %2629 = vrot.lane.b32.xlu0 %v2104, 56
    %v2630 = vpop.permute.xlu0 %2629
    %2631 = vrot.lane.b32.xlu0 %v2114, 56
    %v2632 = vpop.permute.xlu0 %2631
    %2633 = vrot.lane.b32.xlu0 %v2105, 56
    %v2634 = vpop.permute.xlu0 %2633
    %v2635 = vsel %vm593, %v2628, %v2630
    %v2636 = vsel %vm593, %v2630, %v2632
    %v2637 = vsel %vm593, %v2632, %v2634
    %2642 = vrot.lane.b32.xlu0 %v2104, 53
    %v2643 = vpop.permute.xlu0 %2642
    %2644 = vrot.lane.b32.xlu0 %v2109, 53
    %v2645 = vpop.permute.xlu0 %2644
    %2646 = vrot.lane.b32.xlu0 %v2105, 53
    %v2647 = vpop.permute.xlu0 %2646
    %2648 = vrot.lane.b32.xlu0 %v2110, 53
    %v2649 = vpop.permute.xlu0 %2648
    %v2650 = vsel %vm253, %v2643, %v2645
    %v2651 = vsel %vm253, %v2645, %v2647
    %v2652 = vsel %vm253, %v2647, %v2649
    %2657 = vrot.lane.b32.xlu0 %v2113, 50
    %v2658 = vpop.permute.xlu0 %2657
    %2659 = vrot.lane.b32.xlu0 %v2104, 50
    %v2660 = vpop.permute.xlu0 %2659
    %2661 = vrot.lane.b32.xlu0 %v2114, 50
    %v2662 = vpop.permute.xlu0 %2661
    %2663 = vrot.lane.b32.xlu0 %v2105, 50
    %v2664 = vpop.permute.xlu0 %2663
    %v2665 = vsel %vm624, %v2658, %v2660
    %v2666 = vsel %vm624, %v2660, %v2662
    %v2667 = vsel %vm624, %v2662, %v2664
    %2672 = vrot.lane.b32.xlu0 %v2109, 112
    %v2673 = vpop.permute.xlu0 %2672
    %2674 = vrot.lane.b32.xlu0 %v2105, 112
    %v2675 = vpop.permute.xlu0 %2674
    %2676 = vrot.lane.b32.xlu0 %v2110, 112
    %v2677 = vpop.permute.xlu0 %2676
    %2678 = vrot.lane.b32.xlu0 %v2106, 112
    %v2679 = vpop.permute.xlu0 %2678
    %v2680 = vsel %vm640, %v2673, %v2675
    %v2681 = vsel %vm640, %v2675, %v2677
    %v2682 = vsel %vm640, %v2677, %v2679
    %2687 = vrot.lane.b32.xlu0 %v2104, 109
    %v2688 = vpop.permute.xlu0 %2687
    %2689 = vrot.lane.b32.xlu0 %v2114, 109
    %v2690 = vpop.permute.xlu0 %2689
    %2691 = vrot.lane.b32.xlu0 %v2105, 109
    %v2692 = vpop.permute.xlu0 %2691
    %2693 = vrot.lane.b32.xlu0 %v2553, 109
    %v2694 = vpop.permute.xlu0 %2693
    %v2695 = vsel %vm656, %v2688, %v2690
    %v2696 = vsel %vm656, %v2690, %v2692
    %v2697 = vsel %vm656, %v2692, %v2694
    %2702 = vrot.lane.b32.xlu0 %v2109, 106
    %v2703 = vpop.permute.xlu0 %2702
    %2704 = vrot.lane.b32.xlu0 %v2105, 106
    %v2705 = vpop.permute.xlu0 %2704
    %2706 = vrot.lane.b32.xlu0 %v2110, 106
    %v2707 = vpop.permute.xlu0 %2706
    %2708 = vrot.lane.b32.xlu0 %v2106, 106
    %v2709 = vpop.permute.xlu0 %2708
    %v2710 = vsel %vm672, %v2703, %v2705
    %v2711 = vsel %vm672, %v2705, %v2707
    %v2712 = vsel %vm672, %v2707, %v2709
    %v2713 = vsel %vm179, %v2104, %v2605
    %v2714 = vsel %vm179, %v2109, %v2606
    %v2715 = vsel %vm179, %v2105, %v2607
    %v2716 = vsel %vm179, %v2110, %v2604
    %v2717 = vsel %vm179, %v2620, %v2635
    %v2718 = vsel %vm179, %v2621, %v2636
    %v2719 = vsel %vm179, %v2622, %v2637
    %v2720 = vsel %vm179, %v2619, %v2634
    %v2721 = vsel %vm179, %v2650, %v2665
    %v2722 = vsel %vm179, %v2651, %v2666
    %v2723 = vsel %vm179, %v2652, %v2667
    %v2724 = vsel %vm179, %v2649, %v2664
    %v2725 = vsel %vm179, %v2680, %v2695
    %v2726 = vsel %vm179, %v2681, %v2696
    %v2727 = vsel %vm179, %v2682, %v2697
    %v2728 = vsel %vm179, %v2679, %v2694
    %v2729 = vld [vmem:[%s3] sm:$0xff]
    %2746 = vrot.lane.b32.xlu0 %v2713, 103
    %v2747 = vpop.permute.xlu0 %2746
    %2748 = vrot.lane.b32.xlu0 %v2714, 103
    %v2749 = vpop.permute.xlu0 %2748
    %2750 = vrot.lane.b32.xlu0 %v2715, 103
    %v2751 = vpop.permute.xlu0 %2750
    %2752 = vrot.lane.b32.xlu0 %v2716, 103
    %v2753 = vpop.permute.xlu0 %2752
    %2754 = vrot.lane.b32.xlu0 %v2717, 103
    %v2755 = vpop.permute.xlu0 %2754
    %2756 = vrot.lane.b32.xlu0 %v2718, 103
    %v2757 = vpop.permute.xlu0 %2756
    %2758 = vrot.lane.b32.xlu0 %v2719, 103
    %v2759 = vpop.permute.xlu0 %2758
    %2760 = vrot.lane.b32.xlu0 %v2720, 103
    %v2761 = vpop.permute.xlu0 %2760
    %2762 = vrot.lane.b32.xlu0 %v2721, 103
    %v2763 = vpop.permute.xlu0 %2762
    %2764 = vrot.lane.b32.xlu0 %v2722, 103
    %v2765 = vpop.permute.xlu0 %2764
    %2766 = vrot.lane.b32.xlu0 %v2723, 103
    %v2767 = vpop.permute.xlu0 %2766
    %2768 = vrot.lane.b32.xlu0 %v2724, 103
    %v2769 = vpop.permute.xlu0 %2768
    %2770 = vrot.lane.b32.xlu0 %v2725, 103
    %v2771 = vpop.permute.xlu0 %2770
    %2772 = vrot.lane.b32.xlu0 %v2726, 103
    %v2773 = vpop.permute.xlu0 %2772
    %2774 = vrot.lane.b32.xlu0 %v2727, 103
    %v2775 = vpop.permute.xlu0 %2774
    %2776 = vrot.lane.b32.xlu0 %v2728, 103
    %v2777 = vpop.permute.xlu0 %2776
    %2778 = vrot.lane.b32.xlu0 %v2710, 103
    %v2779 = vpop.permute.xlu0 %2778
    %2780 = vrot.lane.b32.xlu0 %v2711, 103
    %v2781 = vpop.permute.xlu0 %2780
    %2782 = vrot.lane.b32.xlu0 %v2712, 103
    %v2783 = vpop.permute.xlu0 %2782
    %2784 = vrot.lane.b32.xlu0 %v2709, 103
    %v2785 = vpop.permute.xlu0 %2784
    %v2786 = vsel %vm111, %v2747, %v2749
    %v2787 = vsel %vm111, %v2749, %v2751
    %v2788 = vsel %vm111, %v2751, %v2753
    %v2789 = vsel %vm111, %v2755, %v2757
    %v2790 = vsel %vm111, %v2757, %v2759
    %v2791 = vsel %vm111, %v2759, %v2761
    %v2792 = vsel %vm111, %v2763, %v2765
    %v2793 = vsel %vm111, %v2765, %v2767
    %v2794 = vsel %vm111, %v2767, %v2769
    %v2795 = vsel %vm111, %v2771, %v2773
    %v2796 = vsel %vm111, %v2773, %v2775
    %v2797 = vsel %vm111, %v2775, %v2777
    %v2798 = vsel %vm111, %v2779, %v2781
    %v2799 = vsel %vm111, %v2781, %v2783
    %v2800 = vsel %vm111, %v2783, %v2785
    %v2814 = vsel %vm281, %v2729, 0
    %v2816 = vsel %vm179, %v2798, 0
    %v2818 = vsel %vm179, %v2799, 0
    %v2820 = vsel %vm179, %v2800, 0
    %2822 = vmatprep.subr.mxu0 0.0
    %2823 = vmatpush1.msra.mxu0 0.0
    %2824 = vmatprep.subr.mxu0 0.0
    %2825 = vmatpush1.msra.mxu0 0.0
    %2826 = vmatprep.subr.mxu0 0.0
    %2827 = vmatpush1.msra.mxu0 0.0
    %2828 = vmatprep.subr.mxu0 0.0
    %2829 = vmatpush1.msra.mxu0 0.0
    %2830 = vmatprep.subr.mxu0 0.0
    %2831 = vmatpush1.msra.mxu0 0.0
    %2832 = vmatprep.subr.mxu0 0.0
    %2833 = vmatpush1.msra.mxu0 0.0
    %2834 = vmatprep.subr.mxu0 0.0
    %2835 = vmatpush1.msra.mxu0 0.0
    %2836 = vmatprep.subr.mxu0 0.0
    %2837 = vmatpush1.msra.mxu0 0.0
    %2838 = vmatprep.subr.mxu0 0.0
    %2839 = vmatpush1.msra.mxu0 0.0
    %2840 = vmatprep.subr.mxu0 0.0
    %2841 = vmatpush1.msra.mxu0 0.0
    %2842 = vmatprep.subr.mxu0 0.0
    %2843 = vmatpush1.msra.mxu0 0.0
    %2844 = vmatprep.subr.mxu0 %v2818
    %2845 = vmatpush1.msra.mxu0 %v2816
    %2846 = vmatprep.subr.mxu0 %v2796
    %2847 = vmatpush1.msra.mxu0 %v2795
    %2848 = vmatprep.subr.mxu0 %v2793
    %2849 = vmatpush1.msra.mxu0 %v2792
    %2850 = vmatprep.subr.mxu0 %v2790
    %2851 = vmatpush1.msra.mxu0 %v2789
    %2852 = vmatprep.subr.mxu0 %v2787
    %2853 = vmatpush1.msra.mxu0 %v2786
    %2854 = vmatprep.subr.mxu0 0.0
    %2855 = vmatpush2.msra.mxu0 0.0
    %2856 = vmatprep.subr.mxu0 0.0
    %2857 = vmatpush2.msra.mxu0 0.0
    %2858 = vmatprep.subr.mxu0 0.0
    %2859 = vmatpush2.msra.mxu0 0.0
    %2860 = vmatprep.subr.mxu0 0.0
    %2861 = vmatpush2.msra.mxu0 0.0
    %2862 = vmatprep.subr.mxu0 0.0
    %2863 = vmatpush2.msra.mxu0 0.0
    %2864 = vmatprep.subr.mxu0 0.0
    %2865 = vmatpush2.msra.mxu0 0.0
    %2866 = vmatprep.subr.mxu0 0.0
    %2867 = vmatpush2.msra.mxu0 0.0
    %2868 = vmatprep.subr.mxu0 0.0
    %2869 = vmatpush2.msra.mxu0 0.0
    %2870 = vmatprep.subr.mxu0 0.0
    %2871 = vmatpush2.msra.mxu0 0.0
    %2872 = vmatprep.subr.mxu0 0.0
    %2873 = vmatpush2.msra.mxu0 0.0
    %2874 = vmatprep.subr.mxu0 0.0
    %2875 = vmatpush2.msra.mxu0 0.0
    %2876 = vmatprep.subr.mxu0 0.0
    %2877 = vmatpush2.msra.mxu0 0.0
    %2878 = vmatprep.subr.mxu0 0.0
    %2879 = vmatpush2.msra.mxu0 0.0
    %2880 = vmatprep.subr.mxu0 0.0
    %2881 = vmatpush2.msra.mxu0 0.0
    %2882 = vmatprep.subr.mxu0 0.0
    %2883 = vmatpush2.msra.mxu0 0.0
    %2884 = vmatprep.subr.mxu0 0.0
    %2885 = vmatpush2.msra.mxu0 0.0
    %2886 = vmatprep.mubr.f32.mxu0 0.0
    %2887 = vmatmul.mubr.f32.gmra.mxu0 %v2814
    %v2888 = vpop.f32.mrf.mxu0
    %v2889 = vadd.f32 0.0, %v2888
    %v2890 = vpop.f32.mrf.mxu0
    %v2891 = vadd.f32 0.0, %v2890
    %2892 = vdwg.mxu0
    %2893 = vmatprep.subr.mxu0 0.0
    %2894 = vmatpush1.msra.mxu0 0.0
    %2895 = vmatprep.subr.mxu0 0.0
    %2896 = vmatpush1.msra.mxu0 0.0
    %2897 = vmatprep.subr.mxu0 0.0
    %2898 = vmatpush1.msra.mxu0 0.0
    %2899 = vmatprep.subr.mxu0 0.0
    %2900 = vmatpush1.msra.mxu0 0.0
    %2901 = vmatprep.subr.mxu0 0.0
    %2902 = vmatpush1.msra.mxu0 0.0
    %2903 = vmatprep.subr.mxu0 0.0
    %2904 = vmatpush1.msra.mxu0 0.0
    %2905 = vmatprep.subr.mxu0 0.0
    %2906 = vmatpush1.msra.mxu0 0.0
    %2907 = vmatprep.subr.mxu0 0.0
    %2908 = vmatpush1.msra.mxu0 0.0
    %2909 = vmatprep.subr.mxu0 0.0
    %2910 = vmatpush1.msra.mxu0 0.0
    %2911 = vmatprep.subr.mxu0 0.0
    %2912 = vmatpush1.msra.mxu0 0.0
    %2913 = vmatprep.subr.mxu0 0.0
    %2914 = vmatpush1.msra.mxu0 0.0
    %2915 = vmatprep.subr.mxu0 0.0
    %2916 = vmatpush1.msra.mxu0 %v2820
    %2917 = vmatprep.subr.mxu0 0.0
    %2918 = vmatpush1.msra.mxu0 %v2797
    %2919 = vmatprep.subr.mxu0 0.0
    %2920 = vmatpush1.msra.mxu0 %v2794
    %2921 = vmatprep.subr.mxu0 0.0
    %2922 = vmatpush1.msra.mxu0 %v2791
    %2923 = vmatprep.subr.mxu0 0.0
    %2924 = vmatpush1.msra.mxu0 %v2788
    %2925 = vmatprep.subr.mxu0 0.0
    %2926 = vmatpush2.msra.mxu0 0.0
    %2927 = vmatprep.subr.mxu0 0.0
    %2928 = vmatpush2.msra.mxu0 0.0
    %2929 = vmatprep.subr.mxu0 0.0
    %2930 = vmatpush2.msra.mxu0 0.0
    %2931 = vmatprep.subr.mxu0 0.0
    %2932 = vmatpush2.msra.mxu0 0.0
    %2933 = vmatprep.subr.mxu0 0.0
    %2934 = vmatpush2.msra.mxu0 0.0
    %2935 = vmatprep.subr.mxu0 0.0
    %2936 = vmatpush2.msra.mxu0 0.0
    %2937 = vmatprep.subr.mxu0 0.0
    %2938 = vmatpush2.msra.mxu0 0.0
    %2939 = vmatprep.subr.mxu0 0.0
    %2940 = vmatpush2.msra.mxu0 0.0
    %2941 = vmatprep.subr.mxu0 0.0
    %2942 = vmatpush2.msra.mxu0 0.0
    %2943 = vmatprep.subr.mxu0 0.0
    %2944 = vmatpush2.msra.mxu0 0.0
    %2945 = vmatprep.subr.mxu0 0.0
    %2946 = vmatpush2.msra.mxu0 0.0
    %2947 = vmatprep.subr.mxu0 0.0
    %2948 = vmatpush2.msra.mxu0 0.0
    %2949 = vmatprep.subr.mxu0 0.0
    %2950 = vmatpush2.msra.mxu0 0.0
    %2951 = vmatprep.subr.mxu0 0.0
    %2952 = vmatpush2.msra.mxu0 0.0
    %2953 = vmatprep.subr.mxu0 0.0
    %2954 = vmatpush2.msra.mxu0 0.0
    %2955 = vmatprep.subr.mxu0 0.0
    %2956 = vmatpush2.msra.mxu0 0.0
    %2957 = vmatprep.mubr.f32.mxu0 0.0
    %2958 = vmatmul.mubr.f32.gmra.mxu0 %v2814
    %v2959 = vpop.f32.mrf.mxu0
    %v2960 = vadd.f32 0.0, %v2959
    %v2961 = vpop.f32.mrf.mxu0
    %2962 = vdwg.mxu0
    %2979 = vrot.lane.b32.xlu0 %v2580, 78
    %v2980 = vpop.permute.xlu0 %2979
    %2981 = vrot.lane.b32.xlu0 %v2581, 78
    %v2982 = vpop.permute.xlu0 %2981
    %2983 = vrot.lane.b32.xlu0 %v2582, 78
    %v2984 = vpop.permute.xlu0 %2983
    %2985 = vrot.lane.b32.xlu0 %v2583, 78
    %v2986 = vpop.permute.xlu0 %2985
    %2987 = vrot.lane.b32.xlu0 %v2584, 78
    %v2988 = vpop.permute.xlu0 %2987
    %2989 = vrot.lane.b32.xlu0 %v2585, 78
    %v2990 = vpop.permute.xlu0 %2989
    %2991 = vrot.lane.b32.xlu0 %v2586, 78
    %v2992 = vpop.permute.xlu0 %2991
    %2993 = vrot.lane.b32.xlu0 %v2587, 78
    %v2994 = vpop.permute.xlu0 %2993
    %2995 = vrot.lane.b32.xlu0 %v2588, 78
    %v2996 = vpop.permute.xlu0 %2995
    %2997 = vrot.lane.b32.xlu0 %v2589, 78
    %v2998 = vpop.permute.xlu0 %2997
    %2999 = vrot.lane.b32.xlu0 %v2590, 78
    %v3000 = vpop.permute.xlu0 %2999
    %3001 = vrot.lane.b32.xlu0 %v2591, 78
    %v3002 = vpop.permute.xlu0 %3001
    %3003 = vrot.lane.b32.xlu0 %v2592, 78
    %v3004 = vpop.permute.xlu0 %3003
    %3005 = vrot.lane.b32.xlu0 %v2593, 78
    %v3006 = vpop.permute.xlu0 %3005
    %3007 = vrot.lane.b32.xlu0 %v2594, 78
    %v3008 = vpop.permute.xlu0 %3007
    %3009 = vrot.lane.b32.xlu0 %v2595, 78
    %v3010 = vpop.permute.xlu0 %3009
    %3011 = vrot.lane.b32.xlu0 %v2570, 78
    %v3012 = vpop.permute.xlu0 %3011
    %3013 = vrot.lane.b32.xlu0 %v2577, 78
    %v3014 = vpop.permute.xlu0 %3013
    %3015 = vrot.lane.b32.xlu0 %v2578, 78
    %v3016 = vpop.permute.xlu0 %3015
    %3017 = vrot.lane.b32.xlu0 %v2579, 78
    %v3018 = vpop.permute.xlu0 %3017
    %v3019 = vsel %vm175, %v2980, %v2982
    %v3020 = vsel %vm175, %v2982, %v2984
    %v3021 = vsel %vm175, %v2984, %v2986
    %v3022 = vsel %vm175, %v2988, %v2990
    %v3023 = vsel %vm175, %v2990, %v2992
    %v3024 = vsel %vm175, %v2992, %v2994
    %v3025 = vsel %vm175, %v2996, %v2998
    %v3026 = vsel %vm175, %v2998, %v3000
    %v3027 = vsel %vm175, %v3000, %v3002
    %v3028 = vsel %vm175, %v3004, %v3006
    %v3029 = vsel %vm175, %v3006, %v3008
    %v3030 = vsel %vm175, %v3008, %v3010
    %v3031 = vsel %vm175, %v3012, %v3014
    %v3032 = vsel %vm175, %v3014, %v3016
    %v3033 = vsel %vm175, %v3016, %v3018
    %v3047 = vsel %vm281, %v2596, 0
    %v3049 = vsel %vm179, %v3031, 0
    %v3051 = vsel %vm179, %v3032, 0
    %v3053 = vsel %vm179, %v3033, 0
    %3055 = vmatprep.subr.mxu0 0.0
    %3056 = vmatpush1.msra.mxu0 0.0
    %3057 = vmatprep.subr.mxu0 0.0
    %3058 = vmatpush1.msra.mxu0 0.0
    %3059 = vmatprep.subr.mxu0 0.0
    %3060 = vmatpush1.msra.mxu0 0.0
    %3061 = vmatprep.subr.mxu0 0.0
    %3062 = vmatpush1.msra.mxu0 0.0
    %3063 = vmatprep.subr.mxu0 0.0
    %3064 = vmatpush1.msra.mxu0 0.0
    %3065 = vmatprep.subr.mxu0 0.0
    %3066 = vmatpush1.msra.mxu0 0.0
    %3067 = vmatprep.subr.mxu0 0.0
    %3068 = vmatpush1.msra.mxu0 0.0
    %3069 = vmatprep.subr.mxu0 0.0
    %3070 = vmatpush1.msra.mxu0 0.0
    %3071 = vmatprep.subr.mxu0 0.0
    %3072 = vmatpush1.msra.mxu0 0.0
    %3073 = vmatprep.subr.mxu0 0.0
    %3074 = vmatpush1.msra.mxu0 0.0
    %3075 = vmatprep.subr.mxu0 0.0
    %3076 = vmatpush1.msra.mxu0 0.0
    %3077 = vmatprep.subr.mxu0 %v3051
    %3078 = vmatpush1.msra.mxu0 %v3049
    %3079 = vmatprep.subr.mxu0 %v3029
    %3080 = vmatpush1.msra.mxu0 %v3028
    %3081 = vmatprep.subr.mxu0 %v3026
    %3082 = vmatpush1.msra.mxu0 %v3025
    %3083 = vmatprep.subr.mxu0 %v3023
    %3084 = vmatpush1.msra.mxu0 %v3022
    %3085 = vmatprep.subr.mxu0 %v3020
    %3086 = vmatpush1.msra.mxu0 %v3019
    %3087 = vmatprep.subr.mxu0 0.0
    %3088 = vmatpush2.msra.mxu0 0.0
    %3089 = vmatprep.subr.mxu0 0.0
    %3090 = vmatpush2.msra.mxu0 0.0
    %3091 = vmatprep.subr.mxu0 0.0
    %3092 = vmatpush2.msra.mxu0 0.0
    %3093 = vmatprep.subr.mxu0 0.0
    %3094 = vmatpush2.msra.mxu0 0.0
    %3095 = vmatprep.subr.mxu0 0.0
    %3096 = vmatpush2.msra.mxu0 0.0
    %3097 = vmatprep.subr.mxu0 0.0
    %3098 = vmatpush2.msra.mxu0 0.0
    %3099 = vmatprep.subr.mxu0 0.0
    %3100 = vmatpush2.msra.mxu0 0.0
    %3101 = vmatprep.subr.mxu0 0.0
    %3102 = vmatpush2.msra.mxu0 0.0
    %3103 = vmatprep.subr.mxu0 0.0
    %3104 = vmatpush2.msra.mxu0 0.0
    %3105 = vmatprep.subr.mxu0 0.0
    %3106 = vmatpush2.msra.mxu0 0.0
    %3107 = vmatprep.subr.mxu0 0.0
    %3108 = vmatpush2.msra.mxu0 0.0
    %3109 = vmatprep.subr.mxu0 0.0
    %3110 = vmatpush2.msra.mxu0 0.0
    %3111 = vmatprep.subr.mxu0 0.0
    %3112 = vmatpush2.msra.mxu0 0.0
    %3113 = vmatprep.subr.mxu0 0.0
    %3114 = vmatpush2.msra.mxu0 0.0
    %3115 = vmatprep.subr.mxu0 0.0
    %3116 = vmatpush2.msra.mxu0 0.0
    %3117 = vmatprep.subr.mxu0 0.0
    %3118 = vmatpush2.msra.mxu0 0.0
    %3119 = vmatprep.mubr.f32.mxu0 0.0
    %3120 = vmatmul.mubr.f32.gmra.mxu0 %v3047
    %v3121 = vpop.f32.mrf.mxu0
    %v3122 = vadd.f32 %v2889, %v3121
    %v3123 = vpop.f32.mrf.mxu0
    %v3124 = vadd.f32 %v2891, %v3123
    %3125 = vdwg.mxu0
    %3126 = vmatprep.subr.mxu0 0.0
    %3127 = vmatpush1.msra.mxu0 0.0
    %3128 = vmatprep.subr.mxu0 0.0
    %3129 = vmatpush1.msra.mxu0 0.0
    %3130 = vmatprep.subr.mxu0 0.0
    %3131 = vmatpush1.msra.mxu0 0.0
    %3132 = vmatprep.subr.mxu0 0.0
    %3133 = vmatpush1.msra.mxu0 0.0
    %3134 = vmatprep.subr.mxu0 0.0
    %3135 = vmatpush1.msra.mxu0 0.0
    %3136 = vmatprep.subr.mxu0 0.0
    %3137 = vmatpush1.msra.mxu0 0.0
    %3138 = vmatprep.subr.mxu0 0.0
    %3139 = vmatpush1.msra.mxu0 0.0
    %3140 = vmatprep.subr.mxu0 0.0
    %3141 = vmatpush1.msra.mxu0 0.0
    %3142 = vmatprep.subr.mxu0 0.0
    %3143 = vmatpush1.msra.mxu0 0.0
    %3144 = vmatprep.subr.mxu0 0.0
    %3145 = vmatpush1.msra.mxu0 0.0
    %3146 = vmatprep.subr.mxu0 0.0
    %3147 = vmatpush1.msra.mxu0 0.0
    %3148 = vmatprep.subr.mxu0 0.0
    %3149 = vmatpush1.msra.mxu0 %v3053
    %3150 = vmatprep.subr.mxu0 0.0
    %3151 = vmatpush1.msra.mxu0 %v3030
    %3152 = vmatprep.subr.mxu0 0.0
    %3153 = vmatpush1.msra.mxu0 %v3027
    %3154 = vmatprep.subr.mxu0 0.0
    %3155 = vmatpush1.msra.mxu0 %v3024
    %3156 = vmatprep.subr.mxu0 0.0
    %3157 = vmatpush1.msra.mxu0 %v3021
    %3158 = vmatprep.subr.mxu0 0.0
    %3159 = vmatpush2.msra.mxu0 0.0
    %3160 = vmatprep.subr.mxu0 0.0
    %3161 = vmatpush2.msra.mxu0 0.0
    %3162 = vmatprep.subr.mxu0 0.0
    %3163 = vmatpush2.msra.mxu0 0.0
    %3164 = vmatprep.subr.mxu0 0.0
    %3165 = vmatpush2.msra.mxu0 0.0
    %3166 = vmatprep.subr.mxu0 0.0
    %3167 = vmatpush2.msra.mxu0 0.0
    %3168 = vmatprep.subr.mxu0 0.0
    %3169 = vmatpush2.msra.mxu0 0.0
    %3170 = vmatprep.subr.mxu0 0.0
    %3171 = vmatpush2.msra.mxu0 0.0
    %3172 = vmatprep.subr.mxu0 0.0
    %3173 = vmatpush2.msra.mxu0 0.0
    %3174 = vmatprep.subr.mxu0 0.0
    %3175 = vmatpush2.msra.mxu0 0.0
    %3176 = vmatprep.subr.mxu0 0.0
    %3177 = vmatpush2.msra.mxu0 0.0
    %3178 = vmatprep.subr.mxu0 0.0
    %3179 = vmatpush2.msra.mxu0 0.0
    %3180 = vmatprep.subr.mxu0 0.0
    %3181 = vmatpush2.msra.mxu0 0.0
    %3182 = vmatprep.subr.mxu0 0.0
    %3183 = vmatpush2.msra.mxu0 0.0
    %3184 = vmatprep.subr.mxu0 0.0
    %3185 = vmatpush2.msra.mxu0 0.0
    %3186 = vmatprep.subr.mxu0 0.0
    %3187 = vmatpush2.msra.mxu0 0.0
    %3188 = vmatprep.subr.mxu0 0.0
    %3189 = vmatpush2.msra.mxu0 0.0
    %3190 = vmatprep.mubr.f32.mxu0 0.0
    %3191 = vmatmul.mubr.f32.gmra.mxu0 %v3047
    %v3192 = vpop.f32.mrf.mxu0
    %v3193 = vadd.f32 %v2960, %v3192
    %v3194 = vpop.f32.mrf.mxu0
    %3195 = vdwg.mxu0
    %3196 = vrot.lane.b32.xlu0 %v2113, 124
    %v3197 = vpop.permute.xlu0 %3196
    %3198 = vrot.lane.b32.xlu0 %v2114, 124
    %v3199 = vpop.permute.xlu0 %3198
    %v3200 = vsel %vm451, %v3197, %v2493
    %v3201 = vsel %vm451, %v2493, %v3199
    %3205 = vrot.lane.b32.xlu0 %v2104, 120
    %v3206 = vpop.permute.xlu0 %3205
    %3207 = vrot.lane.b32.xlu0 %v2109, 120
    %v3208 = vpop.permute.xlu0 %3207
    %3209 = vrot.lane.b32.xlu0 %v2105, 120
    %v3210 = vpop.permute.xlu0 %3209
    %v3211 = vsel %vm1174, %v3206, %v3208
    %v3212 = vsel %vm1174, %v3208, %v3210
    %3216 = vrot.lane.b32.xlu0 %v2113, 32
    %v3217 = vpop.permute.xlu0 %3216
    %3218 = vrot.lane.b32.xlu0 %v2104, 32
    %v3219 = vpop.permute.xlu0 %3218
    %3220 = vrot.lane.b32.xlu0 %v2114, 32
    %v3221 = vpop.permute.xlu0 %3220
    %v3222 = vsel %vm499, %v3217, %v3219
    %v3223 = vsel %vm499, %v3219, %v3221
    %v3224 = vsel %vm499, %v3221, %v2541
    %3228 = vrot.lane.b32.xlu0 %v2104, 28
    %v3229 = vpop.permute.xlu0 %3228
    %v3230 = vsel %vm532, %v3229, %v2570
    %3234 = vrot.lane.b32.xlu0 %v2113, 24
    %v3235 = vpop.permute.xlu0 %3234
    %3236 = vrot.lane.b32.xlu0 %v2104, 24
    %v3237 = vpop.permute.xlu0 %3236
    %3238 = vrot.lane.b32.xlu0 %v2114, 24
    %v3239 = vpop.permute.xlu0 %3238
    %3240 = vrot.lane.b32.xlu0 %v2105, 24
    %v3241 = vpop.permute.xlu0 %3240
    %v3242 = vsel %vm1206, %v3235, %v3237
    %v3243 = vsel %vm1206, %v3237, %v3239
    %v3244 = vsel %vm1206, %v3239, %v3241
    %3248 = vrot.lane.b32.xlu0 %v2109, 64
    %v3249 = vpop.permute.xlu0 %3248
    %3250 = vrot.lane.b32.xlu0 %v2105, 64
    %v3251 = vpop.permute.xlu0 %3250
    %3252 = vrot.lane.b32.xlu0 %v2110, 64
    %v3253 = vpop.permute.xlu0 %3252
    %3254 = vrot.lane.b32.xlu0 %v2106, 64
    %v3255 = vpop.permute.xlu0 %3254
    %v3256 = vsel %vm1221, %v3249, %v3251
    %v3257 = vsel %vm1221, %v3251, %v3253
    %v3258 = vsel %vm1221, %v3253, %v3255
    %3262 = vrot.lane.b32.xlu0 %v2104, 60
    %v3263 = vpop.permute.xlu0 %3262
    %3264 = vrot.lane.b32.xlu0 %v2114, 60
    %v3265 = vpop.permute.xlu0 %3264
    %3266 = vrot.lane.b32.xlu0 %v2105, 60
    %v3267 = vpop.permute.xlu0 %3266
    %3268 = vrot.lane.b32.xlu0 %v2553, 60
    %v3269 = vpop.permute.xlu0 %3268
    %v3270 = vsel %vm1236, %v3263, %v3265
    %v3271 = vsel %vm1236, %v3265, %v3267
    %v3272 = vsel %vm1236, %v3267, %v3269
    %3276 = vrot.lane.b32.xlu0 %v2109, 56
    %v3277 = vpop.permute.xlu0 %3276
    %3278 = vrot.lane.b32.xlu0 %v2110, 56
    %v3279 = vpop.permute.xlu0 %3278
    %3280 = vrot.lane.b32.xlu0 %v2106, 56
    %v3281 = vpop.permute.xlu0 %3280
    %v3282 = vsel %vm593, %v3277, %v2634
    %v3283 = vsel %vm593, %v2634, %v3279
    %v3284 = vsel %vm593, %v3279, %v3281
    %v3285 = vsel %vm179, %v2104, %v3200
    %v3286 = vsel %vm179, %v2109, %v3201
    %v3287 = vsel %vm179, %v2105, %v3199
    %v3288 = vsel %vm179, %v3211, %v3222
    %v3289 = vsel %vm179, %v3212, %v3223
    %v3290 = vsel %vm179, %v3210, %v3224
    %v3291 = vsel %vm179, %v3230, %v3242
    %v3292 = vsel %vm179, %v2577, %v3243
    %v3293 = vsel %vm179, %v2578, %v3244
    %v3294 = vsel %vm179, %v3256, %v3270
    %v3295 = vsel %vm179, %v3257, %v3271
    %v3296 = vsel %vm179, %v3258, %v3272
    %v3297 = vld [vmem:[%s4] sm:$0xff]
    %v3299 = vsel %vm281, %v3297, 0
    %v3301 = vsel %vm179, %v3282, 0
    %v3303 = vsel %vm179, %v3283, 0
    %v3305 = vsel %vm179, %v3284, 0
    %3307 = vmatprep.subr.mxu0 0.0
    %3308 = vmatpush1.msra.mxu0 0.0
    %3309 = vmatprep.subr.mxu0 0.0
    %3310 = vmatpush1.msra.mxu0 0.0
    %3311 = vmatprep.subr.mxu0 0.0
    %3312 = vmatpush1.msra.mxu0 0.0
    %3313 = vmatprep.subr.mxu0 0.0
    %3314 = vmatpush1.msra.mxu0 0.0
    %3315 = vmatprep.subr.mxu0 0.0
    %3316 = vmatpush1.msra.mxu0 0.0
    %3317 = vmatprep.subr.mxu0 0.0
    %3318 = vmatpush1.msra.mxu0 0.0
    %3319 = vmatprep.subr.mxu0 0.0
    %3320 = vmatpush1.msra.mxu0 0.0
    %3321 = vmatprep.subr.mxu0 0.0
    %3322 = vmatpush1.msra.mxu0 0.0
    %3323 = vmatprep.subr.mxu0 0.0
    %3324 = vmatpush1.msra.mxu0 0.0
    %3325 = vmatprep.subr.mxu0 0.0
    %3326 = vmatpush1.msra.mxu0 0.0
    %3327 = vmatprep.subr.mxu0 0.0
    %3328 = vmatpush1.msra.mxu0 0.0
    %3329 = vmatprep.subr.mxu0 %v3303
    %3330 = vmatpush1.msra.mxu0 %v3301
    %3331 = vmatprep.subr.mxu0 %v3295
    %3332 = vmatpush1.msra.mxu0 %v3294
    %3333 = vmatprep.subr.mxu0 %v3292
    %3334 = vmatpush1.msra.mxu0 %v3291
    %3335 = vmatprep.subr.mxu0 %v3289
    %3336 = vmatpush1.msra.mxu0 %v3288
    %3337 = vmatprep.subr.mxu0 %v3286
    %3338 = vmatpush1.msra.mxu0 %v3285
    %3339 = vmatprep.subr.mxu0 0.0
    %3340 = vmatpush2.msra.mxu0 0.0
    %3341 = vmatprep.subr.mxu0 0.0
    %3342 = vmatpush2.msra.mxu0 0.0
    %3343 = vmatprep.subr.mxu0 0.0
    %3344 = vmatpush2.msra.mxu0 0.0
    %3345 = vmatprep.subr.mxu0 0.0
    %3346 = vmatpush2.msra.mxu0 0.0
    %3347 = vmatprep.subr.mxu0 0.0
    %3348 = vmatpush2.msra.mxu0 0.0
    %3349 = vmatprep.subr.mxu0 0.0
    %3350 = vmatpush2.msra.mxu0 0.0
    %3351 = vmatprep.subr.mxu0 0.0
    %3352 = vmatpush2.msra.mxu0 0.0
    %3353 = vmatprep.subr.mxu0 0.0
    %3354 = vmatpush2.msra.mxu0 0.0
    %3355 = vmatprep.subr.mxu0 0.0
    %3356 = vmatpush2.msra.mxu0 0.0
    %3357 = vmatprep.subr.mxu0 0.0
    %3358 = vmatpush2.msra.mxu0 0.0
    %3359 = vmatprep.subr.mxu0 0.0
    %3360 = vmatpush2.msra.mxu0 0.0
    %3361 = vmatprep.subr.mxu0 0.0
    %3362 = vmatpush2.msra.mxu0 0.0
    %3363 = vmatprep.subr.mxu0 0.0
    %3364 = vmatpush2.msra.mxu0 0.0
    %3365 = vmatprep.subr.mxu0 0.0
    %3366 = vmatpush2.msra.mxu0 0.0
    %3367 = vmatprep.subr.mxu0 0.0
    %3368 = vmatpush2.msra.mxu0 0.0
    %3369 = vmatprep.subr.mxu0 0.0
    %3370 = vmatpush2.msra.mxu0 0.0
    %3371 = vmatprep.mubr.f32.mxu0 0.0
    %3372 = vmatmul.mubr.f32.gmra.mxu0 %v3299
    %v3373 = vpop.f32.mrf.mxu0
    %v3374 = vadd.f32 0.0, %v3373
    %v3375 = vpop.f32.mrf.mxu0
    %v3376 = vadd.f32 0.0, %v3375
    %3377 = vdwg.mxu0
    %3378 = vmatprep.subr.mxu0 0.0
    %3379 = vmatpush1.msra.mxu0 0.0
    %3380 = vmatprep.subr.mxu0 0.0
    %3381 = vmatpush1.msra.mxu0 0.0
    %3382 = vmatprep.subr.mxu0 0.0
    %3383 = vmatpush1.msra.mxu0 0.0
    %3384 = vmatprep.subr.mxu0 0.0
    %3385 = vmatpush1.msra.mxu0 0.0
    %3386 = vmatprep.subr.mxu0 0.0
    %3387 = vmatpush1.msra.mxu0 0.0
    %3388 = vmatprep.subr.mxu0 0.0
    %3389 = vmatpush1.msra.mxu0 0.0
    %3390 = vmatprep.subr.mxu0 0.0
    %3391 = vmatpush1.msra.mxu0 0.0
    %3392 = vmatprep.subr.mxu0 0.0
    %3393 = vmatpush1.msra.mxu0 0.0
    %3394 = vmatprep.subr.mxu0 0.0
    %3395 = vmatpush1.msra.mxu0 0.0
    %3396 = vmatprep.subr.mxu0 0.0
    %3397 = vmatpush1.msra.mxu0 0.0
    %3398 = vmatprep.subr.mxu0 0.0
    %3399 = vmatpush1.msra.mxu0 0.0
    %3400 = vmatprep.subr.mxu0 0.0
    %3401 = vmatpush1.msra.mxu0 %v3305
    %3402 = vmatprep.subr.mxu0 0.0
    %3403 = vmatpush1.msra.mxu0 %v3296
    %3404 = vmatprep.subr.mxu0 0.0
    %3405 = vmatpush1.msra.mxu0 %v3293
    %3406 = vmatprep.subr.mxu0 0.0
    %3407 = vmatpush1.msra.mxu0 %v3290
    %3408 = vmatprep.subr.mxu0 0.0
    %3409 = vmatpush1.msra.mxu0 %v3287
    %3410 = vmatprep.subr.mxu0 0.0
    %3411 = vmatpush2.msra.mxu0 0.0
    %3412 = vmatprep.subr.mxu0 0.0
    %3413 = vmatpush2.msra.mxu0 0.0
    %3414 = vmatprep.subr.mxu0 0.0
    %3415 = vmatpush2.msra.mxu0 0.0
    %3416 = vmatprep.subr.mxu0 0.0
    %3417 = vmatpush2.msra.mxu0 0.0
    %3418 = vmatprep.subr.mxu0 0.0
    %3419 = vmatpush2.msra.mxu0 0.0
    %3420 = vmatprep.subr.mxu0 0.0
    %3421 = vmatpush2.msra.mxu0 0.0
    %3422 = vmatprep.subr.mxu0 0.0
    %3423 = vmatpush2.msra.mxu0 0.0
    %3424 = vmatprep.subr.mxu0 0.0
    %3425 = vmatpush2.msra.mxu0 0.0
    %3426 = vmatprep.subr.mxu0 0.0
    %3427 = vmatpush2.msra.mxu0 0.0
    %3428 = vmatprep.subr.mxu0 0.0
    %3429 = vmatpush2.msra.mxu0 0.0
    %3430 = vmatprep.subr.mxu0 0.0
    %3431 = vmatpush2.msra.mxu0 0.0
    %3432 = vmatprep.subr.mxu0 0.0
    %3433 = vmatpush2.msra.mxu0 0.0
    %3434 = vmatprep.subr.mxu0 0.0
    %3435 = vmatpush2.msra.mxu0 0.0
    %3436 = vmatprep.subr.mxu0 0.0
    %3437 = vmatpush2.msra.mxu0 0.0
    %3438 = vmatprep.subr.mxu0 0.0
    %3439 = vmatpush2.msra.mxu0 0.0
    %3440 = vmatprep.subr.mxu0 0.0
    %3441 = vmatpush2.msra.mxu0 0.0
    %3442 = vmatprep.mubr.f32.mxu0 0.0
    %3443 = vmatmul.mubr.f32.gmra.mxu0 %v3299
    %v3444 = vpop.f32.mrf.mxu0
    %v3445 = vadd.f32 0.0, %v3444
    %v3446 = vpop.f32.mrf.mxu0
    %3447 = vdwg.mxu0
    %v3448 = vadd.f32 %v3122, %v3374
    %v3449 = vadd.f32 %v3124, %v3376
    %v3450 = vadd.f32 %v3193, %v3445
    %v3451 = vld [vmem:[#allocation2] sm:$0xff]
    %v3452 = vld [vmem:[#allocation2 + $0x8] sm:$0xff]
    %v3453 = vld [vmem:[#allocation2 + $0x10] sm:$0xff]
    %v3454 = vld [vmem:[#allocation2 + $0x18] sm:$0xff]
    %v3455 = vld [vmem:[#allocation2 + $0x20] sm:$0xff]
    %v3456 = vld [vmem:[#allocation2 + $0x28] sm:$0xff]
    %v3457 = vld [vmem:[#allocation2 + $0x30] sm:$0xff]
    %v3458 = vld [vmem:[#allocation2 + $0x38] sm:$0xff]
    %v3459 = vld [vmem:[#allocation2 + $0x40] sm:$0xff]
    %v3460 = vld [vmem:[#allocation2 + $0x48] sm:$0xff]
    %v3461 = vld [vmem:[#allocation2 + $0x50] sm:$0xff]
    %v3462 = vld [vmem:[#allocation2 + $0x58] sm:$0xff]
    %v3463 = vld [vmem:[#allocation2 + $0x60] sm:$0xff]
    %v3464 = vld [vmem:[#allocation2 + $0x68] sm:$0xff]
    %v3465 = vld [vmem:[#allocation2 + $0x70] sm:$0xff]
    %v3466 = vld [vmem:[#allocation2 + $0x78] sm:$0xff]
    %v3467 = vld [vmem:[#allocation2 + $0x80] sm:$0xff]
    %v3468 = vld [vmem:[#allocation2 + $0x88] sm:$0xff]
    %v3469 = vld [vmem:[#allocation2 + $0x90] sm:$0xff]
    %v3470 = vld [vmem:[#allocation2 + $0x98] sm:$0xff]
    %v3471 = vld [vmem:[#allocation2 + $0xa0] sm:$0xff]
    %v3472 = vld [vmem:[#allocation2 + $0xa8] sm:$0xff]
    %v3473 = vld [vmem:[#allocation2 + $0xb0] sm:$0xff]
    %v3474 = vld [vmem:[#allocation2 + $0xb8] sm:$0xff]
    %v3475 = vld [vmem:[#allocation2 + $0xc0] sm:$0xff]
    %v3476 = vld [vmem:[#allocation2 + $0xc8] sm:$0xff]
    %v3477 = vld [vmem:[#allocation2 + $0xd0] sm:$0xff]
    %v3478 = vld [vmem:[#allocation2 + $0xd8] sm:$0xff]
    %v3479 = vld [vmem:[#allocation2 + $0xe0] sm:$0xff]
    %v3480 = vld [vmem:[#allocation2 + $0xe8] sm:$0xff]
    %v3481 = vld [vmem:[#allocation2 + $0xf0] sm:$0xff]
    %v3482 = vld [vmem:[#allocation2 + $0xf8] sm:$0xff]
    %v3483 = vld [vmem:[#allocation2 + $0x100] sm:$0xff]
    %v3484 = vld [vmem:[#allocation2 + $0x108] sm:$0xff]
    %v3485 = vld [vmem:[#allocation2 + $0x110] sm:$0xff]
    %v3486 = vld [vmem:[#allocation2 + $0x118] sm:$0xff]
    %v3487 = vld [vmem:[#allocation2 + $0x120] sm:$0xff]
    %v3488 = vld [vmem:[#allocation2 + $0x128] sm:$0xff]
    %v3489 = vld [vmem:[#allocation2 + $0x130] sm:$0xff]
    %v3490 = vld [vmem:[#allocation2 + $0x138] sm:$0xff]
    %v3491 = vld [vmem:[#allocation2 + $0x140] sm:$0xff]
    %v3492 = vld [vmem:[#allocation2 + $0x148] sm:$0xff]
    %v3493 = vld [vmem:[#allocation2 + $0x150] sm:$0xff]
    %v3494 = vld [vmem:[#allocation2 + $0x158] sm:$0xff]
    %v3495 = vld [vmem:[#allocation2 + $0x160] sm:$0xff]
    %v3496 = vld [vmem:[#allocation2 + $0x168] sm:$0xff]
    %v3497 = vld [vmem:[#allocation2 + $0x170] sm:$0xff]
    %v3498 = vld [vmem:[#allocation2 + $0x178] sm:$0xff]
    %v3499 = vld [vmem:[#allocation2 + $0x180] sm:$0xff]
    %v3500 = vld [vmem:[#allocation2 + $0x188] sm:$0xff]
    %v3501 = vld [vmem:[#allocation2 + $0x190] sm:$0xff]
    %v3502 = vld [vmem:[#allocation2 + $0x198] sm:$0xff]
    %v3503 = vld [vmem:[#allocation2 + $0x1a0] sm:$0xff]
    %v3504 = vld [vmem:[#allocation2 + $0x1a8] sm:$0xff]
    %v3505 = vld [vmem:[#allocation2 + $0x1b0] sm:$0xff]
    %v3506 = vld [vmem:[#allocation2 + $0x1b8] sm:$0xff]
    %v3507 = vld [vmem:[#allocation2 + $0x1c0] sm:$0xff]
    %v3508 = vld [vmem:[#allocation2 + $0x1c8] sm:$0xff]
    %v3509 = vld [vmem:[#allocation2 + $0x1d0] sm:$0xff]
    %v3510 = vld [vmem:[#allocation2 + $0x1d8] sm:$0xff]
    %v3511 = vld [vmem:[#allocation2 + $0x1e0] sm:$0xff]
    %v3512 = vld [vmem:[#allocation2 + $0x1e8] sm:$0xff]
    %v3513 = vld [vmem:[#allocation2 + $0x1f0] sm:$0xff]
    %v3514 = vld [vmem:[#allocation2 + $0x1f8] sm:$0xff]
    %v3515 = vld [vmem:[#allocation2 + $0x200] sm:$0xff]
    %v3516 = vld [vmem:[#allocation2 + $0x208] sm:$0xff]
    %v3517 = vld [vmem:[#allocation2 + $0x210] sm:$0xff]
    %v3518 = vld [vmem:[#allocation2 + $0x218] sm:$0xff]
    %v3519 = vld [vmem:[#allocation2 + $0x220] sm:$0xff]
    %v3520 = vld [vmem:[#allocation2 + $0x228] sm:$0xff]
    %v3521 = vld [vmem:[#allocation2 + $0x230] sm:$0xff]
    %v3522 = vld [vmem:[#allocation2 + $0x238] sm:$0xff]
    %v3523 = vld [vmem:[#allocation2 + $0x240] sm:$0xff]
    %v3524 = vld [vmem:[#allocation2 + $0x248] sm:$0xff]
    %v3525 = vld [vmem:[#allocation2 + $0x250] sm:$0xff]
    %v3526 = vld [vmem:[#allocation2 + $0x258] sm:$0xff]
    %v3527 = vld [vmem:[#allocation2 + $0x260] sm:$0xff]
    %v3528 = vld [vmem:[#allocation2 + $0x268] sm:$0xff]
    %v3529 = vld [vmem:[#allocation2 + $0x270] sm:$0xff]
    %v3530 = vld [vmem:[#allocation2 + $0x278] sm:$0xff]
    %v3531 = vld [vmem:[#allocation2 + $0x280] sm:$0xff]
    %v3532 = vld [vmem:[#allocation2 + $0x288] sm:$0xff]
    %v3533 = vld [vmem:[#allocation2 + $0x290] sm:$0xff]
    %v3534 = vld [vmem:[#allocation2 + $0x298] sm:$0xff]
    %v3535 = vld [vmem:[#allocation2 + $0x2a0] sm:$0xff]
    %v3536 = vld [vmem:[#allocation2 + $0x2a8] sm:$0xff]
    %v3537 = vld [vmem:[#allocation2 + $0x2b0] sm:$0xff]
    %v3538 = vld [vmem:[#allocation2 + $0x2b8] sm:$0xff]
    %v3539 = vld [vmem:[#allocation2 + $0x2c0] sm:$0xff]
    %v3540 = vld [vmem:[#allocation2 + $0x2c8] sm:$0xff]
    %v3541 = vld [vmem:[#allocation2 + $0x2d0] sm:$0xff]
    %v3542 = vld [vmem:[#allocation2 + $0x2d8] sm:$0xff]
    %v3543 = vld [vmem:[#allocation2 + $0x2e0] sm:$0xff]
    %v3544 = vld [vmem:[#allocation2 + $0x2e8] sm:$0xff]
    %v3545 = vld [vmem:[#allocation2 + $0x2f0] sm:$0xff]
    %v3546 = vld [vmem:[#allocation2 + $0x2f8] sm:$0xff]
    %v3548 = vsel %vm1174, %v2478, 0
    %v3551 = vsel %vm1174, %v3453, 0
    %v3554 = vsel %vm1174, %v3456, 0
    %v3557 = vsel %vm1174, %v3459, 0
    %v3560 = vsel %vm1174, %v3462, 0
    %v3563 = vsel %vm1174, %v3465, 0
    %v3566 = vsel %vm1174, %v3468, 0
    %v3569 = vsel %vm1174, %v3471, 0
    %v3572 = vsel %vm1174, %v3474, 0
    %v3575 = vsel %vm1174, %v3477, 0
    %v3578 = vsel %vm1174, %v3480, 0
    %v3581 = vsel %vm1174, %v3483, 0
    %v3584 = vsel %vm1174, %v3486, 0
    %v3587 = vsel %vm1174, %v3489, 0
    %v3590 = vsel %vm1174, %v3492, 0
    %v3593 = vsel %vm1174, %v3495, 0
    %v3596 = vsel %vm1174, %v3498, 0
    %v3599 = vsel %vm1174, %v3501, 0
    %v3602 = vsel %vm1174, %v3504, 0
    %v3605 = vsel %vm1174, %v3507, 0
    %v3608 = vsel %vm1174, %v3510, 0
    %v3611 = vsel %vm1174, %v3513, 0
    %v3614 = vsel %vm1174, %v3516, 0
    %v3617 = vsel %vm1174, %v3519, 0
    %v3620 = vsel %vm1174, %v3522, 0
    %v3623 = vsel %vm1174, %v3525, 0
    %v3626 = vsel %vm1174, %v3528, 0
    %v3629 = vsel %vm1174, %v3531, 0
    %v3632 = vsel %vm1174, %v3534, 0
    %v3635 = vsel %vm1174, %v3537, 0
    %v3638 = vsel %vm1174, %v3540, 0
    %v3641 = vsel %vm1174, %v3543, 0
    %v3644 = vsel %vm1174, %v3546, 0
    %3646 = vmatprep.subr.mxu0 %v3497
    %3647 = vmatpush1.xpose.msra.mxu0 %v3496
    %3648 = vmatprep.subr.mxu0 %v3494
    %3649 = vmatpush1.xpose.msra.mxu0 %v3493
    %3650 = vmatprep.subr.mxu0 %v3491
    %3651 = vmatpush1.xpose.msra.mxu0 %v3490
    %3652 = vmatprep.subr.mxu0 %v3488
    %3653 = vmatpush1.xpose.msra.mxu0 %v3487
    %3654 = vmatprep.subr.mxu0 %v3485
    %3655 = vmatpush1.xpose.msra.mxu0 %v3484
    %3656 = vmatprep.subr.mxu0 %v3482
    %3657 = vmatpush1.xpose.msra.mxu0 %v3481
    %3658 = vmatprep.subr.mxu0 %v3479
    %3659 = vmatpush1.xpose.msra.mxu0 %v3478
    %3660 = vmatprep.subr.mxu0 %v3476
    %3661 = vmatpush1.xpose.msra.mxu0 %v3475
    %3662 = vmatprep.subr.mxu0 %v3473
    %3663 = vmatpush1.xpose.msra.mxu0 %v3472
    %3664 = vmatprep.subr.mxu0 %v3470
    %3665 = vmatpush1.xpose.msra.mxu0 %v3469
    %3666 = vmatprep.subr.mxu0 %v3467
    %3667 = vmatpush1.xpose.msra.mxu0 %v3466
    %3668 = vmatprep.subr.mxu0 %v3464
    %3669 = vmatpush1.xpose.msra.mxu0 %v3463
    %3670 = vmatprep.subr.mxu0 %v3461
    %3671 = vmatpush1.xpose.msra.mxu0 %v3460
    %3672 = vmatprep.subr.mxu0 %v3458
    %3673 = vmatpush1.xpose.msra.mxu0 %v3457
    %3674 = vmatprep.subr.mxu0 %v3455
    %3675 = vmatpush1.xpose.msra.mxu0 %v3454
    %3676 = vmatprep.subr.mxu0 %v3452
    %3677 = vmatpush1.xpose.msra.mxu0 %v3451
    %3678 = vmatprep.subr.mxu0 %v3545
    %3679 = vmatpush2.xpose.msra.mxu0 %v3544
    %3680 = vmatprep.subr.mxu0 %v3542
    %3681 = vmatpush2.xpose.msra.mxu0 %v3541
    %3682 = vmatprep.subr.mxu0 %v3539
    %3683 = vmatpush2.xpose.msra.mxu0 %v3538
    %3684 = vmatprep.subr.mxu0 %v3536
    %3685 = vmatpush2.xpose.msra.mxu0 %v3535
    %3686 = vmatprep.subr.mxu0 %v3533
    %3687 = vmatpush2.xpose.msra.mxu0 %v3532
    %3688 = vmatprep.subr.mxu0 %v3530
    %3689 = vmatpush2.xpose.msra.mxu0 %v3529
    %3690 = vmatprep.subr.mxu0 %v3527
    %3691 = vmatpush2.xpose.msra.mxu0 %v3526
    %3692 = vmatprep.subr.mxu0 %v3524
    %3693 = vmatpush2.xpose.msra.mxu0 %v3523
    %3694 = vmatprep.subr.mxu0 %v3521
    %3695 = vmatpush2.xpose.msra.mxu0 %v3520
    %3696 = vmatprep.subr.mxu0 %v3518
    %3697 = vmatpush2.xpose.msra.mxu0 %v3517
    %3698 = vmatprep.subr.mxu0 %v3515
    %3699 = vmatpush2.xpose.msra.mxu0 %v3514
    %3700 = vmatprep.subr.mxu0 %v3512
    %3701 = vmatpush2.xpose.msra.mxu0 %v3511
    %3702 = vmatprep.subr.mxu0 %v3509
    %3703 = vmatpush2.xpose.msra.mxu0 %v3508
    %3704 = vmatprep.subr.mxu0 %v3506
    %3705 = vmatpush2.xpose.msra.mxu0 %v3505
    %3706 = vmatprep.subr.mxu0 %v3503
    %3707 = vmatpush2.xpose.msra.mxu0 %v3502
    %3708 = vmatprep.subr.mxu0 %v3500
    %3709 = vmatpush2.xpose.msra.mxu0 %v3499
    %3710 = vmatprep.mubr.f32.mxu0 %v2409
    %3711 = vmatmul.mubr.f32.gmra.mxu0 %v2407
    %v3712 = vpop.f32.mrf.mxu0
    %v3713 = vadd.f32 0.0, %v3712
    %v3714 = vpop.f32.mrf.mxu0
    %v3715 = vadd.f32 0.0, %v3714
    %3716 = vdwg.mxu0
    %3717 = vmatprep.subr.mxu0 0.0
    %3718 = vmatpush1.xpose.msra.mxu0 %v3596
    %3719 = vmatprep.subr.mxu0 0.0
    %3720 = vmatpush1.xpose.msra.mxu0 %v3593
    %3721 = vmatprep.subr.mxu0 0.0
    %3722 = vmatpush1.xpose.msra.mxu0 %v3590
    %3723 = vmatprep.subr.mxu0 0.0
    %3724 = vmatpush1.xpose.msra.mxu0 %v3587
    %3725 = vmatprep.subr.mxu0 0.0
    %3726 = vmatpush1.xpose.msra.mxu0 %v3584
    %3727 = vmatprep.subr.mxu0 0.0
    %3728 = vmatpush1.xpose.msra.mxu0 %v3581
    %3729 = vmatprep.subr.mxu0 0.0
    %3730 = vmatpush1.xpose.msra.mxu0 %v3578
    %3731 = vmatprep.subr.mxu0 0.0
    %3732 = vmatpush1.xpose.msra.mxu0 %v3575
    %3733 = vmatprep.subr.mxu0 0.0
    %3734 = vmatpush1.xpose.msra.mxu0 %v3572
    %3735 = vmatprep.subr.mxu0 0.0
    %3736 = vmatpush1.xpose.msra.mxu0 %v3569
    %3737 = vmatprep.subr.mxu0 0.0
    %3738 = vmatpush1.xpose.msra.mxu0 %v3566
    %3739 = vmatprep.subr.mxu0 0.0
    %3740 = vmatpush1.xpose.msra.mxu0 %v3563
    %3741 = vmatprep.subr.mxu0 0.0
    %3742 = vmatpush1.xpose.msra.mxu0 %v3560
    %3743 = vmatprep.subr.mxu0 0.0
    %3744 = vmatpush1.xpose.msra.mxu0 %v3557
    %3745 = vmatprep.subr.mxu0 0.0
    %3746 = vmatpush1.xpose.msra.mxu0 %v3554
    %3747 = vmatprep.subr.mxu0 0.0
    %3748 = vmatpush1.xpose.msra.mxu0 %v3551
    %3749 = vmatprep.subr.mxu0 0.0
    %3750 = vmatpush2.xpose.msra.mxu0 %v3644
    %3751 = vmatprep.subr.mxu0 0.0
    %3752 = vmatpush2.xpose.msra.mxu0 %v3641
    %3753 = vmatprep.subr.mxu0 0.0
    %3754 = vmatpush2.xpose.msra.mxu0 %v3638
    %3755 = vmatprep.subr.mxu0 0.0
    %3756 = vmatpush2.xpose.msra.mxu0 %v3635
    %3757 = vmatprep.subr.mxu0 0.0
    %3758 = vmatpush2.xpose.msra.mxu0 %v3632
    %3759 = vmatprep.subr.mxu0 0.0
    %3760 = vmatpush2.xpose.msra.mxu0 %v3629
    %3761 = vmatprep.subr.mxu0 0.0
    %3762 = vmatpush2.xpose.msra.mxu0 %v3626
    %3763 = vmatprep.subr.mxu0 0.0
    %3764 = vmatpush2.xpose.msra.mxu0 %v3623
    %3765 = vmatprep.subr.mxu0 0.0
    %3766 = vmatpush2.xpose.msra.mxu0 %v3620
    %3767 = vmatprep.subr.mxu0 0.0
    %3768 = vmatpush2.xpose.msra.mxu0 %v3617
    %3769 = vmatprep.subr.mxu0 0.0
    %3770 = vmatpush2.xpose.msra.mxu0 %v3614
    %3771 = vmatprep.subr.mxu0 0.0
    %3772 = vmatpush2.xpose.msra.mxu0 %v3611
    %3773 = vmatprep.subr.mxu0 0.0
    %3774 = vmatpush2.xpose.msra.mxu0 %v3608
    %3775 = vmatprep.subr.mxu0 0.0
    %3776 = vmatpush2.xpose.msra.mxu0 %v3605
    %3777 = vmatprep.subr.mxu0 0.0
    %3778 = vmatpush2.xpose.msra.mxu0 %v3602
    %3779 = vmatprep.subr.mxu0 0.0
    %3780 = vmatpush2.xpose.msra.mxu0 %v3599
    %3781 = vmatprep.mubr.f32.mxu0 0.0
    %3782 = vmatmul.mubr.f32.gmra.mxu0 %v3548
    %v3783 = vpop.f32.mrf.mxu0
    %v3784 = vadd.f32 %v3713, %v3783
    %v3785 = vpop.f32.mrf.mxu0
    %v3786 = vadd.f32 %v3715, %v3785
    %3787 = vdwg.mxu0
    %v3788 = vadd.f32 %v1758, %v3784
    %v3789 = vadd.f32 %v1758, %v3786
    %v3790 = vld [vmem:[%s6] sm:$0xff]
    %v3791 = vld [vmem:[%s6 + $0x8] sm:$0xff]
    %v3792 = vld [vmem:[%s6 + $0x10] sm:$0xff]
    %v3793 = vld [vmem:[%s6 + $0x18] sm:$0xff]
    %v3794 = vld [vmem:[%s6 + $0x20] sm:$0xff]
    %v3795 = vld [vmem:[%s6 + $0x28] sm:$0xff]
    %v3796 = vld [vmem:[%s6 + $0x30] sm:$0xff]
    %v3797 = vld [vmem:[%s6 + $0x38] sm:$0xff]
    %v3798 = vld [vmem:[%s6 + $0x40] sm:$0xff]
    %v3799 = vld [vmem:[%s6 + $0x48] sm:$0xff]
    %v3800 = vld [vmem:[%s6 + $0x50] sm:$0xff]
    %v3801 = vld [vmem:[%s6 + $0x58] sm:$0xff]
    %v3802 = vld [vmem:[%s6 + $0x60] sm:$0xff]
    %v3803 = vld [vmem:[%s6 + $0x68] sm:$0xff]
    %v3804 = vld [vmem:[%s6 + $0x70] sm:$0xff]
    %v3805 = vld [vmem:[%s6 + $0x78] sm:$0xff]
    %v3806 = vld [vmem:[%s6 + $0x80] sm:$0xff]
    %v3807 = vld [vmem:[%s6 + $0x88] sm:$0xff]
    %v3808 = vld [vmem:[%s6 + $0x90] sm:$0xff]
    %v3809 = vld [vmem:[%s6 + $0x98] sm:$0xff]
    %v3810 = vld [vmem:[%s6 + $0xa0] sm:$0xff]
    %v3811 = vld [vmem:[%s6 + $0xa8] sm:$0xff]
    %v3812 = vld [vmem:[%s6 + $0xb0] sm:$0xff]
    %v3813 = vld [vmem:[%s6 + $0xb8] sm:$0xff]
    %v3814 = vld [vmem:[%s6 + $0xc0] sm:$0xff]
    %v3815 = vld [vmem:[%s6 + $0xc8] sm:$0xff]
    %v3816 = vld [vmem:[%s6 + $0xd0] sm:$0xff]
    %v3817 = vld [vmem:[%s6 + $0xd8] sm:$0xff]
    %v3818 = vld [vmem:[%s6 + $0xe0] sm:$0xff]
    %v3819 = vld [vmem:[%s6 + $0xe8] sm:$0xff]
    %v3820 = vld [vmem:[%s6 + $0xf0] sm:$0xff]
    %v3821 = vld [vmem:[%s6 + $0xf8] sm:$0xff]
    %v3822 = vld [vmem:[%s6 + $0x100] sm:$0xff]
    %v3823 = vld [vmem:[%s6 + $0x108] sm:$0xff]
    %v3824 = vld [vmem:[%s6 + $0x110] sm:$0xff]
    %v3825 = vld [vmem:[%s6 + $0x118] sm:$0xff]
    %v3826 = vld [vmem:[%s6 + $0x120] sm:$0xff]
    %v3827 = vld [vmem:[%s6 + $0x128] sm:$0xff]
    %v3828 = vld [vmem:[%s6 + $0x130] sm:$0xff]
    %v3829 = vld [vmem:[%s6 + $0x138] sm:$0xff]
    %v3830 = vld [vmem:[%s6 + $0x140] sm:$0xff]
    %v3831 = vld [vmem:[%s6 + $0x148] sm:$0xff]
    %v3832 = vld [vmem:[%s6 + $0x150] sm:$0xff]
    %v3833 = vld [vmem:[%s6 + $0x158] sm:$0xff]
    %v3834 = vld [vmem:[%s6 + $0x160] sm:$0xff]
    %v3835 = vld [vmem:[%s6 + $0x168] sm:$0xff]
    %v3836 = vld [vmem:[%s6 + $0x170] sm:$0xff]
    %v3837 = vld [vmem:[%s6 + $0x178] sm:$0xff]
    %v3838 = vld [vmem:[%s6 + $0x180] sm:$0xff]
    %v3839 = vld [vmem:[%s6 + $0x188] sm:$0xff]
    %v3840 = vld [vmem:[%s6 + $0x190] sm:$0xff]
    %v3841 = vld [vmem:[%s6 + $0x198] sm:$0xff]
    %v3842 = vld [vmem:[%s6 + $0x1a0] sm:$0xff]
    %v3843 = vld [vmem:[%s6 + $0x1a8] sm:$0xff]
    %v3844 = vld [vmem:[%s6 + $0x1b0] sm:$0xff]
    %v3845 = vld [vmem:[%s6 + $0x1b8] sm:$0xff]
    %v3846 = vld [vmem:[%s6 + $0x1c0] sm:$0xff]
    %v3847 = vld [vmem:[%s6 + $0x1c8] sm:$0xff]
    %v3848 = vld [vmem:[%s6 + $0x1d0] sm:$0xff]
    %v3849 = vld [vmem:[%s6 + $0x1d8] sm:$0xff]
    %v3850 = vld [vmem:[%s6 + $0x1e0] sm:$0xff]
    %v3851 = vld [vmem:[%s6 + $0x1e8] sm:$0xff]
    %v3852 = vld [vmem:[%s6 + $0x1f0] sm:$0xff]
    %v3853 = vld [vmem:[%s6 + $0x1f8] sm:$0xff]
    %v3854 = vld [vmem:[%s6 + $0x200] sm:$0xff]
    %v3855 = vld [vmem:[%s6 + $0x208] sm:$0xff]
    %v3856 = vld [vmem:[%s6 + $0x210] sm:$0xff]
    %v3857 = vld [vmem:[%s6 + $0x218] sm:$0xff]
    %v3858 = vld [vmem:[%s6 + $0x220] sm:$0xff]
    %v3859 = vld [vmem:[%s6 + $0x228] sm:$0xff]
    %v3860 = vld [vmem:[%s6 + $0x230] sm:$0xff]
    %v3861 = vld [vmem:[%s6 + $0x238] sm:$0xff]
    %v3862 = vld [vmem:[%s6 + $0x240] sm:$0xff]
    %v3863 = vld [vmem:[%s6 + $0x248] sm:$0xff]
    %v3864 = vld [vmem:[%s6 + $0x250] sm:$0xff]
    %v3865 = vld [vmem:[%s6 + $0x258] sm:$0xff]
    %v3866 = vld [vmem:[%s6 + $0x260] sm:$0xff]
    %v3867 = vld [vmem:[%s6 + $0x268] sm:$0xff]
    %v3868 = vld [vmem:[%s6 + $0x270] sm:$0xff]
    %v3869 = vld [vmem:[%s6 + $0x278] sm:$0xff]
    %v3870 = vld [vmem:[%s6 + $0x280] sm:$0xff]
    %v3871 = vld [vmem:[%s6 + $0x288] sm:$0xff]
    %v3872 = vld [vmem:[%s6 + $0x290] sm:$0xff]
    %v3873 = vld [vmem:[%s6 + $0x298] sm:$0xff]
    %v3874 = vld [vmem:[%s6 + $0x2a0] sm:$0xff]
    %v3875 = vld [vmem:[%s6 + $0x2a8] sm:$0xff]
    %v3876 = vld [vmem:[%s6 + $0x2b0] sm:$0xff]
    %v3877 = vld [vmem:[%s6 + $0x2b8] sm:$0xff]
    %v3878 = vld [vmem:[%s6 + $0x2c0] sm:$0xff]
    %v3879 = vld [vmem:[%s6 + $0x2c8] sm:$0xff]
    %v3880 = vld [vmem:[%s6 + $0x2d0] sm:$0xff]
    %v3881 = vld [vmem:[%s6 + $0x2d8] sm:$0xff]
    %v3882 = vld [vmem:[%s6 + $0x2e0] sm:$0xff]
    %v3883 = vld [vmem:[%s6 + $0x2e8] sm:$0xff]
    %v3884 = vld [vmem:[%s6 + $0x2f0] sm:$0xff]
    %v3885 = vld [vmem:[%s6 + $0x2f8] sm:$0xff]
    %v3887 = vsel %vm1174, %v3450, 0
    %v3890 = vsel %vm1174, %v3792, 0
    %v3893 = vsel %vm1174, %v3795, 0
    %v3896 = vsel %vm1174, %v3798, 0
    %v3899 = vsel %vm1174, %v3801, 0
    %v3902 = vsel %vm1174, %v3804, 0
    %v3905 = vsel %vm1174, %v3807, 0
    %v3908 = vsel %vm1174, %v3810, 0
    %v3911 = vsel %vm1174, %v3813, 0
    %v3914 = vsel %vm1174, %v3816, 0
    %v3917 = vsel %vm1174, %v3819, 0
    %v3920 = vsel %vm1174, %v3822, 0
    %v3923 = vsel %vm1174, %v3825, 0
    %v3926 = vsel %vm1174, %v3828, 0
    %v3929 = vsel %vm1174, %v3831, 0
    %v3932 = vsel %vm1174, %v3834, 0
    %v3935 = vsel %vm1174, %v3837, 0
    %v3938 = vsel %vm1174, %v3840, 0
    %v3941 = vsel %vm1174, %v3843, 0
    %v3944 = vsel %vm1174, %v3846, 0
    %v3947 = vsel %vm1174, %v3849, 0
    %v3950 = vsel %vm1174, %v3852, 0
    %v3953 = vsel %vm1174, %v3855, 0
    %v3956 = vsel %vm1174, %v3858, 0
    %v3959 = vsel %vm1174, %v3861, 0
    %v3962 = vsel %vm1174, %v3864, 0
    %v3965 = vsel %vm1174, %v3867, 0
    %v3968 = vsel %vm1174, %v3870, 0
    %v3971 = vsel %vm1174, %v3873, 0
    %v3974 = vsel %vm1174, %v3876, 0
    %v3977 = vsel %vm1174, %v3879, 0
    %v3980 = vsel %vm1174, %v3882, 0
    %v3983 = vsel %vm1174, %v3885, 0
    %3985 = vmatprep.subr.mxu0 %v3836
    %3986 = vmatpush1.xpose.msra.mxu0 %v3835
    %3987 = vmatprep.subr.mxu0 %v3833
    %3988 = vmatpush1.xpose.msra.mxu0 %v3832
    %3989 = vmatprep.subr.mxu0 %v3830
    %3990 = vmatpush1.xpose.msra.mxu0 %v3829
    %3991 = vmatprep.subr.mxu0 %v3827
    %3992 = vmatpush1.xpose.msra.mxu0 %v3826
    %3993 = vmatprep.subr.mxu0 %v3824
    %3994 = vmatpush1.xpose.msra.mxu0 %v3823
    %3995 = vmatprep.subr.mxu0 %v3821
    %3996 = vmatpush1.xpose.msra.mxu0 %v3820
    %3997 = vmatprep.subr.mxu0 %v3818
    %3998 = vmatpush1.xpose.msra.mxu0 %v3817
    %3999 = vmatprep.subr.mxu0 %v3815
    %4000 = vmatpush1.xpose.msra.mxu0 %v3814
    %4001 = vmatprep.subr.mxu0 %v3812
    %4002 = vmatpush1.xpose.msra.mxu0 %v3811
    %4003 = vmatprep.subr.mxu0 %v3809
    %4004 = vmatpush1.xpose.msra.mxu0 %v3808
    %4005 = vmatprep.subr.mxu0 %v3806
    %4006 = vmatpush1.xpose.msra.mxu0 %v3805
    %4007 = vmatprep.subr.mxu0 %v3803
    %4008 = vmatpush1.xpose.msra.mxu0 %v3802
    %4009 = vmatprep.subr.mxu0 %v3800
    %4010 = vmatpush1.xpose.msra.mxu0 %v3799
    %4011 = vmatprep.subr.mxu0 %v3797
    %4012 = vmatpush1.xpose.msra.mxu0 %v3796
    %4013 = vmatprep.subr.mxu0 %v3794
    %4014 = vmatpush1.xpose.msra.mxu0 %v3793
    %4015 = vmatprep.subr.mxu0 %v3791
    %4016 = vmatpush1.xpose.msra.mxu0 %v3790
    %4017 = vmatprep.subr.mxu0 %v3884
    %4018 = vmatpush2.xpose.msra.mxu0 %v3883
    %4019 = vmatprep.subr.mxu0 %v3881
    %4020 = vmatpush2.xpose.msra.mxu0 %v3880
    %4021 = vmatprep.subr.mxu0 %v3878
    %4022 = vmatpush2.xpose.msra.mxu0 %v3877
    %4023 = vmatprep.subr.mxu0 %v3875
    %4024 = vmatpush2.xpose.msra.mxu0 %v3874
    %4025 = vmatprep.subr.mxu0 %v3872
    %4026 = vmatpush2.xpose.msra.mxu0 %v3871
    %4027 = vmatprep.subr.mxu0 %v3869
    %4028 = vmatpush2.xpose.msra.mxu0 %v3868
    %4029 = vmatprep.subr.mxu0 %v3866
    %4030 = vmatpush2.xpose.msra.mxu0 %v3865
    %4031 = vmatprep.subr.mxu0 %v3863
    %4032 = vmatpush2.xpose.msra.mxu0 %v3862
    %4033 = vmatprep.subr.mxu0 %v3860
    %4034 = vmatpush2.xpose.msra.mxu0 %v3859
    %4035 = vmatprep.subr.mxu0 %v3857
    %4036 = vmatpush2.xpose.msra.mxu0 %v3856
    %4037 = vmatprep.subr.mxu0 %v3854
    %4038 = vmatpush2.xpose.msra.mxu0 %v3853
    %4039 = vmatprep.subr.mxu0 %v3851
    %4040 = vmatpush2.xpose.msra.mxu0 %v3850
    %4041 = vmatprep.subr.mxu0 %v3848
    %4042 = vmatpush2.xpose.msra.mxu0 %v3847
    %4043 = vmatprep.subr.mxu0 %v3845
    %4044 = vmatpush2.xpose.msra.mxu0 %v3844
    %4045 = vmatprep.subr.mxu0 %v3842
    %4046 = vmatpush2.xpose.msra.mxu0 %v3841
    %4047 = vmatprep.subr.mxu0 %v3839
    %4048 = vmatpush2.xpose.msra.mxu0 %v3838
    %4049 = vmatprep.mubr.f32.mxu0 %v3449
    %4050 = vmatmul.mubr.f32.gmra.mxu0 %v3448
    %v4051 = vpop.f32.mrf.mxu0
    %v4052 = vadd.f32 0.0, %v4051
    %v4053 = vpop.f32.mrf.mxu0
    %v4054 = vadd.f32 0.0, %v4053
    %4055 = vdwg.mxu0
    %4056 = vmatprep.subr.mxu0 0.0
    %4057 = vmatpush1.xpose.msra.mxu0 %v3935
    %4058 = vmatprep.subr.mxu0 0.0
    %4059 = vmatpush1.xpose.msra.mxu0 %v3932
    %4060 = vmatprep.subr.mxu0 0.0
    %4061 = vmatpush1.xpose.msra.mxu0 %v3929
    %4062 = vmatprep.subr.mxu0 0.0
    %4063 = vmatpush1.xpose.msra.mxu0 %v3926
    %4064 = vmatprep.subr.mxu0 0.0
    %4065 = vmatpush1.xpose.msra.mxu0 %v3923
    %4066 = vmatprep.subr.mxu0 0.0
    %4067 = vmatpush1.xpose.msra.mxu0 %v3920
    %4068 = vmatprep.subr.mxu0 0.0
    %4069 = vmatpush1.xpose.msra.mxu0 %v3917
    %4070 = vmatprep.subr.mxu0 0.0
    %4071 = vmatpush1.xpose.msra.mxu0 %v3914
    %4072 = vmatprep.subr.mxu0 0.0
    %4073 = vmatpush1.xpose.msra.mxu0 %v3911
    %4074 = vmatprep.subr.mxu0 0.0
    %4075 = vmatpush1.xpose.msra.mxu0 %v3908
    %4076 = vmatprep.subr.mxu0 0.0
    %4077 = vmatpush1.xpose.msra.mxu0 %v3905
    %4078 = vmatprep.subr.mxu0 0.0
    %4079 = vmatpush1.xpose.msra.mxu0 %v3902
    %4080 = vmatprep.subr.mxu0 0.0
    %4081 = vmatpush1.xpose.msra.mxu0 %v3899
    %4082 = vmatprep.subr.mxu0 0.0
    %4083 = vmatpush1.xpose.msra.mxu0 %v3896
    %4084 = vmatprep.subr.mxu0 0.0
    %4085 = vmatpush1.xpose.msra.mxu0 %v3893
    %4086 = vmatprep.subr.mxu0 0.0
    %4087 = vmatpush1.xpose.msra.mxu0 %v3890
    %4088 = vmatprep.subr.mxu0 0.0
    %4089 = vmatpush2.xpose.msra.mxu0 %v3983
    %4090 = vmatprep.subr.mxu0 0.0
    %4091 = vmatpush2.xpose.msra.mxu0 %v3980
    %4092 = vmatprep.subr.mxu0 0.0
    %4093 = vmatpush2.xpose.msra.mxu0 %v3977
    %4094 = vmatprep.subr.mxu0 0.0
    %4095 = vmatpush2.xpose.msra.mxu0 %v3974
    %4096 = vmatprep.subr.mxu0 0.0
    %4097 = vmatpush2.xpose.msra.mxu0 %v3971
    %4098 = vmatprep.subr.mxu0 0.0
    %4099 = vmatpush2.xpose.msra.mxu0 %v3968
    %4100 = vmatprep.subr.mxu0 0.0
    %4101 = vmatpush2.xpose.msra.mxu0 %v3965
    %4102 = vmatprep.subr.mxu0 0.0
    %4103 = vmatpush2.xpose.msra.mxu0 %v3962
    %4104 = vmatprep.subr.mxu0 0.0
    %4105 = vmatpush2.xpose.msra.mxu0 %v3959
    %4106 = vmatprep.subr.mxu0 0.0
    %4107 = vmatpush2.xpose.msra.mxu0 %v3956
    %4108 = vmatprep.subr.mxu0 0.0
    %4109 = vmatpush2.xpose.msra.mxu0 %v3953
    %4110 = vmatprep.subr.mxu0 0.0
    %4111 = vmatpush2.xpose.msra.mxu0 %v3950
    %4112 = vmatprep.subr.mxu0 0.0
    %4113 = vmatpush2.xpose.msra.mxu0 %v3947
    %4114 = vmatprep.subr.mxu0 0.0
    %4115 = vmatpush2.xpose.msra.mxu0 %v3944
    %4116 = vmatprep.subr.mxu0 0.0
    %4117 = vmatpush2.xpose.msra.mxu0 %v3941
    %4118 = vmatprep.subr.mxu0 0.0
    %4119 = vmatpush2.xpose.msra.mxu0 %v3938
    %4120 = vmatprep.mubr.f32.mxu0 0.0
    %4121 = vmatmul.mubr.f32.gmra.mxu0 %v3887
    %v4122 = vpop.f32.mrf.mxu0
    %v4123 = vadd.f32 %v4052, %v4122
    %v4124 = vpop.f32.mrf.mxu0
    %v4125 = vadd.f32 %v4054, %v4124
    %4126 = vdwg.mxu0
    %v4127 = vadd.f32 %v3788, %v4123
    %v4128 = vadd.f32 %v3789, %v4125
    %s4129 = scalar_lea.vmem %s8, 16
    %4130 = vst [vmem:[%s4129] sm:$0xff] %v4127
    %4131 = vst [vmem:[%s4129 + $0x8] sm:$0xff] %v4128
    // Predicated region
    $region38: #{aspp_forward.1} parent=1 // pred_check
      _
    $region39: #{aspp_forward.1} parent=1 // pred_check_branch
      %4133 = sbr.rel (0) target = $region41
    $region40: #{aspp_forward.1} parent=1 // pred_region
      _
    $region41: #{aspp_forward.1} parent=1 // pred_fallthru
      _
    // Predicated region
    $region42: #{aspp_forward.1} parent=1 // pred_check
      _
    $region43: #{aspp_forward.1} parent=1 // pred_check_branch
      %4135 = sbr.rel (0) target = $region45
    $region44: #{aspp_forward.1} parent=1 // pred_region
      _
    $region45: #{aspp_forward.1} parent=1 // pred_fallthru
      _
    %4136 = vsyncpa [#allocation3], 1

</llo_original>
